<compile_context>
chip_gen: v7x
topology: tpu7x:2x2x1
jax: 0.10.0
libtpu: 0.0.40
codegen_flags: <defaults>
</compile_context>

<pallas_src>
import numpy as np
import jax
import jax.numpy as jnp
from jax import lax
from jax.experimental import pallas as pl
from jax.experimental.pallas import tpu as pltpu


# ------------------------------ small helpers -------------------------------

def _ceil_div(a, b):
    return -(-a // b)


def _round_up(a, b):
    return _ceil_div(a, b) * b


def _const_spec(shape):
    """BlockSpec covering the whole (grid-invariant) array."""
    r = len(shape)
    return pl.BlockSpec(tuple(shape), lambda n, _r=r: (0,) * _r)


def _interior_mask(H, W, Wl):
    """(1, (H+2)*Wl) f32: 1 on interior pixels, 0 on border + lane padding."""
    Hp = H + 2
    m = np.zeros((Hp, Wl), np.float32)
    m[1:H + 1, 1:W + 1] = 1.0
    return m.reshape(1, Hp * Wl)


def _col_pool_matrix(W_in, Wl_in, Wl_out):
    """(Wl_in, Wl_out) column-pool operator for AvgPool2d(2,2,ceil_mode=True).

    Acts on one padded, lane-padded image row; output border / lane-pad columns
    stay zero (they are the next conv's padding).  Partial (ceil_mode) windows
    divide by the number of in-bounds columns.  The 1/n_rows factor of the
    separable pooling is applied in the kernel."""
    Wo = _ceil_div(W_in, 2)
    P = np.zeros((Wl_in, Wl_out), np.float32)
    for wo in range(Wo):
        ws = [w for w in (2 * wo, 2 * wo + 1) if w < W_in]
        inv = 1.0 / len(ws)
        for w in ws:
            P[w + 1, wo + 1] = inv
    return P


# ------------------------------ fused forward --------------------------------

def axis_aligned_conv_gaussian_forward(params, x_nchw, segm_nchw=None, latent_dim=6):
    """Mirrors AxisAlignedConvGaussian.forward (norm=False path).

    Returns (encoding_mean (N, C_last), (mu (N, L), sigma (N, L))) where
    (mu, sigma) parameterize Independent(Normal(mu, sigma), 1)."""
    if segm_nchw is not None:                        # posterior: cat on channel axis 1
        x_nchw = jnp.concatenate([x_nchw, segm_nchw], axis=1)
    N, C0, H0, W0 = x_nchw.shape
    C0p = _round_up(C0, 8)                           # sublane-align first-layer K
    L = latent_dim

    blocks = params["blocks"]
    n_blocks = len(blocks)
    convs_per_block = [len(b) for b in blocks]

    # per-resolution geometry (row length Wl lane-padded to 128)
    res = [(H0, W0)]
    for _ in range(n_blocks - 1):
        h, w = res[-1]
        res.append((_ceil_div(h, 2), _ceil_div(w, 2)))
    Hs = [h for h, _ in res]
    Ws = [w for _, w in res]
    Wls = [_round_up(w + 2, 128) for _, w in res]
    Msps = [(h + 2) * wl for (h, _), wl in zip(res, Wls)]

    # ---- packed parameters + static per-layer config (one-time, plain JAX) ----
    layer_cfg = []                                   # (Cin, Cout, res_idx, block_last)
    conv_ws, conv_bs = [], []
    for bi, block in enumerate(blocks):
        for ci, (w, b) in enumerate(block):
            _, _, Cin, Cout = w.shape
            if bi == 0 and ci == 0 and Cin != C0p:   # zero-pad K to the aligned Cin
                w = jnp.pad(w, ((0, 0), (0, 0), (0, C0p - Cin), (0, 0)))
                Cin = C0p
            # HWIO (3,3,Cin,Cout) -> (Cout, 9*Cin), rows ordered (dy, dx, cin); bf16
            conv_ws.append(jnp.transpose(w, (3, 0, 1, 2))
                           .reshape(Cout, 9 * Cin).astype(jnp.bfloat16))
            conv_bs.append(jnp.asarray(b, jnp.float32).reshape(Cout, 1))
            layer_cfg.append((Cin, Cout, bi, ci == len(block) - 1))

    masks = [jnp.asarray(_interior_mask(Hs[r], Ws[r], Wls[r])) for r in range(n_blocks)]
    pcs = [jnp.asarray(_col_pool_matrix(Ws[r], Wls[r], Wls[r + 1])).astype(jnp.bfloat16)
           for r in range(n_blocks - 1)]

    w_head, b_head = params["head"]                  # (2L, C_last), (2L,)
    w_head = jnp.asarray(w_head, jnp.float32)
    b_head = jnp.asarray(b_head, jnp.float32).reshape(2 * L, 1)
    C_last = layer_cfg[-1][1]
    Hf, Wf = res[-1]

    # Network input -> per-image padded, lane-padded layout (N, C0p, (H0+2)*Wl0), bf16.
    xb = x_nchw.astype(jnp.bfloat16)
    xp = jnp.zeros((N, C0p, H0 + 2, Wls[0]), jnp.bfloat16)
    xp = xp.at[:, :C0, 1:H0 + 1, 1:W0 + 1].set(xb)
    x_flat = xp.reshape(N, C0p, Msps[0])

    n_layers, n_res, n_pools = len(layer_cfg), n_blocks, n_blocks - 1

    # ---- single reused scratches ----
    K_pad = _round_up(max(9 * c[0] for c in layer_cfg), 8)
    M_max = max(Msps[c[2]] for c in layer_cfg)
    scratch_shapes = [pltpu.VMEM((K_pad, M_max), jnp.bfloat16)]       # im2col patch
    if n_pools > 0:
        Cp_max = _round_up(max(c[0] for c in layer_cfg if c[2] >= 1), 8)
        scratch_shapes.append(pltpu.VMEM((Cp_max, max(Msps[1:])), jnp.bfloat16))

    def kernel(*refs):
        i = 0
        x_ref = refs[i]; i += 1
        w_refs = refs[i:i + n_layers]; i += n_layers
        b_refs = refs[i:i + n_layers]; i += n_layers
        mask_refs = refs[i:i + n_res]; i += n_res
        pc_refs = refs[i:i + n_pools]; i += n_pools
        hw_ref = refs[i]; hb_ref = refs[i + 1]; i += 2
        enc_ref = refs[i]; mls_ref = refs[i + 1]; i += 2
        patch = refs[i]; i += 1
        pool_scr = refs[i] if n_pools > 0 else None

        act = x_ref[0]                               # (C0p, Msp0) bf16, zero border/pad
        y_f32 = None
        li = 0
        for bi in range(n_blocks):
            r = bi
            Wl, Msp = Wls[r], Msps[r]
            if bi > 0:
                # --- separable AvgPool2d(2,2,ceil_mode=True): res r-1 -> res r ---
                Wl_in, Hin, Hout = Wls[r - 1], Hs[r - 1], Hs[r]
                C_cur = layer_cfg[li][0]             # channels entering this block
                pc = pc_refs[r - 1][...]             # (Wl_in, Wl) bf16 col-pool
                zero_row = jnp.zeros((C_cur, Wl), jnp.bfloat16)
                pool_scr[0:C_cur, 0:Wl] = zero_row                       # top border
                pool_scr[0:C_cur, (Hout + 1) * Wl:(Hout + 2) * Wl] = zero_row  # bottom
                for ko in range(1, Hout + 1):
                    hp0, hp1 = 2 * ko - 1, 2 * ko    # padded source rows
                    rows = act[:, hp0 * Wl_in:(hp0 + 1) * Wl_in]
                    n_h = 1
                    if hp1 <= Hin:                   # ceil-mode partial last window
                        rows = rows + act[:, hp1 * Wl_in:(hp1 + 1) * Wl_in]
                        n_h = 2
                    pooled = jnp.dot(rows, pc, preferred_element_type=jnp.float32)
                    pooled = pooled * (1.0 / n_h)
                    pool_scr[0:C_cur, ko * Wl:(ko + 1) * Wl] = pooled.astype(jnp.bfloat16)
                act = pool_scr[0:C_cur, 0:Msp]

            for ci in range(convs_per_block[bi]):
                Cin, Cout, _, block_last = layer_cfg[li]
                # im2col into the single reused scratch: tap (dy,dx) is a lane shift
                # of the padded-flat activation; only the uncovered edge strip is
                # zeroed (those columns are border outputs, re-zeroed by the mask).
                for dy in range(3):
                    for dx in range(3):
                        t = dy * 3 + dx
                        d = (dy - 1) * Wl + (dx - 1)
                        rlo, rhi = t * Cin, (t + 1) * Cin
                        if d > 0:
                            patch[rlo:rhi, 0:Msp - d] = act[:, d:Msp]
                            patch[rlo:rhi, Msp - d:Msp] = jnp.zeros((Cin, d), jnp.bfloat16)
                        elif d < 0:
                            dd = -d
                            patch[rlo:rhi, dd:Msp] = act[:, 0:Msp - dd]
                            patch[rlo:rhi, 0:dd] = jnp.zeros((Cin, dd), jnp.bfloat16)
                        else:
                            patch[rlo:rhi, 0:Msp] = act
                # One MXU matmul (bf16 x bf16 -> f32); bias + ReLU on the VPU.
                y_f32 = jnp.dot(w_refs[li][...], patch[0:9 * Cin, 0:Msp],
                                preferred_element_type=jnp.float32)
                y_f32 = jnp.maximum(y_f32 + b_refs[li][...], 0.0)
                if not block_last:
                    # interior mask re-zeroes the 1-pixel border (= next conv's padding)
                    y_f32 = y_f32 * mask_refs[r][...]
                act = y_f32.astype(jnp.bfloat16)
                li += 1

        # ---- head: spatial mean over interior pixels, then the 1x1 conv ----
        maskf = mask_refs[n_res - 1][...]
        m = jnp.sum(y_f32 * maskf, axis=1, keepdims=True) * (1.0 / (Hf * Wf))  # (C_last,1)
        enc_ref[0] = m
        mls = jnp.dot(hw_ref[...], m, preferred_element_type=jnp.float32) + hb_ref[...]
        row = lax.broadcasted_iota(jnp.int32, mls.shape, 0)
        # NOTE: exp is evaluated on the mu rows too and discarded by the select
        # (harmless for finite mu); keep the select if refactoring to log-space.
        mls_ref[0] = jnp.where(row < L, mls, jnp.exp(mls))

    inputs = [x_flat] + conv_ws + conv_bs + masks + pcs + [w_head, b_head]
    in_specs = [pl.BlockSpec((1, C0p, Msps[0]), lambda n: (n, 0, 0))]
    in_specs += [_const_spec(a.shape) for a in inputs[1:]]
    out_shape = (jax.ShapeDtypeStruct((N, C_last, 1), jnp.float32),
                 jax.ShapeDtypeStruct((N, 2 * L, 1), jnp.float32))
    out_specs = (pl.BlockSpec((1, C_last, 1), lambda n: (n, 0, 0)),
                 pl.BlockSpec((1, 2 * L, 1), lambda n: (n, 0, 0)))

    # ---- cost estimate + explicit VMEM budget (generation-aware ceiling) ----
    flops = 0
    for (Cin, Cout, r, _) in layer_cfg:
        flops += 2 * Cout * 9 * Cin * Msps[r]
    for r in range(1, n_blocks):
        Cin_blk = next(c[0] for c in layer_cfg if c[2] == r)
        flops += 2 * Cin_blk * Hs[r] * Wls[r - 1] * Wls[r]
    flops += 2 * C_last * Msps[-1] + 2 * (2 * L) * C_last
    flops *= N
    in_bytes = sum(int(a.size) * a.dtype.itemsize for a in inputs)
    out_bytes = (C_last + 2 * L) * N * 4
    scratch_bytes = sum(int(np.prod(s.shape)) * 2 for s in scratch_shapes)
    act_bytes = max(c[1] * Msps[c[2]] for c in layer_cfg) * 4
    est = 2 * in_bytes + scratch_bytes + 6 * act_bytes + out_bytes + (1 << 16)
    vmem_limit = int(min(56 * 2**20, max(32 * 2**20, 4 * est)))

    enc_out, mls_out = pl.pallas_call(
        kernel,
        out_shape=out_shape,
        grid_spec=pltpu.PrefetchScalarGridSpec(
            num_scalar_prefetch=0,
            grid=(N,),                               # batch-parallel: both TCs on v7x
            in_specs=in_specs,
            out_specs=out_specs,
            scratch_shapes=scratch_shapes),
        compiler_params=pltpu.CompilerParams(
            dimension_semantics=("parallel",),
            vmem_limit_bytes=vmem_limit),
        cost_estimate=pl.CostEstimate(flops=int(flops),
                                      transcendentals=int(2 * L * N),
                                      bytes_accessed=int(in_bytes + out_bytes)),
    )(*inputs)

    enc = enc_out[:, :, 0]                           # (N, C_last)
    mls = mls_out[:, :, 0]                           # (N, 2L); sigma half already exp()'ed
    return enc, (mls[:, :L], mls[:, L:])


# --------------------------- pure-JAX reference ------------------------------

def _reference_forward(params, x_nchw, segm_nchw=None, latent_dim=6):
    """Plain-XLA reference of AxisAlignedConvGaussian.forward (norm=False)."""
    if segm_nchw is not None:
        x_nchw = jnp.concatenate([x_nchw, segm_nchw], axis=1)
    x = jnp.transpose(x_nchw, (0, 2, 3, 1)).astype(jnp.float32)        # NHWC
    for bi, block in enumerate(params["blocks"]):
        if bi != 0:  # AvgPool2d(2, 2, padding=0, ceil_mode=True)
            n, hh, ww, c = x.shape
            ho, wo = _ceil_div(hh, 2), _ceil_div(ww, 2)
            xs = jnp.pad(x, ((0, 0), (0, 2 * ho - hh), (0, 2 * wo - ww), (0, 0)))
            cnt = jnp.pad(jnp.ones((1, hh, ww, 1), jnp.float32),
                          ((0, 0), (0, 2 * ho - hh), (0, 2 * wo - ww), (0, 0)))
            x = (xs.reshape(n, ho, 2, wo, 2, c).sum(axis=(2, 4))
                 / cnt.reshape(1, ho, 2, wo, 2, 1).sum(axis=(2, 4)))
        for (w, b) in block:
            x = jax.lax.conv_general_dilated(
                x, w, (1, 1), "SAME",
                dimension_numbers=("NHWC", "HWIO", "NHWC"))
            x = jnp.maximum(x + b, 0.0)
    m = jnp.mean(x, axis=(1, 2))                                       # (N, C_last)
    w1, b1 = params["head"]
    mls = jnp.dot(m, w1.T) + b1
    return m, (mls[:, :latent_dim], jnp.exp(mls[:, latent_dim:]))


# ------------------------------ parameters -----------------------------------

def init_params(key, input_channels, num_filters, no_convs_per_block, latent_dim):
    """Deterministic synthetic init (shapes match the PyTorch module)."""
    keys = jax.random.split(key, 2 * len(num_filters) * no_convs_per_block + 2)
    k = 0
    blocks = []
    for i, nf in enumerate(num_filters):
        in_dim = input_channels if i == 0 else num_filters[i - 1]
        dims = [in_dim] + [nf] * no_convs_per_block
        block = []
        for j in range(no_convs_per_block):
            fan_in = dims[j] * 9
            w = jax.random.normal(keys[k], (3, 3, dims[j], nf),
                                  jnp.float32) * jnp.sqrt(2.0 / fan_in)
            k += 1
            b = jax.random.normal(keys[k], (nf,), jnp.float32) * 0.01
            k += 1
            block.append((w, b))
        blocks.append(block)
    C = num_filters[-1]
    # conv_layer: kaiming_normal_(mode='fan_in', nonlinearity='relu'); bias ~ N(0,1)
    w1 = jax.random.normal(keys[k], (2 * latent_dim, C),
                           jnp.float32) * jnp.sqrt(2.0 / C)
    k += 1
    b1 = jax.random.normal(keys[k], (2 * latent_dim,), jnp.float32)
    return {"blocks": blocks, "head": (w1, b1)}


# --------------------------------- main ---------------------------------------

if __name__ == "__main__":
    INPUT_CHANNELS = 4
    NUM_FILTERS = [8, 16]
    NO_CONVS_PER_BLOCK = 2
    LATENT_DIM = 6

    key = jax.random.PRNGKey(0)
    kx, kp = jax.random.split(key)
    # Prior path (posterior=False, segm=None); input is NCHW like PyTorch.
    x = jax.random.normal(kx, (2, INPUT_CHANNELS, 16, 16), jnp.float32)
    params = init_params(kp, INPUT_CHANNELS, NUM_FILTERS,
                         NO_CONVS_PER_BLOCK, LATENT_DIM)

    enc, (mu, sigma) = axis_aligned_conv_gaussian_forward(
        params, x, segm_nchw=None, latent_dim=LATENT_DIM)
    jax.block_until_ready((enc, mu, sigma))

    assert enc.shape == (2, NUM_FILTERS[-1])
    assert mu.shape == (2, LATENT_DIM)
    assert sigma.shape == (2, LATENT_DIM)
    assert bool(jnp.all(sigma > 0))
    assert bool(jnp.all(jnp.isfinite(enc))) and bool(jnp.all(jnp.isfinite(mu)))

    # Numerical sanity check against a pure-JAX f32 reference.  Tolerance covers
    # the bf16 activation/weight path (f32 MXU accumulation); structural/layout
    # bugs would produce O(1) errors and still fail these checks.
    enc_r, (mu_r, sigma_r) = _reference_forward(params, x, None, LATENT_DIM)
    np.testing.assert_allclose(np.asarray(enc), np.asarray(enc_r), rtol=0.1, atol=0.1)
    np.testing.assert_allclose(np.asarray(mu), np.asarray(mu_r), rtol=0.1, atol=0.1)
    np.testing.assert_allclose(np.asarray(sigma), np.asarray(sigma_r), rtol=0.1, atol=0.1)

    print("KERNEL_OK")
</pallas_src>

<mosaic_0001>
module attributes {stable_mosaic.version = 11 : i64} {
  func.func @kernel(%arg0: i32, %arg1: memref<1x8x2304xbf16, #tpu.memory_space<vmem>>, %arg2: memref<8x72xbf16, #tpu.memory_space<vmem>>, %arg3: memref<8x72xbf16, #tpu.memory_space<vmem>>, %arg4: memref<16x72xbf16, #tpu.memory_space<vmem>>, %arg5: memref<16x144xbf16, #tpu.memory_space<vmem>>, %arg6: memref<8x1xf32, #tpu.memory_space<vmem>>, %arg7: memref<8x1xf32, #tpu.memory_space<vmem>>, %arg8: memref<16x1xf32, #tpu.memory_space<vmem>>, %arg9: memref<16x1xf32, #tpu.memory_space<vmem>>, %arg10: memref<1x2304xf32, #tpu.memory_space<vmem>>, %arg11: memref<1x1280xf32, #tpu.memory_space<vmem>>, %arg12: memref<128x128xbf16, #tpu.memory_space<vmem>>, %arg13: memref<12x16xf32, #tpu.memory_space<vmem>>, %arg14: memref<12x1xf32, #tpu.memory_space<vmem>>, %arg15: memref<1x16x1xf32, #tpu.memory_space<vmem>>, %arg16: memref<1x12x1xf32, #tpu.memory_space<vmem>>, %arg17: memref<144x2304xbf16, #tpu.memory_space<vmem>>, %arg18: memref<16x1280xbf16, #tpu.memory_space<vmem>>) attributes {dimension_semantics = [#tpu.dimension_semantics<parallel>], iteration_bounds = array<i64: 2>, scalar_prefetch = 0 : i64, scratch_operands = 2 : i64, tpu.core_type = #tpu.core_type<tc>, window_params = [{transform_indices = @transform_0, window_bounds = array<i64: 1, 8, 2304>}, {pipeline_mode = #tpu.pipeline_mode<synchronous>, transform_indices = @transform_1, window_bounds = array<i64: 8, 72>}, {pipeline_mode = #tpu.pipeline_mode<synchronous>, transform_indices = @transform_2, window_bounds = array<i64: 8, 72>}, {pipeline_mode = #tpu.pipeline_mode<synchronous>, transform_indices = @transform_3, window_bounds = array<i64: 16, 72>}, {pipeline_mode = #tpu.pipeline_mode<synchronous>, transform_indices = @transform_4, window_bounds = array<i64: 16, 144>}, {pipeline_mode = #tpu.pipeline_mode<synchronous>, transform_indices = @transform_5, window_bounds = array<i64: 8, 1>}, {pipeline_mode = #tpu.pipeline_mode<synchronous>, transform_indices = @transform_6, window_bounds = array<i64: 8, 1>}, {pipeline_mode = #tpu.pipeline_mode<synchronous>, transform_indices = @transform_7, window_bounds = array<i64: 16, 1>}, {pipeline_mode = #tpu.pipeline_mode<synchronous>, transform_indices = @transform_8, window_bounds = array<i64: 16, 1>}, {pipeline_mode = #tpu.pipeline_mode<synchronous>, transform_indices = @transform_9, window_bounds = array<i64: 1, 2304>}, {pipeline_mode = #tpu.pipeline_mode<synchronous>, transform_indices = @transform_10, window_bounds = array<i64: 1, 1280>}, {pipeline_mode = #tpu.pipeline_mode<synchronous>, transform_indices = @transform_11, window_bounds = array<i64: 128, 128>}, {pipeline_mode = #tpu.pipeline_mode<synchronous>, transform_indices = @transform_12, window_bounds = array<i64: 12, 16>}, {pipeline_mode = #tpu.pipeline_mode<synchronous>, transform_indices = @transform_13, window_bounds = array<i64: 12, 1>}, {transform_indices = @transform_14, window_bounds = array<i64: 1, 16, 1>}, {transform_indices = @transform_15, window_bounds = array<i64: 1, 12, 1>}]} {
    %c0 = arith.constant 0 : index
    %c0_0 = arith.constant 0 : index
    %c0_1 = arith.constant 0 : index
    %0 = vector.load %arg1[%c0, %c0_0, %c0_1] : memref<1x8x2304xbf16, #tpu.memory_space<vmem>>, vector<1x8x2304xbf16>
    %1 = vector.shape_cast %0 : vector<1x8x2304xbf16> to vector<8x2304xbf16>
    %2 = vector.extract_strided_slice %1 {offsets = [0, 0], sizes = [8, 2175], strides = [1, 1]} : vector<8x2304xbf16> to vector<8x2175xbf16>
    %c0_2 = arith.constant 0 : index
    %c129 = arith.constant 129 : index
    %3 = vector.load %arg17[%c0_2, %c129] : memref<144x2304xbf16, #tpu.memory_space<vmem>>, vector<8x2175xbf16>
    tpu.vector_store %arg17[%c0_2, %c129], %2 {strides = array<i32>} : memref<144x2304xbf16, #tpu.memory_space<vmem>>, vector<8x2175xbf16>,
    %cst = arith.constant 0.000000e+00 : bf16
    %4 = vector.broadcast %cst : bf16 to vector<8x129xbf16>
    %c0_3 = arith.constant 0 : index
    %c0_4 = arith.constant 0 : index
    %5 = vector.load %arg17[%c0_3, %c0_4] : memref<144x2304xbf16, #tpu.memory_space<vmem>>, vector<8x129xbf16>
    tpu.vector_store %arg17[%c0_3, %c0_4], %4 {strides = array<i32>} : memref<144x2304xbf16, #tpu.memory_space<vmem>>, vector<8x129xbf16>,
    %6 = vector.extract_strided_slice %1 {offsets = [0, 0], sizes = [8, 2176], strides = [1, 1]} : vector<8x2304xbf16> to vector<8x2176xbf16>
    %c8 = arith.constant 8 : index
    %c128 = arith.constant 128 : index
    %7 = vector.load %arg17[%c8, %c128] : memref<144x2304xbf16, #tpu.memory_space<vmem>>, vector<8x2176xbf16>
    tpu.vector_store %arg17[%c8, %c128], %6 {strides = array<i32>} : memref<144x2304xbf16, #tpu.memory_space<vmem>>, vector<8x2176xbf16>,
    %cst_5 = arith.constant 0.000000e+00 : bf16
    %8 = vector.broadcast %cst_5 : bf16 to vector<8x128xbf16>
    %c8_6 = arith.constant 8 : index
    %c0_7 = arith.constant 0 : index
    %9 = vector.load %arg17[%c8_6, %c0_7] : memref<144x2304xbf16, #tpu.memory_space<vmem>>, vector<8x128xbf16>
    tpu.vector_store %arg17[%c8_6, %c0_7], %8 {strides = array<i32>} : memref<144x2304xbf16, #tpu.memory_space<vmem>>, vector<8x128xbf16>,
    %10 = vector.extract_strided_slice %1 {offsets = [0, 0], sizes = [8, 2177], strides = [1, 1]} : vector<8x2304xbf16> to vector<8x2177xbf16>
    %c16 = arith.constant 16 : index
    %c127 = arith.constant 127 : index
    %11 = vector.load %arg17[%c16, %c127] : memref<144x2304xbf16, #tpu.memory_space<vmem>>, vector<8x2177xbf16>
    tpu.vector_store %arg17[%c16, %c127], %10 {strides = array<i32>} : memref<144x2304xbf16, #tpu.memory_space<vmem>>, vector<8x2177xbf16>,
    %cst_8 = arith.constant 0.000000e+00 : bf16
    %12 = vector.broadcast %cst_8 : bf16 to vector<8x127xbf16>
    %c16_9 = arith.constant 16 : index
    %c0_10 = arith.constant 0 : index
    %13 = vector.load %arg17[%c16_9, %c0_10] : memref<144x2304xbf16, #tpu.memory_space<vmem>>, vector<8x127xbf16>
    tpu.vector_store %arg17[%c16_9, %c0_10], %12 {strides = array<i32>} : memref<144x2304xbf16, #tpu.memory_space<vmem>>, vector<8x127xbf16>,
    %14 = vector.extract_strided_slice %1 {offsets = [0, 0], sizes = [8, 2303], strides = [1, 1]} : vector<8x2304xbf16> to vector<8x2303xbf16>
    %c24 = arith.constant 24 : index
    %c1 = arith.constant 1 : index
    %15 = vector.load %arg17[%c24, %c1] : memref<144x2304xbf16, #tpu.memory_space<vmem>>, vector<8x2303xbf16>
    tpu.vector_store %arg17[%c24, %c1], %14 {strides = array<i32>} : memref<144x2304xbf16, #tpu.memory_space<vmem>>, vector<8x2303xbf16>,
    %cst_11 = arith.constant 0.000000e+00 : bf16
    %16 = vector.broadcast %cst_11 : bf16 to vector<8x1xbf16>
    %c24_12 = arith.constant 24 : index
    %c0_13 = arith.constant 0 : index
    %17 = vector.load %arg17[%c24_12, %c0_13] : memref<144x2304xbf16, #tpu.memory_space<vmem>>, vector<8x1xbf16>
    tpu.vector_store %arg17[%c24_12, %c0_13], %16 {strides = array<i32>} : memref<144x2304xbf16, #tpu.memory_space<vmem>>, vector<8x1xbf16>,
    %c32 = arith.constant 32 : index
    %c0_14 = arith.constant 0 : index
    %18 = vector.load %arg17[%c32, %c0_14] : memref<144x2304xbf16, #tpu.memory_space<vmem>>, vector<8x2304xbf16>
    tpu.vector_store %arg17[%c32, %c0_14], %1 {strides = array<i32>} : memref<144x2304xbf16, #tpu.memory_space<vmem>>, vector<8x2304xbf16>,
    %19 = vector.extract_strided_slice %1 {offsets = [0, 1], sizes = [8, 2303], strides = [1, 1]} : vector<8x2304xbf16> to vector<8x2303xbf16>
    %c40 = arith.constant 40 : index
    %c0_15 = arith.constant 0 : index
    %20 = vector.load %arg17[%c40, %c0_15] : memref<144x2304xbf16, #tpu.memory_space<vmem>>, vector<8x2303xbf16>
    tpu.vector_store %arg17[%c40, %c0_15], %19 {strides = array<i32>} : memref<144x2304xbf16, #tpu.memory_space<vmem>>, vector<8x2303xbf16>,
    %cst_16 = arith.constant 0.000000e+00 : bf16
    %21 = vector.broadcast %cst_16 : bf16 to vector<8x1xbf16>
    %c40_17 = arith.constant 40 : index
    %c2303 = arith.constant 2303 : index
    %22 = vector.load %arg17[%c40_17, %c2303] : memref<144x2304xbf16, #tpu.memory_space<vmem>>, vector<8x1xbf16>
    tpu.vector_store %arg17[%c40_17, %c2303], %21 {strides = array<i32>} : memref<144x2304xbf16, #tpu.memory_space<vmem>>, vector<8x1xbf16>,
    %23 = vector.extract_strided_slice %1 {offsets = [0, 127], sizes = [8, 2177], strides = [1, 1]} : vector<8x2304xbf16> to vector<8x2177xbf16>
    %c48 = arith.constant 48 : index
    %c0_18 = arith.constant 0 : index
    %24 = vector.load %arg17[%c48, %c0_18] : memref<144x2304xbf16, #tpu.memory_space<vmem>>, vector<8x2177xbf16>
    tpu.vector_store %arg17[%c48, %c0_18], %23 {strides = array<i32>} : memref<144x2304xbf16, #tpu.memory_space<vmem>>, vector<8x2177xbf16>,
    %cst_19 = arith.constant 0.000000e+00 : bf16
    %25 = vector.broadcast %cst_19 : bf16 to vector<8x127xbf16>
    %c48_20 = arith.constant 48 : index
    %c2177 = arith.constant 2177 : index
    %26 = vector.load %arg17[%c48_20, %c2177] : memref<144x2304xbf16, #tpu.memory_space<vmem>>, vector<8x127xbf16>
    tpu.vector_store %arg17[%c48_20, %c2177], %25 {strides = array<i32>} : memref<144x2304xbf16, #tpu.memory_space<vmem>>, vector<8x127xbf16>,
    %27 = vector.extract_strided_slice %1 {offsets = [0, 128], sizes = [8, 2176], strides = [1, 1]} : vector<8x2304xbf16> to vector<8x2176xbf16>
    %c56 = arith.constant 56 : index
    %c0_21 = arith.constant 0 : index
    %28 = vector.load %arg17[%c56, %c0_21] : memref<144x2304xbf16, #tpu.memory_space<vmem>>, vector<8x2176xbf16>
    tpu.vector_store %arg17[%c56, %c0_21], %27 {strides = array<i32>} : memref<144x2304xbf16, #tpu.memory_space<vmem>>, vector<8x2176xbf16>,
    %cst_22 = arith.constant 0.000000e+00 : bf16
    %29 = vector.broadcast %cst_22 : bf16 to vector<8x128xbf16>
    %c56_23 = arith.constant 56 : index
    %c2176 = arith.constant 2176 : index
    %30 = vector.load %arg17[%c56_23, %c2176] : memref<144x2304xbf16, #tpu.memory_space<vmem>>, vector<8x128xbf16>
    tpu.vector_store %arg17[%c56_23, %c2176], %29 {strides = array<i32>} : memref<144x2304xbf16, #tpu.memory_space<vmem>>, vector<8x128xbf16>,
    %31 = vector.extract_strided_slice %1 {offsets = [0, 129], sizes = [8, 2175], strides = [1, 1]} : vector<8x2304xbf16> to vector<8x2175xbf16>
    %c64 = arith.constant 64 : index
    %c0_24 = arith.constant 0 : index
    %32 = vector.load %arg17[%c64, %c0_24] : memref<144x2304xbf16, #tpu.memory_space<vmem>>, vector<8x2175xbf16>
    tpu.vector_store %arg17[%c64, %c0_24], %31 {strides = array<i32>} : memref<144x2304xbf16, #tpu.memory_space<vmem>>, vector<8x2175xbf16>,
    %cst_25 = arith.constant 0.000000e+00 : bf16
    %33 = vector.broadcast %cst_25 : bf16 to vector<8x129xbf16>
    %c64_26 = arith.constant 64 : index
    %c2175 = arith.constant 2175 : index
    %34 = vector.load %arg17[%c64_26, %c2175] : memref<144x2304xbf16, #tpu.memory_space<vmem>>, vector<8x129xbf16>
    tpu.vector_store %arg17[%c64_26, %c2175], %33 {strides = array<i32>} : memref<144x2304xbf16, #tpu.memory_space<vmem>>, vector<8x129xbf16>,
    %c0_27 = arith.constant 0 : index
    %c0_28 = arith.constant 0 : index
    %35 = vector.load %arg2[%c0_27, %c0_28] : memref<8x72xbf16, #tpu.memory_space<vmem>>, vector<8x72xbf16>
    %c0_29 = arith.constant 0 : index
    %c0_30 = arith.constant 0 : index
    %36 = vector.load %arg17[%c0_29, %c0_30] : memref<144x2304xbf16, #tpu.memory_space<vmem>>, vector<72x2304xbf16>
    %cst_31 = arith.constant dense<0.000000e+00> : vector<8x2304xf32>
    %37 = tpu.matmul %35, %36, %cst_31 {dimension_numbers = #tpu.dot_dimension_numbers<[1], [0], [0], [1], [0, 0, 1, 1], [], []>} : vector<8x72xbf16>, vector<72x2304xbf16>, vector<8x2304xf32> -> vector<8x2304xf32>
    %c0_32 = arith.constant 0 : index
    %c0_33 = arith.constant 0 : index
    %38 = vector.load %arg6[%c0_32, %c0_33] : memref<8x1xf32, #tpu.memory_space<vmem>>, vector<8x1xf32>
    %39 = vector.broadcast %38 : vector<8x1xf32> to vector<8x2304xf32>
    %40 = arith.addf %37, %39 : vector<8x2304xf32>
    %cst_34 = arith.constant 0.000000e+00 : f32
    %41 = vector.broadcast %cst_34 : f32 to vector<8x2304xf32>
    %42 = arith.maximumf %40, %41 : vector<8x2304xf32>
    %c0_35 = arith.constant 0 : index
    %c0_36 = arith.constant 0 : index
    %43 = vector.load %arg10[%c0_35, %c0_36] : memref<1x2304xf32, #tpu.memory_space<vmem>>, vector<1x2304xf32>
    %44 = vector.broadcast %43 : vector<1x2304xf32> to vector<8x2304xf32>
    %45 = arith.mulf %42, %44 : vector<8x2304xf32>
    %46 = arith.truncf %45 : vector<8x2304xf32> to vector<8x2304xbf16>
    %47 = vector.extract_strided_slice %46 {offsets = [0, 0], sizes = [8, 2175], strides = [1, 1]} : vector<8x2304xbf16> to vector<8x2175xbf16>
    %c0_37 = arith.constant 0 : index
    %c129_38 = arith.constant 129 : index
    %48 = vector.load %arg17[%c0_37, %c129_38] : memref<144x2304xbf16, #tpu.memory_space<vmem>>, vector<8x2175xbf16>
    tpu.vector_store %arg17[%c0_37, %c129_38], %47 {strides = array<i32>} : memref<144x2304xbf16, #tpu.memory_space<vmem>>, vector<8x2175xbf16>,
    %cst_39 = arith.constant 0.000000e+00 : bf16
    %49 = vector.broadcast %cst_39 : bf16 to vector<8x129xbf16>
    %c0_40 = arith.constant 0 : index
    %c0_41 = arith.constant 0 : index
    %50 = vector.load %arg17[%c0_40, %c0_41] : memref<144x2304xbf16, #tpu.memory_space<vmem>>, vector<8x129xbf16>
    tpu.vector_store %arg17[%c0_40, %c0_41], %49 {strides = array<i32>} : memref<144x2304xbf16, #tpu.memory_space<vmem>>, vector<8x129xbf16>,
    %51 = vector.extract_strided_slice %46 {offsets = [0, 0], sizes = [8, 2176], strides = [1, 1]} : vector<8x2304xbf16> to vector<8x2176xbf16>
    %c8_42 = arith.constant 8 : index
    %c128_43 = arith.constant 128 : index
    %52 = vector.load %arg17[%c8_42, %c128_43] : memref<144x2304xbf16, #tpu.memory_space<vmem>>, vector<8x2176xbf16>
    tpu.vector_store %arg17[%c8_42, %c128_43], %51 {strides = array<i32>} : memref<144x2304xbf16, #tpu.memory_space<vmem>>, vector<8x2176xbf16>,
    %cst_44 = arith.constant 0.000000e+00 : bf16
    %53 = vector.broadcast %cst_44 : bf16 to vector<8x128xbf16>
    %c8_45 = arith.constant 8 : index
    %c0_46 = arith.constant 0 : index
    %54 = vector.load %arg17[%c8_45, %c0_46] : memref<144x2304xbf16, #tpu.memory_space<vmem>>, vector<8x128xbf16>
    tpu.vector_store %arg17[%c8_45, %c0_46], %53 {strides = array<i32>} : memref<144x2304xbf16, #tpu.memory_space<vmem>>, vector<8x128xbf16>,
    %55 = vector.extract_strided_slice %46 {offsets = [0, 0], sizes = [8, 2177], strides = [1, 1]} : vector<8x2304xbf16> to vector<8x2177xbf16>
    %c16_47 = arith.constant 16 : index
    %c127_48 = arith.constant 127 : index
    %56 = vector.load %arg17[%c16_47, %c127_48] : memref<144x2304xbf16, #tpu.memory_space<vmem>>, vector<8x2177xbf16>
    tpu.vector_store %arg17[%c16_47, %c127_48], %55 {strides = array<i32>} : memref<144x2304xbf16, #tpu.memory_space<vmem>>, vector<8x2177xbf16>,
    %cst_49 = arith.constant 0.000000e+00 : bf16
    %57 = vector.broadcast %cst_49 : bf16 to vector<8x127xbf16>
    %c16_50 = arith.constant 16 : index
    %c0_51 = arith.constant 0 : index
    %58 = vector.load %arg17[%c16_50, %c0_51] : memref<144x2304xbf16, #tpu.memory_space<vmem>>, vector<8x127xbf16>
    tpu.vector_store %arg17[%c16_50, %c0_51], %57 {strides = array<i32>} : memref<144x2304xbf16, #tpu.memory_space<vmem>>, vector<8x127xbf16>,
    %59 = vector.extract_strided_slice %46 {offsets = [0, 0], sizes = [8, 2303], strides = [1, 1]} : vector<8x2304xbf16> to vector<8x2303xbf16>
    %c24_52 = arith.constant 24 : index
    %c1_53 = arith.constant 1 : index
    %60 = vector.load %arg17[%c24_52, %c1_53] : memref<144x2304xbf16, #tpu.memory_space<vmem>>, vector<8x2303xbf16>
    tpu.vector_store %arg17[%c24_52, %c1_53], %59 {strides = array<i32>} : memref<144x2304xbf16, #tpu.memory_space<vmem>>, vector<8x2303xbf16>,
    %cst_54 = arith.constant 0.000000e+00 : bf16
    %61 = vector.broadcast %cst_54 : bf16 to vector<8x1xbf16>
    %c24_55 = arith.constant 24 : index
    %c0_56 = arith.constant 0 : index
    %62 = vector.load %arg17[%c24_55, %c0_56] : memref<144x2304xbf16, #tpu.memory_space<vmem>>, vector<8x1xbf16>
    tpu.vector_store %arg17[%c24_55, %c0_56], %61 {strides = array<i32>} : memref<144x2304xbf16, #tpu.memory_space<vmem>>, vector<8x1xbf16>,
    %c32_57 = arith.constant 32 : index
    %c0_58 = arith.constant 0 : index
    %63 = vector.load %arg17[%c32_57, %c0_58] : memref<144x2304xbf16, #tpu.memory_space<vmem>>, vector<8x2304xbf16>
    tpu.vector_store %arg17[%c32_57, %c0_58], %46 {strides = array<i32>} : memref<144x2304xbf16, #tpu.memory_space<vmem>>, vector<8x2304xbf16>,
    %64 = vector.extract_strided_slice %46 {offsets = [0, 1], sizes = [8, 2303], strides = [1, 1]} : vector<8x2304xbf16> to vector<8x2303xbf16>
    %c40_59 = arith.constant 40 : index
    %c0_60 = arith.constant 0 : index
    %65 = vector.load %arg17[%c40_59, %c0_60] : memref<144x2304xbf16, #tpu.memory_space<vmem>>, vector<8x2303xbf16>
    tpu.vector_store %arg17[%c40_59, %c0_60], %64 {strides = array<i32>} : memref<144x2304xbf16, #tpu.memory_space<vmem>>, vector<8x2303xbf16>,
    %cst_61 = arith.constant 0.000000e+00 : bf16
    %66 = vector.broadcast %cst_61 : bf16 to vector<8x1xbf16>
    %c40_62 = arith.constant 40 : index
    %c2303_63 = arith.constant 2303 : index
    %67 = vector.load %arg17[%c40_62, %c2303_63] : memref<144x2304xbf16, #tpu.memory_space<vmem>>, vector<8x1xbf16>
    tpu.vector_store %arg17[%c40_62, %c2303_63], %66 {strides = array<i32>} : memref<144x2304xbf16, #tpu.memory_space<vmem>>, vector<8x1xbf16>,
    %68 = vector.extract_strided_slice %46 {offsets = [0, 127], sizes = [8, 2177], strides = [1, 1]} : vector<8x2304xbf16> to vector<8x2177xbf16>
    %c48_64 = arith.constant 48 : index
    %c0_65 = arith.constant 0 : index
    %69 = vector.load %arg17[%c48_64, %c0_65] : memref<144x2304xbf16, #tpu.memory_space<vmem>>, vector<8x2177xbf16>
    tpu.vector_store %arg17[%c48_64, %c0_65], %68 {strides = array<i32>} : memref<144x2304xbf16, #tpu.memory_space<vmem>>, vector<8x2177xbf16>,
    %cst_66 = arith.constant 0.000000e+00 : bf16
    %70 = vector.broadcast %cst_66 : bf16 to vector<8x127xbf16>
    %c48_67 = arith.constant 48 : index
    %c2177_68 = arith.constant 2177 : index
    %71 = vector.load %arg17[%c48_67, %c2177_68] : memref<144x2304xbf16, #tpu.memory_space<vmem>>, vector<8x127xbf16>
    tpu.vector_store %arg17[%c48_67, %c2177_68], %70 {strides = array<i32>} : memref<144x2304xbf16, #tpu.memory_space<vmem>>, vector<8x127xbf16>,
    %72 = vector.extract_strided_slice %46 {offsets = [0, 128], sizes = [8, 2176], strides = [1, 1]} : vector<8x2304xbf16> to vector<8x2176xbf16>
    %c56_69 = arith.constant 56 : index
    %c0_70 = arith.constant 0 : index
    %73 = vector.load %arg17[%c56_69, %c0_70] : memref<144x2304xbf16, #tpu.memory_space<vmem>>, vector<8x2176xbf16>
    tpu.vector_store %arg17[%c56_69, %c0_70], %72 {strides = array<i32>} : memref<144x2304xbf16, #tpu.memory_space<vmem>>, vector<8x2176xbf16>,
    %cst_71 = arith.constant 0.000000e+00 : bf16
    %74 = vector.broadcast %cst_71 : bf16 to vector<8x128xbf16>
    %c56_72 = arith.constant 56 : index
    %c2176_73 = arith.constant 2176 : index
    %75 = vector.load %arg17[%c56_72, %c2176_73] : memref<144x2304xbf16, #tpu.memory_space<vmem>>, vector<8x128xbf16>
    tpu.vector_store %arg17[%c56_72, %c2176_73], %74 {strides = array<i32>} : memref<144x2304xbf16, #tpu.memory_space<vmem>>, vector<8x128xbf16>,
    %76 = vector.extract_strided_slice %46 {offsets = [0, 129], sizes = [8, 2175], strides = [1, 1]} : vector<8x2304xbf16> to vector<8x2175xbf16>
    %c64_74 = arith.constant 64 : index
    %c0_75 = arith.constant 0 : index
    %77 = vector.load %arg17[%c64_74, %c0_75] : memref<144x2304xbf16, #tpu.memory_space<vmem>>, vector<8x2175xbf16>
    tpu.vector_store %arg17[%c64_74, %c0_75], %76 {strides = array<i32>} : memref<144x2304xbf16, #tpu.memory_space<vmem>>, vector<8x2175xbf16>,
    %cst_76 = arith.constant 0.000000e+00 : bf16
    %78 = vector.broadcast %cst_76 : bf16 to vector<8x129xbf16>
    %c64_77 = arith.constant 64 : index
    %c2175_78 = arith.constant 2175 : index
    %79 = vector.load %arg17[%c64_77, %c2175_78] : memref<144x2304xbf16, #tpu.memory_space<vmem>>, vector<8x129xbf16>
    tpu.vector_store %arg17[%c64_77, %c2175_78], %78 {strides = array<i32>} : memref<144x2304xbf16, #tpu.memory_space<vmem>>, vector<8x129xbf16>,
    %c0_79 = arith.constant 0 : index
    %c0_80 = arith.constant 0 : index
    %80 = vector.load %arg3[%c0_79, %c0_80] : memref<8x72xbf16, #tpu.memory_space<vmem>>, vector<8x72xbf16>
    %c0_81 = arith.constant 0 : index
    %c0_82 = arith.constant 0 : index
    %81 = vector.load %arg17[%c0_81, %c0_82] : memref<144x2304xbf16, #tpu.memory_space<vmem>>, vector<72x2304xbf16>
    %cst_83 = arith.constant dense<0.000000e+00> : vector<8x2304xf32>
    %82 = tpu.matmul %80, %81, %cst_83 {dimension_numbers = #tpu.dot_dimension_numbers<[1], [0], [0], [1], [0, 0, 1, 1], [], []>} : vector<8x72xbf16>, vector<72x2304xbf16>, vector<8x2304xf32> -> vector<8x2304xf32>
    %c0_84 = arith.constant 0 : index
    %c0_85 = arith.constant 0 : index
    %83 = vector.load %arg7[%c0_84, %c0_85] : memref<8x1xf32, #tpu.memory_space<vmem>>, vector<8x1xf32>
    %84 = vector.broadcast %83 : vector<8x1xf32> to vector<8x2304xf32>
    %85 = arith.addf %82, %84 : vector<8x2304xf32>
    %cst_86 = arith.constant 0.000000e+00 : f32
    %86 = vector.broadcast %cst_86 : f32 to vector<8x2304xf32>
    %87 = arith.maximumf %85, %86 : vector<8x2304xf32>
    %88 = arith.truncf %87 : vector<8x2304xf32> to vector<8x2304xbf16>
    %c0_87 = arith.constant 0 : index
    %c0_88 = arith.constant 0 : index
    %89 = vector.load %arg12[%c0_87, %c0_88] : memref<128x128xbf16, #tpu.memory_space<vmem>>, vector<128x128xbf16>
    %cst_89 = arith.constant 0.000000e+00 : bf16
    %90 = vector.broadcast %cst_89 : bf16 to vector<8x128xbf16>
    %c0_90 = arith.constant 0 : index
    %c0_91 = arith.constant 0 : index
    %91 = vector.load %arg18[%c0_90, %c0_91] : memref<16x1280xbf16, #tpu.memory_space<vmem>>, vector<8x128xbf16>
    tpu.vector_store %arg18[%c0_90, %c0_91], %90 {strides = array<i32>} : memref<16x1280xbf16, #tpu.memory_space<vmem>>, vector<8x128xbf16>,
    %c0_92 = arith.constant 0 : index
    %c1152 = arith.constant 1152 : index
    %92 = vector.load %arg18[%c0_92, %c1152] : memref<16x1280xbf16, #tpu.memory_space<vmem>>, vector<8x128xbf16>
    tpu.vector_store %arg18[%c0_92, %c1152], %90 {strides = array<i32>} : memref<16x1280xbf16, #tpu.memory_space<vmem>>, vector<8x128xbf16>,
    %93 = vector.extract_strided_slice %88 {offsets = [0, 128], sizes = [8, 128], strides = [1, 1]} : vector<8x2304xbf16> to vector<8x128xbf16>
    %94 = vector.extract_strided_slice %88 {offsets = [0, 256], sizes = [8, 128], strides = [1, 1]} : vector<8x2304xbf16> to vector<8x128xbf16>
    %95 = arith.addf %93, %94 : vector<8x128xbf16>
    %cst_93 = arith.constant dense<0.000000e+00> : vector<8x128xf32>
    %96 = tpu.matmul %95, %89, %cst_93 {dimension_numbers = #tpu.dot_dimension_numbers<[1], [0], [0], [1], [0, 0, 1, 1], [], []>} : vector<8x128xbf16>, vector<128x128xbf16>, vector<8x128xf32> -> vector<8x128xf32>
    %cst_94 = arith.constant 5.000000e-01 : f32
    %97 = vector.broadcast %cst_94 : f32 to vector<8x128xf32>
    %98 = arith.mulf %96, %97 : vector<8x128xf32>
    %99 = arith.truncf %98 : vector<8x128xf32> to vector<8x128xbf16>
    %c0_95 = arith.constant 0 : index
    %c128_96 = arith.constant 128 : index
    %100 = vector.load %arg18[%c0_95, %c128_96] : memref<16x1280xbf16, #tpu.memory_space<vmem>>, vector<8x128xbf16>
    tpu.vector_store %arg18[%c0_95, %c128_96], %99 {strides = array<i32>} : memref<16x1280xbf16, #tpu.memory_space<vmem>>, vector<8x128xbf16>,
    %101 = vector.extract_strided_slice %88 {offsets = [0, 384], sizes = [8, 128], strides = [1, 1]} : vector<8x2304xbf16> to vector<8x128xbf16>
    %102 = vector.extract_strided_slice %88 {offsets = [0, 512], sizes = [8, 128], strides = [1, 1]} : vector<8x2304xbf16> to vector<8x128xbf16>
    %103 = arith.addf %101, %102 : vector<8x128xbf16>
    %cst_97 = arith.constant dense<0.000000e+00> : vector<8x128xf32>
    %104 = tpu.matmul %103, %89, %cst_97 {dimension_numbers = #tpu.dot_dimension_numbers<[1], [0], [0], [1], [0, 0, 1, 1], [], []>} : vector<8x128xbf16>, vector<128x128xbf16>, vector<8x128xf32> -> vector<8x128xf32>
    %cst_98 = arith.constant 5.000000e-01 : f32
    %105 = vector.broadcast %cst_98 : f32 to vector<8x128xf32>
    %106 = arith.mulf %104, %105 : vector<8x128xf32>
    %107 = arith.truncf %106 : vector<8x128xf32> to vector<8x128xbf16>
    %c0_99 = arith.constant 0 : index
    %c256 = arith.constant 256 : index
    %108 = vector.load %arg18[%c0_99, %c256] : memref<16x1280xbf16, #tpu.memory_space<vmem>>, vector<8x128xbf16>
    tpu.vector_store %arg18[%c0_99, %c256], %107 {strides = array<i32>} : memref<16x1280xbf16, #tpu.memory_space<vmem>>, vector<8x128xbf16>,
    %109 = vector.extract_strided_slice %88 {offsets = [0, 640], sizes = [8, 128], strides = [1, 1]} : vector<8x2304xbf16> to vector<8x128xbf16>
    %110 = vector.extract_strided_slice %88 {offsets = [0, 768], sizes = [8, 128], strides = [1, 1]} : vector<8x2304xbf16> to vector<8x128xbf16>
    %111 = arith.addf %109, %110 : vector<8x128xbf16>
    %cst_100 = arith.constant dense<0.000000e+00> : vector<8x128xf32>
    %112 = tpu.matmul %111, %89, %cst_100 {dimension_numbers = #tpu.dot_dimension_numbers<[1], [0], [0], [1], [0, 0, 1, 1], [], []>} : vector<8x128xbf16>, vector<128x128xbf16>, vector<8x128xf32> -> vector<8x128xf32>
    %cst_101 = arith.constant 5.000000e-01 : f32
    %113 = vector.broadcast %cst_101 : f32 to vector<8x128xf32>
    %114 = arith.mulf %112, %113 : vector<8x128xf32>
    %115 = arith.truncf %114 : vector<8x128xf32> to vector<8x128xbf16>
    %c0_102 = arith.constant 0 : index
    %c384 = arith.constant 384 : index
    %116 = vector.load %arg18[%c0_102, %c384] : memref<16x1280xbf16, #tpu.memory_space<vmem>>, vector<8x128xbf16>
    tpu.vector_store %arg18[%c0_102, %c384], %115 {strides = array<i32>} : memref<16x1280xbf16, #tpu.memory_space<vmem>>, vector<8x128xbf16>,
    %117 = vector.extract_strided_slice %88 {offsets = [0, 896], sizes = [8, 128], strides = [1, 1]} : vector<8x2304xbf16> to vector<8x128xbf16>
    %118 = vector.extract_strided_slice %88 {offsets = [0, 1024], sizes = [8, 128], strides = [1, 1]} : vector<8x2304xbf16> to vector<8x128xbf16>
    %119 = arith.addf %117, %118 : vector<8x128xbf16>
    %cst_103 = arith.constant dense<0.000000e+00> : vector<8x128xf32>
    %120 = tpu.matmul %119, %89, %cst_103 {dimension_numbers = #tpu.dot_dimension_numbers<[1], [0], [0], [1], [0, 0, 1, 1], [], []>} : vector<8x128xbf16>, vector<128x128xbf16>, vector<8x128xf32> -> vector<8x128xf32>
    %cst_104 = arith.constant 5.000000e-01 : f32
    %121 = vector.broadcast %cst_104 : f32 to vector<8x128xf32>
    %122 = arith.mulf %120, %121 : vector<8x128xf32>
    %123 = arith.truncf %122 : vector<8x128xf32> to vector<8x128xbf16>
    %c0_105 = arith.constant 0 : index
    %c512 = arith.constant 512 : index
    %124 = vector.load %arg18[%c0_105, %c512] : memref<16x1280xbf16, #tpu.memory_space<vmem>>, vector<8x128xbf16>
    tpu.vector_store %arg18[%c0_105, %c512], %123 {strides = array<i32>} : memref<16x1280xbf16, #tpu.memory_space<vmem>>, vector<8x128xbf16>,
    %125 = vector.extract_strided_slice %88 {offsets = [0, 1152], sizes = [8, 128], strides = [1, 1]} : vector<8x2304xbf16> to vector<8x128xbf16>
    %126 = vector.extract_strided_slice %88 {offsets = [0, 1280], sizes = [8, 128], strides = [1, 1]} : vector<8x2304xbf16> to vector<8x128xbf16>
    %127 = arith.addf %125, %126 : vector<8x128xbf16>
    %cst_106 = arith.constant dense<0.000000e+00> : vector<8x128xf32>
    %128 = tpu.matmul %127, %89, %cst_106 {dimension_numbers = #tpu.dot_dimension_numbers<[1], [0], [0], [1], [0, 0, 1, 1], [], []>} : vector<8x128xbf16>, vector<128x128xbf16>, vector<8x128xf32> -> vector<8x128xf32>
    %cst_107 = arith.constant 5.000000e-01 : f32
    %129 = vector.broadcast %cst_107 : f32 to vector<8x128xf32>
    %130 = arith.mulf %128, %129 : vector<8x128xf32>
    %131 = arith.truncf %130 : vector<8x128xf32> to vector<8x128xbf16>
    %c0_108 = arith.constant 0 : index
    %c640 = arith.constant 640 : index
    %132 = vector.load %arg18[%c0_108, %c640] : memref<16x1280xbf16, #tpu.memory_space<vmem>>, vector<8x128xbf16>
    tpu.vector_store %arg18[%c0_108, %c640], %131 {strides = array<i32>} : memref<16x1280xbf16, #tpu.memory_space<vmem>>, vector<8x128xbf16>,
    %133 = vector.extract_strided_slice %88 {offsets = [0, 1408], sizes = [8, 128], strides = [1, 1]} : vector<8x2304xbf16> to vector<8x128xbf16>
    %134 = vector.extract_strided_slice %88 {offsets = [0, 1536], sizes = [8, 128], strides = [1, 1]} : vector<8x2304xbf16> to vector<8x128xbf16>
    %135 = arith.addf %133, %134 : vector<8x128xbf16>
    %cst_109 = arith.constant dense<0.000000e+00> : vector<8x128xf32>
    %136 = tpu.matmul %135, %89, %cst_109 {dimension_numbers = #tpu.dot_dimension_numbers<[1], [0], [0], [1], [0, 0, 1, 1], [], []>} : vector<8x128xbf16>, vector<128x128xbf16>, vector<8x128xf32> -> vector<8x128xf32>
    %cst_110 = arith.constant 5.000000e-01 : f32
    %137 = vector.broadcast %cst_110 : f32 to vector<8x128xf32>
    %138 = arith.mulf %136, %137 : vector<8x128xf32>
    %139 = arith.truncf %138 : vector<8x128xf32> to vector<8x128xbf16>
    %c0_111 = arith.constant 0 : index
    %c768 = arith.constant 768 : index
    %140 = vector.load %arg18[%c0_111, %c768] : memref<16x1280xbf16, #tpu.memory_space<vmem>>, vector<8x128xbf16>
    tpu.vector_store %arg18[%c0_111, %c768], %139 {strides = array<i32>} : memref<16x1280xbf16, #tpu.memory_space<vmem>>, vector<8x128xbf16>,
    %141 = vector.extract_strided_slice %88 {offsets = [0, 1664], sizes = [8, 128], strides = [1, 1]} : vector<8x2304xbf16> to vector<8x128xbf16>
    %142 = vector.extract_strided_slice %88 {offsets = [0, 1792], sizes = [8, 128], strides = [1, 1]} : vector<8x2304xbf16> to vector<8x128xbf16>
    %143 = arith.addf %141, %142 : vector<8x128xbf16>
    %cst_112 = arith.constant dense<0.000000e+00> : vector<8x128xf32>
    %144 = tpu.matmul %143, %89, %cst_112 {dimension_numbers = #tpu.dot_dimension_numbers<[1], [0], [0], [1], [0, 0, 1, 1], [], []>} : vector<8x128xbf16>, vector<128x128xbf16>, vector<8x128xf32> -> vector<8x128xf32>
    %cst_113 = arith.constant 5.000000e-01 : f32
    %145 = vector.broadcast %cst_113 : f32 to vector<8x128xf32>
    %146 = arith.mulf %144, %145 : vector<8x128xf32>
    %147 = arith.truncf %146 : vector<8x128xf32> to vector<8x128xbf16>
    %c0_114 = arith.constant 0 : index
    %c896 = arith.constant 896 : index
    %148 = vector.load %arg18[%c0_114, %c896] : memref<16x1280xbf16, #tpu.memory_space<vmem>>, vector<8x128xbf16>
    tpu.vector_store %arg18[%c0_114, %c896], %147 {strides = array<i32>} : memref<16x1280xbf16, #tpu.memory_space<vmem>>, vector<8x128xbf16>,
    %149 = vector.extract_strided_slice %88 {offsets = [0, 1920], sizes = [8, 128], strides = [1, 1]} : vector<8x2304xbf16> to vector<8x128xbf16>
    %150 = vector.extract_strided_slice %88 {offsets = [0, 2048], sizes = [8, 128], strides = [1, 1]} : vector<8x2304xbf16> to vector<8x128xbf16>
    %151 = arith.addf %149, %150 : vector<8x128xbf16>
    %cst_115 = arith.constant dense<0.000000e+00> : vector<8x128xf32>
    %152 = tpu.matmul %151, %89, %cst_115 {dimension_numbers = #tpu.dot_dimension_numbers<[1], [0], [0], [1], [0, 0, 1, 1], [], []>} : vector<8x128xbf16>, vector<128x128xbf16>, vector<8x128xf32> -> vector<8x128xf32>
    %cst_116 = arith.constant 5.000000e-01 : f32
    %153 = vector.broadcast %cst_116 : f32 to vector<8x128xf32>
    %154 = arith.mulf %152, %153 : vector<8x128xf32>
    %155 = arith.truncf %154 : vector<8x128xf32> to vector<8x128xbf16>
    %c0_117 = arith.constant 0 : index
    %c1024 = arith.constant 1024 : index
    %156 = vector.load %arg18[%c0_117, %c1024] : memref<16x1280xbf16, #tpu.memory_space<vmem>>, vector<8x128xbf16>
    tpu.vector_store %arg18[%c0_117, %c1024], %155 {strides = array<i32>} : memref<16x1280xbf16, #tpu.memory_space<vmem>>, vector<8x128xbf16>,
    %c0_118 = arith.constant 0 : index
    %c0_119 = arith.constant 0 : index
    %157 = vector.load %arg18[%c0_118, %c0_119] : memref<16x1280xbf16, #tpu.memory_space<vmem>>, vector<8x1280xbf16>
    %158 = vector.extract_strided_slice %157 {offsets = [0, 0], sizes = [8, 1151], strides = [1, 1]} : vector<8x1280xbf16> to vector<8x1151xbf16>
    %c0_120 = arith.constant 0 : index
    %c129_121 = arith.constant 129 : index
    %159 = vector.load %arg17[%c0_120, %c129_121] : memref<144x2304xbf16, #tpu.memory_space<vmem>>, vector<8x1151xbf16>
    tpu.vector_store %arg17[%c0_120, %c129_121], %158 {strides = array<i32>} : memref<144x2304xbf16, #tpu.memory_space<vmem>>, vector<8x1151xbf16>,
    %cst_122 = arith.constant 0.000000e+00 : bf16
    %160 = vector.broadcast %cst_122 : bf16 to vector<8x129xbf16>
    %c0_123 = arith.constant 0 : index
    %c0_124 = arith.constant 0 : index
    %161 = vector.load %arg17[%c0_123, %c0_124] : memref<144x2304xbf16, #tpu.memory_space<vmem>>, vector<8x129xbf16>
    tpu.vector_store %arg17[%c0_123, %c0_124], %160 {strides = array<i32>} : memref<144x2304xbf16, #tpu.memory_space<vmem>>, vector<8x129xbf16>,
    %162 = vector.extract_strided_slice %157 {offsets = [0, 0], sizes = [8, 1152], strides = [1, 1]} : vector<8x1280xbf16> to vector<8x1152xbf16>
    %c8_125 = arith.constant 8 : index
    %c128_126 = arith.constant 128 : index
    %163 = vector.load %arg17[%c8_125, %c128_126] : memref<144x2304xbf16, #tpu.memory_space<vmem>>, vector<8x1152xbf16>
    tpu.vector_store %arg17[%c8_125, %c128_126], %162 {strides = array<i32>} : memref<144x2304xbf16, #tpu.memory_space<vmem>>, vector<8x1152xbf16>,
    %cst_127 = arith.constant 0.000000e+00 : bf16
    %164 = vector.broadcast %cst_127 : bf16 to vector<8x128xbf16>
    %c8_128 = arith.constant 8 : index
    %c0_129 = arith.constant 0 : index
    %165 = vector.load %arg17[%c8_128, %c0_129] : memref<144x2304xbf16, #tpu.memory_space<vmem>>, vector<8x128xbf16>
    tpu.vector_store %arg17[%c8_128, %c0_129], %164 {strides = array<i32>} : memref<144x2304xbf16, #tpu.memory_space<vmem>>, vector<8x128xbf16>,
    %166 = vector.extract_strided_slice %157 {offsets = [0, 0], sizes = [8, 1153], strides = [1, 1]} : vector<8x1280xbf16> to vector<8x1153xbf16>
    %c16_130 = arith.constant 16 : index
    %c127_131 = arith.constant 127 : index
    %167 = vector.load %arg17[%c16_130, %c127_131] : memref<144x2304xbf16, #tpu.memory_space<vmem>>, vector<8x1153xbf16>
    tpu.vector_store %arg17[%c16_130, %c127_131], %166 {strides = array<i32>} : memref<144x2304xbf16, #tpu.memory_space<vmem>>, vector<8x1153xbf16>,
    %cst_132 = arith.constant 0.000000e+00 : bf16
    %168 = vector.broadcast %cst_132 : bf16 to vector<8x127xbf16>
    %c16_133 = arith.constant 16 : index
    %c0_134 = arith.constant 0 : index
    %169 = vector.load %arg17[%c16_133, %c0_134] : memref<144x2304xbf16, #tpu.memory_space<vmem>>, vector<8x127xbf16>
    tpu.vector_store %arg17[%c16_133, %c0_134], %168 {strides = array<i32>} : memref<144x2304xbf16, #tpu.memory_space<vmem>>, vector<8x127xbf16>,
    %170 = vector.extract_strided_slice %157 {offsets = [0, 0], sizes = [8, 1279], strides = [1, 1]} : vector<8x1280xbf16> to vector<8x1279xbf16>
    %c24_135 = arith.constant 24 : index
    %c1_136 = arith.constant 1 : index
    %171 = vector.load %arg17[%c24_135, %c1_136] : memref<144x2304xbf16, #tpu.memory_space<vmem>>, vector<8x1279xbf16>
    tpu.vector_store %arg17[%c24_135, %c1_136], %170 {strides = array<i32>} : memref<144x2304xbf16, #tpu.memory_space<vmem>>, vector<8x1279xbf16>,
    %cst_137 = arith.constant 0.000000e+00 : bf16
    %172 = vector.broadcast %cst_137 : bf16 to vector<8x1xbf16>
    %c24_138 = arith.constant 24 : index
    %c0_139 = arith.constant 0 : index
    %173 = vector.load %arg17[%c24_138, %c0_139] : memref<144x2304xbf16, #tpu.memory_space<vmem>>, vector<8x1xbf16>
    tpu.vector_store %arg17[%c24_138, %c0_139], %172 {strides = array<i32>} : memref<144x2304xbf16, #tpu.memory_space<vmem>>, vector<8x1xbf16>,
    %c32_140 = arith.constant 32 : index
    %c0_141 = arith.constant 0 : index
    %174 = vector.load %arg17[%c32_140, %c0_141] : memref<144x2304xbf16, #tpu.memory_space<vmem>>, vector<8x1280xbf16>
    tpu.vector_store %arg17[%c32_140, %c0_141], %157 {strides = array<i32>} : memref<144x2304xbf16, #tpu.memory_space<vmem>>, vector<8x1280xbf16>,
    %175 = vector.extract_strided_slice %157 {offsets = [0, 1], sizes = [8, 1279], strides = [1, 1]} : vector<8x1280xbf16> to vector<8x1279xbf16>
    %c40_142 = arith.constant 40 : index
    %c0_143 = arith.constant 0 : index
    %176 = vector.load %arg17[%c40_142, %c0_143] : memref<144x2304xbf16, #tpu.memory_space<vmem>>, vector<8x1279xbf16>
    tpu.vector_store %arg17[%c40_142, %c0_143], %175 {strides = array<i32>} : memref<144x2304xbf16, #tpu.memory_space<vmem>>, vector<8x1279xbf16>,
    %cst_144 = arith.constant 0.000000e+00 : bf16
    %177 = vector.broadcast %cst_144 : bf16 to vector<8x1xbf16>
    %c40_145 = arith.constant 40 : index
    %c1279 = arith.constant 1279 : index
    %178 = vector.load %arg17[%c40_145, %c1279] : memref<144x2304xbf16, #tpu.memory_space<vmem>>, vector<8x1xbf16>
    tpu.vector_store %arg17[%c40_145, %c1279], %177 {strides = array<i32>} : memref<144x2304xbf16, #tpu.memory_space<vmem>>, vector<8x1xbf16>,
    %179 = vector.extract_strided_slice %157 {offsets = [0, 127], sizes = [8, 1153], strides = [1, 1]} : vector<8x1280xbf16> to vector<8x1153xbf16>
    %c48_146 = arith.constant 48 : index
    %c0_147 = arith.constant 0 : index
    %180 = vector.load %arg17[%c48_146, %c0_147] : memref<144x2304xbf16, #tpu.memory_space<vmem>>, vector<8x1153xbf16>
    tpu.vector_store %arg17[%c48_146, %c0_147], %179 {strides = array<i32>} : memref<144x2304xbf16, #tpu.memory_space<vmem>>, vector<8x1153xbf16>,
    %cst_148 = arith.constant 0.000000e+00 : bf16
    %181 = vector.broadcast %cst_148 : bf16 to vector<8x127xbf16>
    %c48_149 = arith.constant 48 : index
    %c1153 = arith.constant 1153 : index
    %182 = vector.load %arg17[%c48_149, %c1153] : memref<144x2304xbf16, #tpu.memory_space<vmem>>, vector<8x127xbf16>
    tpu.vector_store %arg17[%c48_149, %c1153], %181 {strides = array<i32>} : memref<144x2304xbf16, #tpu.memory_space<vmem>>, vector<8x127xbf16>,
    %183 = vector.extract_strided_slice %157 {offsets = [0, 128], sizes = [8, 1152], strides = [1, 1]} : vector<8x1280xbf16> to vector<8x1152xbf16>
    %c56_150 = arith.constant 56 : index
    %c0_151 = arith.constant 0 : index
    %184 = vector.load %arg17[%c56_150, %c0_151] : memref<144x2304xbf16, #tpu.memory_space<vmem>>, vector<8x1152xbf16>
    tpu.vector_store %arg17[%c56_150, %c0_151], %183 {strides = array<i32>} : memref<144x2304xbf16, #tpu.memory_space<vmem>>, vector<8x1152xbf16>,
    %cst_152 = arith.constant 0.000000e+00 : bf16
    %185 = vector.broadcast %cst_152 : bf16 to vector<8x128xbf16>
    %c56_153 = arith.constant 56 : index
    %c1152_154 = arith.constant 1152 : index
    %186 = vector.load %arg17[%c56_153, %c1152_154] : memref<144x2304xbf16, #tpu.memory_space<vmem>>, vector<8x128xbf16>
    tpu.vector_store %arg17[%c56_153, %c1152_154], %185 {strides = array<i32>} : memref<144x2304xbf16, #tpu.memory_space<vmem>>, vector<8x128xbf16>,
    %187 = vector.extract_strided_slice %157 {offsets = [0, 129], sizes = [8, 1151], strides = [1, 1]} : vector<8x1280xbf16> to vector<8x1151xbf16>
    %c64_155 = arith.constant 64 : index
    %c0_156 = arith.constant 0 : index
    %188 = vector.load %arg17[%c64_155, %c0_156] : memref<144x2304xbf16, #tpu.memory_space<vmem>>, vector<8x1151xbf16>
    tpu.vector_store %arg17[%c64_155, %c0_156], %187 {strides = array<i32>} : memref<144x2304xbf16, #tpu.memory_space<vmem>>, vector<8x1151xbf16>,
    %cst_157 = arith.constant 0.000000e+00 : bf16
    %189 = vector.broadcast %cst_157 : bf16 to vector<8x129xbf16>
    %c64_158 = arith.constant 64 : index
    %c1151 = arith.constant 1151 : index
    %190 = vector.load %arg17[%c64_158, %c1151] : memref<144x2304xbf16, #tpu.memory_space<vmem>>, vector<8x129xbf16>
    tpu.vector_store %arg17[%c64_158, %c1151], %189 {strides = array<i32>} : memref<144x2304xbf16, #tpu.memory_space<vmem>>, vector<8x129xbf16>,
    %c0_159 = arith.constant 0 : index
    %c0_160 = arith.constant 0 : index
    %191 = vector.load %arg4[%c0_159, %c0_160] : memref<16x72xbf16, #tpu.memory_space<vmem>>, vector<16x72xbf16>
    %c0_161 = arith.constant 0 : index
    %c0_162 = arith.constant 0 : index
    %192 = vector.load %arg17[%c0_161, %c0_162] : memref<144x2304xbf16, #tpu.memory_space<vmem>>, vector<72x1280xbf16>
    %cst_163 = arith.constant dense<0.000000e+00> : vector<16x1280xf32>
    %193 = tpu.matmul %191, %192, %cst_163 {dimension_numbers = #tpu.dot_dimension_numbers<[1], [0], [0], [1], [0, 0, 1, 1], [], []>} : vector<16x72xbf16>, vector<72x1280xbf16>, vector<16x1280xf32> -> vector<16x1280xf32>
    %c0_164 = arith.constant 0 : index
    %c0_165 = arith.constant 0 : index
    %194 = vector.load %arg8[%c0_164, %c0_165] : memref<16x1xf32, #tpu.memory_space<vmem>>, vector<16x1xf32>
    %195 = vector.broadcast %194 : vector<16x1xf32> to vector<16x1280xf32>
    %196 = arith.addf %193, %195 : vector<16x1280xf32>
    %cst_166 = arith.constant 0.000000e+00 : f32
    %197 = vector.broadcast %cst_166 : f32 to vector<16x1280xf32>
    %198 = arith.maximumf %196, %197 : vector<16x1280xf32>
    %c0_167 = arith.constant 0 : index
    %c0_168 = arith.constant 0 : index
    %199 = vector.load %arg11[%c0_167, %c0_168] : memref<1x1280xf32, #tpu.memory_space<vmem>>, vector<1x1280xf32>
    %200 = vector.broadcast %199 : vector<1x1280xf32> to vector<16x1280xf32>
    %201 = arith.mulf %198, %200 : vector<16x1280xf32>
    %202 = arith.truncf %201 : vector<16x1280xf32> to vector<16x1280xbf16>
    %203 = vector.extract_strided_slice %202 {offsets = [0, 0], sizes = [16, 1151], strides = [1, 1]} : vector<16x1280xbf16> to vector<16x1151xbf16>
    %c0_169 = arith.constant 0 : index
    %c129_170 = arith.constant 129 : index
    %204 = vector.load %arg17[%c0_169, %c129_170] : memref<144x2304xbf16, #tpu.memory_space<vmem>>, vector<16x1151xbf16>
    tpu.vector_store %arg17[%c0_169, %c129_170], %203 {strides = array<i32>} : memref<144x2304xbf16, #tpu.memory_space<vmem>>, vector<16x1151xbf16>,
    %cst_171 = arith.constant 0.000000e+00 : bf16
    %205 = vector.broadcast %cst_171 : bf16 to vector<16x129xbf16>
    %c0_172 = arith.constant 0 : index
    %c0_173 = arith.constant 0 : index
    %206 = vector.load %arg17[%c0_172, %c0_173] : memref<144x2304xbf16, #tpu.memory_space<vmem>>, vector<16x129xbf16>
    tpu.vector_store %arg17[%c0_172, %c0_173], %205 {strides = array<i32>} : memref<144x2304xbf16, #tpu.memory_space<vmem>>, vector<16x129xbf16>,
    %207 = vector.extract_strided_slice %202 {offsets = [0, 0], sizes = [16, 1152], strides = [1, 1]} : vector<16x1280xbf16> to vector<16x1152xbf16>
    %c16_174 = arith.constant 16 : index
    %c128_175 = arith.constant 128 : index
    %208 = vector.load %arg17[%c16_174, %c128_175] : memref<144x2304xbf16, #tpu.memory_space<vmem>>, vector<16x1152xbf16>
    tpu.vector_store %arg17[%c16_174, %c128_175], %207 {strides = array<i32>} : memref<144x2304xbf16, #tpu.memory_space<vmem>>, vector<16x1152xbf16>,
    %cst_176 = arith.constant 0.000000e+00 : bf16
    %209 = vector.broadcast %cst_176 : bf16 to vector<16x128xbf16>
    %c16_177 = arith.constant 16 : index
    %c0_178 = arith.constant 0 : index
    %210 = vector.load %arg17[%c16_177, %c0_178] : memref<144x2304xbf16, #tpu.memory_space<vmem>>, vector<16x128xbf16>
    tpu.vector_store %arg17[%c16_177, %c0_178], %209 {strides = array<i32>} : memref<144x2304xbf16, #tpu.memory_space<vmem>>, vector<16x128xbf16>,
    %211 = vector.extract_strided_slice %202 {offsets = [0, 0], sizes = [16, 1153], strides = [1, 1]} : vector<16x1280xbf16> to vector<16x1153xbf16>
    %c32_179 = arith.constant 32 : index
    %c127_180 = arith.constant 127 : index
    %212 = vector.load %arg17[%c32_179, %c127_180] : memref<144x2304xbf16, #tpu.memory_space<vmem>>, vector<16x1153xbf16>
    tpu.vector_store %arg17[%c32_179, %c127_180], %211 {strides = array<i32>} : memref<144x2304xbf16, #tpu.memory_space<vmem>>, vector<16x1153xbf16>,
    %cst_181 = arith.constant 0.000000e+00 : bf16
    %213 = vector.broadcast %cst_181 : bf16 to vector<16x127xbf16>
    %c32_182 = arith.constant 32 : index
    %c0_183 = arith.constant 0 : index
    %214 = vector.load %arg17[%c32_182, %c0_183] : memref<144x2304xbf16, #tpu.memory_space<vmem>>, vector<16x127xbf16>
    tpu.vector_store %arg17[%c32_182, %c0_183], %213 {strides = array<i32>} : memref<144x2304xbf16, #tpu.memory_space<vmem>>, vector<16x127xbf16>,
    %215 = vector.extract_strided_slice %202 {offsets = [0, 0], sizes = [16, 1279], strides = [1, 1]} : vector<16x1280xbf16> to vector<16x1279xbf16>
    %c48_184 = arith.constant 48 : index
    %c1_185 = arith.constant 1 : index
    %216 = vector.load %arg17[%c48_184, %c1_185] : memref<144x2304xbf16, #tpu.memory_space<vmem>>, vector<16x1279xbf16>
    tpu.vector_store %arg17[%c48_184, %c1_185], %215 {strides = array<i32>} : memref<144x2304xbf16, #tpu.memory_space<vmem>>, vector<16x1279xbf16>,
    %cst_186 = arith.constant 0.000000e+00 : bf16
    %217 = vector.broadcast %cst_186 : bf16 to vector<16x1xbf16>
    %c48_187 = arith.constant 48 : index
    %c0_188 = arith.constant 0 : index
    %218 = vector.load %arg17[%c48_187, %c0_188] : memref<144x2304xbf16, #tpu.memory_space<vmem>>, vector<16x1xbf16>
    tpu.vector_store %arg17[%c48_187, %c0_188], %217 {strides = array<i32>} : memref<144x2304xbf16, #tpu.memory_space<vmem>>, vector<16x1xbf16>,
    %c64_189 = arith.constant 64 : index
    %c0_190 = arith.constant 0 : index
    %219 = vector.load %arg17[%c64_189, %c0_190] : memref<144x2304xbf16, #tpu.memory_space<vmem>>, vector<16x1280xbf16>
    tpu.vector_store %arg17[%c64_189, %c0_190], %202 {strides = array<i32>} : memref<144x2304xbf16, #tpu.memory_space<vmem>>, vector<16x1280xbf16>,
    %220 = vector.extract_strided_slice %202 {offsets = [0, 1], sizes = [16, 1279], strides = [1, 1]} : vector<16x1280xbf16> to vector<16x1279xbf16>
    %c80 = arith.constant 80 : index
    %c0_191 = arith.constant 0 : index
    %221 = vector.load %arg17[%c80, %c0_191] : memref<144x2304xbf16, #tpu.memory_space<vmem>>, vector<16x1279xbf16>
    tpu.vector_store %arg17[%c80, %c0_191], %220 {strides = array<i32>} : memref<144x2304xbf16, #tpu.memory_space<vmem>>, vector<16x1279xbf16>,
    %cst_192 = arith.constant 0.000000e+00 : bf16
    %222 = vector.broadcast %cst_192 : bf16 to vector<16x1xbf16>
    %c80_193 = arith.constant 80 : index
    %c1279_194 = arith.constant 1279 : index
    %223 = vector.load %arg17[%c80_193, %c1279_194] : memref<144x2304xbf16, #tpu.memory_space<vmem>>, vector<16x1xbf16>
    tpu.vector_store %arg17[%c80_193, %c1279_194], %222 {strides = array<i32>} : memref<144x2304xbf16, #tpu.memory_space<vmem>>, vector<16x1xbf16>,
    %224 = vector.extract_strided_slice %202 {offsets = [0, 127], sizes = [16, 1153], strides = [1, 1]} : vector<16x1280xbf16> to vector<16x1153xbf16>
    %c96 = arith.constant 96 : index
    %c0_195 = arith.constant 0 : index
    %225 = vector.load %arg17[%c96, %c0_195] : memref<144x2304xbf16, #tpu.memory_space<vmem>>, vector<16x1153xbf16>
    tpu.vector_store %arg17[%c96, %c0_195], %224 {strides = array<i32>} : memref<144x2304xbf16, #tpu.memory_space<vmem>>, vector<16x1153xbf16>,
    %cst_196 = arith.constant 0.000000e+00 : bf16
    %226 = vector.broadcast %cst_196 : bf16 to vector<16x127xbf16>
    %c96_197 = arith.constant 96 : index
    %c1153_198 = arith.constant 1153 : index
    %227 = vector.load %arg17[%c96_197, %c1153_198] : memref<144x2304xbf16, #tpu.memory_space<vmem>>, vector<16x127xbf16>
    tpu.vector_store %arg17[%c96_197, %c1153_198], %226 {strides = array<i32>} : memref<144x2304xbf16, #tpu.memory_space<vmem>>, vector<16x127xbf16>,
    %228 = vector.extract_strided_slice %202 {offsets = [0, 128], sizes = [16, 1152], strides = [1, 1]} : vector<16x1280xbf16> to vector<16x1152xbf16>
    %c112 = arith.constant 112 : index
    %c0_199 = arith.constant 0 : index
    %229 = vector.load %arg17[%c112, %c0_199] : memref<144x2304xbf16, #tpu.memory_space<vmem>>, vector<16x1152xbf16>
    tpu.vector_store %arg17[%c112, %c0_199], %228 {strides = array<i32>} : memref<144x2304xbf16, #tpu.memory_space<vmem>>, vector<16x1152xbf16>,
    %cst_200 = arith.constant 0.000000e+00 : bf16
    %230 = vector.broadcast %cst_200 : bf16 to vector<16x128xbf16>
    %c112_201 = arith.constant 112 : index
    %c1152_202 = arith.constant 1152 : index
    %231 = vector.load %arg17[%c112_201, %c1152_202] : memref<144x2304xbf16, #tpu.memory_space<vmem>>, vector<16x128xbf16>
    tpu.vector_store %arg17[%c112_201, %c1152_202], %230 {strides = array<i32>} : memref<144x2304xbf16, #tpu.memory_space<vmem>>, vector<16x128xbf16>,
    %232 = vector.extract_strided_slice %202 {offsets = [0, 129], sizes = [16, 1151], strides = [1, 1]} : vector<16x1280xbf16> to vector<16x1151xbf16>
    %c128_203 = arith.constant 128 : index
    %c0_204 = arith.constant 0 : index
    %233 = vector.load %arg17[%c128_203, %c0_204] : memref<144x2304xbf16, #tpu.memory_space<vmem>>, vector<16x1151xbf16>
    tpu.vector_store %arg17[%c128_203, %c0_204], %232 {strides = array<i32>} : memref<144x2304xbf16, #tpu.memory_space<vmem>>, vector<16x1151xbf16>,
    %cst_205 = arith.constant 0.000000e+00 : bf16
    %234 = vector.broadcast %cst_205 : bf16 to vector<16x129xbf16>
    %c128_206 = arith.constant 128 : index
    %c1151_207 = arith.constant 1151 : index
    %235 = vector.load %arg17[%c128_206, %c1151_207] : memref<144x2304xbf16, #tpu.memory_space<vmem>>, vector<16x129xbf16>
    tpu.vector_store %arg17[%c128_206, %c1151_207], %234 {strides = array<i32>} : memref<144x2304xbf16, #tpu.memory_space<vmem>>, vector<16x129xbf16>,
    %c0_208 = arith.constant 0 : index
    %c0_209 = arith.constant 0 : index
    %236 = vector.load %arg5[%c0_208, %c0_209] : memref<16x144xbf16, #tpu.memory_space<vmem>>, vector<16x144xbf16>
    %c0_210 = arith.constant 0 : index
    %c0_211 = arith.constant 0 : index
    %237 = vector.load %arg17[%c0_210, %c0_211] : memref<144x2304xbf16, #tpu.memory_space<vmem>>, vector<144x1280xbf16>
    %cst_212 = arith.constant dense<0.000000e+00> : vector<16x1280xf32>
    %238 = tpu.matmul %236, %237, %cst_212 {dimension_numbers = #tpu.dot_dimension_numbers<[1], [0], [0], [1], [0, 0, 1, 1], [], []>} : vector<16x144xbf16>, vector<144x1280xbf16>, vector<16x1280xf32> -> vector<16x1280xf32>
    %c0_213 = arith.constant 0 : index
    %c0_214 = arith.constant 0 : index
    %239 = vector.load %arg9[%c0_213, %c0_214] : memref<16x1xf32, #tpu.memory_space<vmem>>, vector<16x1xf32>
    %240 = vector.broadcast %239 : vector<16x1xf32> to vector<16x1280xf32>
    %241 = arith.addf %238, %240 : vector<16x1280xf32>
    %cst_215 = arith.constant 0.000000e+00 : f32
    %242 = vector.broadcast %cst_215 : f32 to vector<16x1280xf32>
    %243 = arith.maximumf %241, %242 : vector<16x1280xf32>
    %c0_216 = arith.constant 0 : index
    %c0_217 = arith.constant 0 : index
    %244 = vector.load %arg11[%c0_216, %c0_217] : memref<1x1280xf32, #tpu.memory_space<vmem>>, vector<1x1280xf32>
    %245 = vector.broadcast %244 : vector<1x1280xf32> to vector<16x1280xf32>
    %246 = arith.mulf %243, %245 : vector<16x1280xf32>
    %cst_218 = arith.constant dense<0.000000e+00> : vector<16xf32>
    %247 = vector.multi_reduction <add>, %246, %cst_218 [1] : vector<16x1280xf32> to vector<16xf32>
    %248 = vector.shape_cast %247 : vector<16xf32> to vector<16x1xf32>
    %cst_219 = arith.constant 1.562500e-02 : f32
    %249 = vector.broadcast %cst_219 : f32 to vector<16x1xf32>
    %250 = arith.mulf %248, %249 : vector<16x1xf32>
    %c0_220 = arith.constant 0 : index
    %c0_221 = arith.constant 0 : index
    %c0_222 = arith.constant 0 : index
    %251 = vector.load %arg15[%c0_220, %c0_221, %c0_222] : memref<1x16x1xf32, #tpu.memory_space<vmem>>, vector<1x16x1xf32>
    %252 = vector.shape_cast %251 : vector<1x16x1xf32> to vector<16x1xf32>
    %253 = vector.shape_cast %250 : vector<16x1xf32> to vector<1x16x1xf32>
    tpu.vector_store %arg15[%c0_220, %c0_221, %c0_222], %253 {strides = array<i32>} : memref<1x16x1xf32, #tpu.memory_space<vmem>>, vector<1x16x1xf32>,
    %c0_223 = arith.constant 0 : index
    %c0_224 = arith.constant 0 : index
    %254 = vector.load %arg13[%c0_223, %c0_224] : memref<12x16xf32, #tpu.memory_space<vmem>>, vector<12x16xf32>
    %cst_225 = arith.constant dense<0.000000e+00> : vector<12x1xf32>
    %255 = tpu.matmul %254, %250, %cst_225 {dimension_numbers = #tpu.dot_dimension_numbers<[1], [0], [0], [1], [0, 0, 1, 1], [], []>} : vector<12x16xf32>, vector<16x1xf32>, vector<12x1xf32> -> vector<12x1xf32>
    %c0_226 = arith.constant 0 : index
    %c0_227 = arith.constant 0 : index
    %256 = vector.load %arg14[%c0_226, %c0_227] : memref<12x1xf32, #tpu.memory_space<vmem>>, vector<12x1xf32>
    %257 = arith.addf %255, %256 : vector<12x1xf32>
    %258 = tpu.iota {dimensions = array<i32: 0>} : vector<12x1xi32>
    %c6_i32 = arith.constant 6 : i32
    %259 = vector.broadcast %c6_i32 : i32 to vector<12x1xi32>
    %260 = arith.cmpi slt, %258, %259 : vector<12x1xi32>
    %261 = math.exp %257 : vector<12x1xf32>
    %262 = arith.select %260, %257, %261 : vector<12x1xi1>, vector<12x1xf32>
    %c0_228 = arith.constant 0 : index
    %c0_229 = arith.constant 0 : index
    %c0_230 = arith.constant 0 : index
    %263 = vector.load %arg16[%c0_228, %c0_229, %c0_230] : memref<1x12x1xf32, #tpu.memory_space<vmem>>, vector<1x12x1xf32>
    %264 = vector.shape_cast %263 : vector<1x12x1xf32> to vector<12x1xf32>
    %265 = vector.shape_cast %262 : vector<12x1xf32> to vector<1x12x1xf32>
    tpu.vector_store %arg16[%c0_228, %c0_229, %c0_230], %265 {strides = array<i32>} : memref<1x12x1xf32, #tpu.memory_space<vmem>>, vector<1x12x1xf32>,
    return
  }
  func.func @transform_0(%arg0: i32) -> (i32, i32, i32) {
    %c0_i32 = arith.constant 0 : i32
    %c0_i32_0 = arith.constant 0 : i32
    %c0_i32_1 = arith.constant 0 : i32
    return %arg0, %c0_i32, %c0_i32_0 : i32, i32, i32
  }
  func.func @transform_1(%arg0: i32) -> (i32, i32) {
    %c0_i32 = arith.constant 0 : i32
    %c0_i32_0 = arith.constant 0 : i32
    %c0_i32_1 = arith.constant 0 : i32
    return %c0_i32, %c0_i32_0 : i32, i32
  }
  func.func @transform_2(%arg0: i32) -> (i32, i32) {
    %c0_i32 = arith.constant 0 : i32
    %c0_i32_0 = arith.constant 0 : i32
    %c0_i32_1 = arith.constant 0 : i32
    return %c0_i32, %c0_i32_0 : i32, i32
  }
  func.func @transform_3(%arg0: i32) -> (i32, i32) {
    %c0_i32 = arith.constant 0 : i32
    %c0_i32_0 = arith.constant 0 : i32
    %c0_i32_1 = arith.constant 0 : i32
    return %c0_i32, %c0_i32_0 : i32, i32
  }
  func.func @transform_4(%arg0: i32) -> (i32, i32) {
    %c0_i32 = arith.constant 0 : i32
    %c0_i32_0 = arith.constant 0 : i32
    %c0_i32_1 = arith.constant 0 : i32
    return %c0_i32, %c0_i32_0 : i32, i32
  }
  func.func @transform_5(%arg0: i32) -> (i32, i32) {
    %c0_i32 = arith.constant 0 : i32
    %c0_i32_0 = arith.constant 0 : i32
    %c0_i32_1 = arith.constant 0 : i32
    return %c0_i32, %c0_i32_0 : i32, i32
  }
  func.func @transform_6(%arg0: i32) -> (i32, i32) {
    %c0_i32 = arith.constant 0 : i32
    %c0_i32_0 = arith.constant 0 : i32
    %c0_i32_1 = arith.constant 0 : i32
    return %c0_i32, %c0_i32_0 : i32, i32
  }
  func.func @transform_7(%arg0: i32) -> (i32, i32) {
    %c0_i32 = arith.constant 0 : i32
    %c0_i32_0 = arith.constant 0 : i32
    %c0_i32_1 = arith.constant 0 : i32
    return %c0_i32, %c0_i32_0 : i32, i32
  }
  func.func @transform_8(%arg0: i32) -> (i32, i32) {
    %c0_i32 = arith.constant 0 : i32
    %c0_i32_0 = arith.constant 0 : i32
    %c0_i32_1 = arith.constant 0 : i32
    return %c0_i32, %c0_i32_0 : i32, i32
  }
  func.func @transform_9(%arg0: i32) -> (i32, i32) {
    %c0_i32 = arith.constant 0 : i32
    %c0_i32_0 = arith.constant 0 : i32
    %c0_i32_1 = arith.constant 0 : i32
    return %c0_i32, %c0_i32_0 : i32, i32
  }
  func.func @transform_10(%arg0: i32) -> (i32, i32) {
    %c0_i32 = arith.constant 0 : i32
    %c0_i32_0 = arith.constant 0 : i32
    %c0_i32_1 = arith.constant 0 : i32
    return %c0_i32, %c0_i32_0 : i32, i32
  }
  func.func @transform_11(%arg0: i32) -> (i32, i32) {
    %c0_i32 = arith.constant 0 : i32
    %c0_i32_0 = arith.constant 0 : i32
    %c0_i32_1 = arith.constant 0 : i32
    return %c0_i32, %c0_i32_0 : i32, i32
  }
  func.func @transform_12(%arg0: i32) -> (i32, i32) {
    %c0_i32 = arith.constant 0 : i32
    %c0_i32_0 = arith.constant 0 : i32
    %c0_i32_1 = arith.constant 0 : i32
    return %c0_i32, %c0_i32_0 : i32, i32
  }
  func.func @transform_13(%arg0: i32) -> (i32, i32) {
    %c0_i32 = arith.constant 0 : i32
    %c0_i32_0 = arith.constant 0 : i32
    %c0_i32_1 = arith.constant 0 : i32
    return %c0_i32, %c0_i32_0 : i32, i32
  }
  func.func @transform_14(%arg0: i32) -> (i32, i32, i32) {
    %c0_i32 = arith.constant 0 : i32
    %c0_i32_0 = arith.constant 0 : i32
    %c0_i32_1 = arith.constant 0 : i32
    return %arg0, %c0_i32, %c0_i32_0 : i32, i32, i32
  }
  func.func @transform_15(%arg0: i32) -> (i32, i32, i32) {
    %c0_i32 = arith.constant 0 : i32
    %c0_i32_0 = arith.constant 0 : i32
    %c0_i32_1 = arith.constant 0 : i32
    return %arg0, %c0_i32, %c0_i32_0 : i32, i32, i32
  }
}

</mosaic_0001>

<llo_original>
// kernel: tpu_custom_call.1
$region0: #{tpu_custom_call.1}
  #allocation0 [shape = 'u32[]', space=smem, size = 0x4, offset = 0x4, fixed_abs, tag = 'smem constant byte address 0x4 - core index']
  #allocation1 [shape = 'u32[144,128]{1,0:T(1,128)}', space=vmem, size = 0x12000, scoped, tag = 'internal scratch']
  #allocation2 [shape = 'bf16[144,2304]{1,0:T(16,128)(2,1)}', space=vmem, size = 0xa2000, scoped, tag = 'scratch operand']
  #allocation3 [shape = 'bf16[16,1280]{1,0:T(16,128)(2,1)}', space=vmem, size = 0xa000, scoped, tag = 'scratch operand']
  %s0 = inlined_call_operand.hbm [shape: bf16[2,8,2304], index: 0, kind: input, shape index: {}]
  %s1 = inlined_call_operand.hbm [shape: bf16[8,72], index: 1, kind: input, shape index: {}]
  %s2 = inlined_call_operand.hbm [shape: bf16[8,72], index: 2, kind: input, shape index: {}]
  %s3 = inlined_call_operand.hbm [shape: bf16[16,72], index: 3, kind: input, shape index: {}]
  %s4 = inlined_call_operand.vmem [shape: bf16[16,144], index: 4, kind: input, shape index: {}]
  %s5 = inlined_call_operand.vmem [shape: f32[8,1], index: 5, kind: input, shape index: {}]
  %s6 = inlined_call_operand.vmem [shape: f32[8,1], index: 6, kind: input, shape index: {}]
  %s7 = inlined_call_operand.vmem [shape: f32[16,1], index: 7, kind: input, shape index: {}]
  %s8 = inlined_call_operand.vmem [shape: f32[16,1], index: 8, kind: input, shape index: {}]
  %s9 = inlined_call_operand.vmem [shape: f32[1,2304], index: 9, kind: input, shape index: {}]
  %s10 = inlined_call_operand.hbm [shape: f32[1,1280], index: 10, kind: input, shape index: {}]
  %s11 = inlined_call_operand.vmem [shape: bf16[128,128], index: 11, kind: input, shape index: {}]
  %s12 = inlined_call_operand.vmem [shape: f32[12,16], index: 12, kind: input, shape index: {}]
  %s13 = inlined_call_operand.vmem [shape: f32[12,1], index: 13, kind: input, shape index: {}]
  %s14 = inlined_call_operand.vmem [shape: f32[2,16,1], index: 14, kind: output, shape index: {0}]
  %s15 = inlined_call_operand.vmem [shape: f32[2,12,1], index: 15, kind: output, shape index: {1}]
  %16 = xla_tuple %s14, %s15
  %s17 = sld [smem:[#allocation0]]
  $region117: #{tpu_custom_call.1} parent=0
    _
  %s19 = ssub.s32 1, %s17
  %s20 = scalar_select 0, %s19, %s17
  $region1: #{tpu_custom_call.1} parent=0
    #allocation4 [shape = 'u8[73728]{0}', space=vmem, size = 0x12000, scoped, tag = 'input window, operand 0']
    #allocation5 [shape = 's32[2]{0}', space=sflag, size = 0x8, scoped, tag = 'scoped memory for tpu_custom_call.1']
    #allocation6 [shape = 'u8[2048]{0}', space=vmem, size = 0x800, scoped, tag = 'input window, operand 1, single buffered']
    #allocation7 [shape = 's32[1]{0}', space=sflag, size = 0x4, scoped, tag = 'scoped memory for tpu_custom_call.1']
    #allocation8 [shape = 'u8[2048]{0}', space=vmem, size = 0x800, scoped, tag = 'input window, operand 2, single buffered']
    #allocation9 [shape = 'u8[4096]{0}', space=vmem, size = 0x1000, scoped, tag = 'input window, operand 3, single buffered']
    #allocation10 [shape = 's32[1]{0}', space=sflag, size = 0x4, scoped, tag = 'scoped memory for tpu_custom_call.1']
    #allocation11 [shape = 'u8[5120]{0}', space=vmem, size = 0x1400, scoped, tag = 'input window, operand 10, single buffered']
    %21 = vsyncpa [#allocation5], 0
    %s22 = scalar_lea.sflag [#allocation5], 1
    %23 = vsyncpa %s22, 0
    %24 = vsyncpa [#allocation7], 0
    %25 = vsyncpa [#allocation10], 0
    loop: start=0, step=1, limit=4
    $region2: #{tpu_custom_call.1} parent=1 // loop_pre_header
      _
    $region3: #{tpu_custom_call.1} parent=1 // loop_header
      %s27 = sphi 0, %s31
      %p28 = scmp.ge.s32.totalorder %s27, 4
      %s37 = sphi 0, %s39
      %s40 = sphi 0, %s37
      %s41 = sphi 0, %s40
      %s57 = sphi 0, %s41
      %s61 = sphi 0, %s61
      %s63 = sphi 0, %s61
      %s64 = sphi 0, %s63
      %s78 = sphi 0, %s64
      %s82 = sphi 0, %s82
      %s84 = sphi 0, %s82
      %s85 = sphi 0, %s84
      %s99 = sphi 0, %s85
      %s103 = sphi 0, %s103
      %s105 = sphi 0, %s103
      %s106 = sphi 0, %s105
      %s120 = sphi 0, %s106
      %s124 = sphi 0, %s124
      %s126 = sphi 0, %s124
      %s127 = sphi 0, %s126
      %s141 = sphi 0, %s127
      %s145 = sphi 0, %s145
      %s147 = sphi 0, %s145
      %s148 = sphi 0, %s147
      %s162 = sphi 0, %s148
      %s166 = sphi 0, %s166
      %s168 = sphi 0, %s166
      %s169 = sphi 0, %s168
      %s183 = sphi 0, %s169
      %s187 = sphi 0, %s187
      %s189 = sphi 0, %s187
      %s190 = sphi 0, %s189
      %s204 = sphi 0, %s190
      %s208 = sphi 0, %s208
      %s210 = sphi 0, %s208
      %s211 = sphi 0, %s210
      %s225 = sphi 0, %s211
      %s229 = sphi 0, %s229
      %s231 = sphi 0, %s229
      %s232 = sphi 0, %s231
      %s246 = sphi 0, %s232
      %s250 = sphi 0, %s250
      %s252 = sphi 0, %s250
      %s253 = sphi 0, %s252
      %s267 = sphi 0, %s253
      %s271 = sphi 0, %s271
      %s273 = sphi 0, %s271
      %s274 = sphi 0, %s273
      %s288 = sphi 0, %s274
      %s292 = sphi 0, %s292
      %s294 = sphi 0, %s292
      %s295 = sphi 0, %s294
      %s309 = sphi 0, %s295
      %s313 = sphi 0, %s313
      %s315 = sphi 0, %s313
      %s316 = sphi 0, %s315
      %s330 = sphi 0, %s316
      %s336 = sphi 0, %s338
      %s339 = sphi 0, %s336
      %s340 = sphi 0, %s339
      %s356 = sphi 0, %s340
      %s362 = sphi 0, %s364
      %s365 = sphi 0, %s362
      %s366 = sphi 0, %s365
      %s382 = sphi 0, %s366
    $region4: #{tpu_custom_call.1} parent=1 // loop_header_branch
      %30 = sbr.rel (%p28) target = $region8
    $region5: #{tpu_custom_call.1} parent=1 // loop_body
      %s32 = ssub.s32 %s27, 1
      %s33 = ssub.s32 %s27, 2
      %s34 = sadd.s32 %s27, 1
      %s35 = ssub.s32 %s27, %s34
      %p36 = scmp.eq.s32.totalorder %s35, 0
      %s38 = sadd.s32 %s37, 1
      %s39 = scalar_select %p36, %s37, %s38
      %p42 = pneg %p36
      %p43 = scmp.eq.s32.totalorder %s27, 1
      %p44 = por %p42, %p43
      %p45 = scmp.ne.s32.totalorder %s37, %s40
      %p46 = scmp.eq.s32.totalorder %s27, 0
      %p47 = por %p45, %p46
      %p48 = scmp.ne.s32.totalorder %s37, %s40
      %p49 = scmp.eq.s32.totalorder %s32, 1
      %p50 = por %p48, %p49
      %p51 = scmp.ne.s32.totalorder %s40, %s41
      %p52 = scmp.eq.s32.totalorder %s32, 0
      %p53 = por %p51, %p52
      %p54 = scmp.ne.s32.totalorder %s40, %s41
      %p55 = scmp.eq.s32.totalorder %s33, 1
      %p56 = por %p54, %p55
      %p58 = scmp.ne.s32.totalorder %s41, %s57
      %p59 = scmp.eq.s32.totalorder %s33, 0
      %p60 = por %p58, %p59
      %s62 = sadd.s32 %s61, 1
      %p65 = scmp.eq.s32.totalorder %s27, 1
      %p66 = scmp.ne.s32.totalorder %s61, %s63
      %p67 = scmp.eq.s32.totalorder %s27, 0
      %p68 = por %p66, %p67
      %p69 = scmp.ne.s32.totalorder %s61, %s63
      %p70 = scmp.eq.s32.totalorder %s32, 1
      %p71 = por %p69, %p70
      %p72 = scmp.ne.s32.totalorder %s63, %s64
      %p73 = scmp.eq.s32.totalorder %s32, 0
      %p74 = por %p72, %p73
      %p75 = scmp.ne.s32.totalorder %s63, %s64
      %p76 = scmp.eq.s32.totalorder %s33, 1
      %p77 = por %p75, %p76
      %p79 = scmp.ne.s32.totalorder %s64, %s78
      %p80 = scmp.eq.s32.totalorder %s33, 0
      %p81 = por %p79, %p80
      %s83 = sadd.s32 %s82, 1
      %p86 = scmp.eq.s32.totalorder %s27, 1
      %p87 = scmp.ne.s32.totalorder %s82, %s84
      %p88 = scmp.eq.s32.totalorder %s27, 0
      %p89 = por %p87, %p88
      %p90 = scmp.ne.s32.totalorder %s82, %s84
      %p91 = scmp.eq.s32.totalorder %s32, 1
      %p92 = por %p90, %p91
      %p93 = scmp.ne.s32.totalorder %s84, %s85
      %p94 = scmp.eq.s32.totalorder %s32, 0
      %p95 = por %p93, %p94
      %p96 = scmp.ne.s32.totalorder %s84, %s85
      %p97 = scmp.eq.s32.totalorder %s33, 1
      %p98 = por %p96, %p97
      %p100 = scmp.ne.s32.totalorder %s85, %s99
      %p101 = scmp.eq.s32.totalorder %s33, 0
      %p102 = por %p100, %p101
      %s104 = sadd.s32 %s103, 1
      %p107 = scmp.eq.s32.totalorder %s27, 1
      %p108 = scmp.ne.s32.totalorder %s103, %s105
      %p109 = scmp.eq.s32.totalorder %s27, 0
      %p110 = por %p108, %p109
      %p111 = scmp.ne.s32.totalorder %s103, %s105
      %p112 = scmp.eq.s32.totalorder %s32, 1
      %p113 = por %p111, %p112
      %p114 = scmp.ne.s32.totalorder %s105, %s106
      %p115 = scmp.eq.s32.totalorder %s32, 0
      %p116 = por %p114, %p115
      %p117 = scmp.ne.s32.totalorder %s105, %s106
      %p118 = scmp.eq.s32.totalorder %s33, 1
      %p119 = por %p117, %p118
      %p121 = scmp.ne.s32.totalorder %s106, %s120
      %p122 = scmp.eq.s32.totalorder %s33, 0
      %p123 = por %p121, %p122
      %s125 = sadd.s32 %s124, 1
      %p128 = scmp.eq.s32.totalorder %s27, 1
      %p129 = scmp.ne.s32.totalorder %s124, %s126
      %p130 = scmp.eq.s32.totalorder %s27, 0
      %p131 = por %p129, %p130
      %p132 = scmp.ne.s32.totalorder %s124, %s126
      %p133 = scmp.eq.s32.totalorder %s32, 1
      %p134 = por %p132, %p133
      %p135 = scmp.ne.s32.totalorder %s126, %s127
      %p136 = scmp.eq.s32.totalorder %s32, 0
      %p137 = por %p135, %p136
      %p138 = scmp.ne.s32.totalorder %s126, %s127
      %p139 = scmp.eq.s32.totalorder %s33, 1
      %p140 = por %p138, %p139
      %p142 = scmp.ne.s32.totalorder %s127, %s141
      %p143 = scmp.eq.s32.totalorder %s33, 0
      %p144 = por %p142, %p143
      %s146 = sadd.s32 %s145, 1
      %p149 = scmp.eq.s32.totalorder %s27, 1
      %p150 = scmp.ne.s32.totalorder %s145, %s147
      %p151 = scmp.eq.s32.totalorder %s27, 0
      %p152 = por %p150, %p151
      %p153 = scmp.ne.s32.totalorder %s145, %s147
      %p154 = scmp.eq.s32.totalorder %s32, 1
      %p155 = por %p153, %p154
      %p156 = scmp.ne.s32.totalorder %s147, %s148
      %p157 = scmp.eq.s32.totalorder %s32, 0
      %p158 = por %p156, %p157
      %p159 = scmp.ne.s32.totalorder %s147, %s148
      %p160 = scmp.eq.s32.totalorder %s33, 1
      %p161 = por %p159, %p160
      %p163 = scmp.ne.s32.totalorder %s148, %s162
      %p164 = scmp.eq.s32.totalorder %s33, 0
      %p165 = por %p163, %p164
      %s167 = sadd.s32 %s166, 1
      %p170 = scmp.eq.s32.totalorder %s27, 1
      %p171 = scmp.ne.s32.totalorder %s166, %s168
      %p172 = scmp.eq.s32.totalorder %s27, 0
      %p173 = por %p171, %p172
      %p174 = scmp.ne.s32.totalorder %s166, %s168
      %p175 = scmp.eq.s32.totalorder %s32, 1
      %p176 = por %p174, %p175
      %p177 = scmp.ne.s32.totalorder %s168, %s169
      %p178 = scmp.eq.s32.totalorder %s32, 0
      %p179 = por %p177, %p178
      %p180 = scmp.ne.s32.totalorder %s168, %s169
      %p181 = scmp.eq.s32.totalorder %s33, 1
      %p182 = por %p180, %p181
      %p184 = scmp.ne.s32.totalorder %s169, %s183
      %p185 = scmp.eq.s32.totalorder %s33, 0
      %p186 = por %p184, %p185
      %s188 = sadd.s32 %s187, 1
      %p191 = scmp.eq.s32.totalorder %s27, 1
      %p192 = scmp.ne.s32.totalorder %s187, %s189
      %p193 = scmp.eq.s32.totalorder %s27, 0
      %p194 = por %p192, %p193
      %p195 = scmp.ne.s32.totalorder %s187, %s189
      %p196 = scmp.eq.s32.totalorder %s32, 1
      %p197 = por %p195, %p196
      %p198 = scmp.ne.s32.totalorder %s189, %s190
      %p199 = scmp.eq.s32.totalorder %s32, 0
      %p200 = por %p198, %p199
      %p201 = scmp.ne.s32.totalorder %s189, %s190
      %p202 = scmp.eq.s32.totalorder %s33, 1
      %p203 = por %p201, %p202
      %p205 = scmp.ne.s32.totalorder %s190, %s204
      %p206 = scmp.eq.s32.totalorder %s33, 0
      %p207 = por %p205, %p206
      %s209 = sadd.s32 %s208, 1
      %p212 = scmp.eq.s32.totalorder %s27, 1
      %p213 = scmp.ne.s32.totalorder %s208, %s210
      %p214 = scmp.eq.s32.totalorder %s27, 0
      %p215 = por %p213, %p214
      %p216 = scmp.ne.s32.totalorder %s208, %s210
      %p217 = scmp.eq.s32.totalorder %s32, 1
      %p218 = por %p216, %p217
      %p219 = scmp.ne.s32.totalorder %s210, %s211
      %p220 = scmp.eq.s32.totalorder %s32, 0
      %p221 = por %p219, %p220
      %p222 = scmp.ne.s32.totalorder %s210, %s211
      %p223 = scmp.eq.s32.totalorder %s33, 1
      %p224 = por %p222, %p223
      %p226 = scmp.ne.s32.totalorder %s211, %s225
      %p227 = scmp.eq.s32.totalorder %s33, 0
      %p228 = por %p226, %p227
      %s230 = sadd.s32 %s229, 1
      %p233 = scmp.eq.s32.totalorder %s27, 1
      %p234 = scmp.ne.s32.totalorder %s229, %s231
      %p235 = scmp.eq.s32.totalorder %s27, 0
      %p236 = por %p234, %p235
      %p237 = scmp.ne.s32.totalorder %s229, %s231
      %p238 = scmp.eq.s32.totalorder %s32, 1
      %p239 = por %p237, %p238
      %p240 = scmp.ne.s32.totalorder %s231, %s232
      %p241 = scmp.eq.s32.totalorder %s32, 0
      %p242 = por %p240, %p241
      %p243 = scmp.ne.s32.totalorder %s231, %s232
      %p244 = scmp.eq.s32.totalorder %s33, 1
      %p245 = por %p243, %p244
      %p247 = scmp.ne.s32.totalorder %s232, %s246
      %p248 = scmp.eq.s32.totalorder %s33, 0
      %p249 = por %p247, %p248
      %s251 = sadd.s32 %s250, 1
      %p254 = scmp.eq.s32.totalorder %s27, 1
      %p255 = scmp.ne.s32.totalorder %s250, %s252
      %p256 = scmp.eq.s32.totalorder %s27, 0
      %p257 = por %p255, %p256
      %p258 = scmp.ne.s32.totalorder %s250, %s252
      %p259 = scmp.eq.s32.totalorder %s32, 1
      %p260 = por %p258, %p259
      %p261 = scmp.ne.s32.totalorder %s252, %s253
      %p262 = scmp.eq.s32.totalorder %s32, 0
      %p263 = por %p261, %p262
      %p264 = scmp.ne.s32.totalorder %s252, %s253
      %p265 = scmp.eq.s32.totalorder %s33, 1
      %p266 = por %p264, %p265
      %p268 = scmp.ne.s32.totalorder %s253, %s267
      %p269 = scmp.eq.s32.totalorder %s33, 0
      %p270 = por %p268, %p269
      %s272 = sadd.s32 %s271, 1
      %p275 = scmp.eq.s32.totalorder %s27, 1
      %p276 = scmp.ne.s32.totalorder %s271, %s273
      %p277 = scmp.eq.s32.totalorder %s27, 0
      %p278 = por %p276, %p277
      %p279 = scmp.ne.s32.totalorder %s271, %s273
      %p280 = scmp.eq.s32.totalorder %s32, 1
      %p281 = por %p279, %p280
      %p282 = scmp.ne.s32.totalorder %s273, %s274
      %p283 = scmp.eq.s32.totalorder %s32, 0
      %p284 = por %p282, %p283
      %p285 = scmp.ne.s32.totalorder %s273, %s274
      %p286 = scmp.eq.s32.totalorder %s33, 1
      %p287 = por %p285, %p286
      %p289 = scmp.ne.s32.totalorder %s274, %s288
      %p290 = scmp.eq.s32.totalorder %s33, 0
      %p291 = por %p289, %p290
      %s293 = sadd.s32 %s292, 1
      %p296 = scmp.eq.s32.totalorder %s27, 1
      %p297 = scmp.ne.s32.totalorder %s292, %s294
      %p298 = scmp.eq.s32.totalorder %s27, 0
      %p299 = por %p297, %p298
      %p300 = scmp.ne.s32.totalorder %s292, %s294
      %p301 = scmp.eq.s32.totalorder %s32, 1
      %p302 = por %p300, %p301
      %p303 = scmp.ne.s32.totalorder %s294, %s295
      %p304 = scmp.eq.s32.totalorder %s32, 0
      %p305 = por %p303, %p304
      %p306 = scmp.ne.s32.totalorder %s294, %s295
      %p307 = scmp.eq.s32.totalorder %s33, 1
      %p308 = por %p306, %p307
      %p310 = scmp.ne.s32.totalorder %s295, %s309
      %p311 = scmp.eq.s32.totalorder %s33, 0
      %p312 = por %p310, %p311
      %s314 = sadd.s32 %s313, 1
      %p317 = scmp.eq.s32.totalorder %s27, 1
      %p318 = scmp.ne.s32.totalorder %s313, %s315
      %p319 = scmp.eq.s32.totalorder %s27, 0
      %p320 = por %p318, %p319
      %p321 = scmp.ne.s32.totalorder %s313, %s315
      %p322 = scmp.eq.s32.totalorder %s32, 1
      %p323 = por %p321, %p322
      %p324 = scmp.ne.s32.totalorder %s315, %s316
      %p325 = scmp.eq.s32.totalorder %s32, 0
      %p326 = por %p324, %p325
      %p327 = scmp.ne.s32.totalorder %s315, %s316
      %p328 = scmp.eq.s32.totalorder %s33, 1
      %p329 = por %p327, %p328
      %p331 = scmp.ne.s32.totalorder %s316, %s330
      %p332 = scmp.eq.s32.totalorder %s33, 0
      %p333 = por %p331, %p332
      %s334 = ssub.s32 %s27, %s34
      %p335 = scmp.eq.s32.totalorder %s334, 0
      %s337 = sadd.s32 %s336, 1
      %s338 = scalar_select %p335, %s336, %s337
      %p341 = pneg %p335
      %p342 = scmp.eq.s32.totalorder %s27, 1
      %p343 = por %p341, %p342
      %p344 = scmp.ne.s32.totalorder %s336, %s339
      %p345 = scmp.eq.s32.totalorder %s27, 0
      %p346 = por %p344, %p345
      %p347 = scmp.ne.s32.totalorder %s336, %s339
      %p348 = scmp.eq.s32.totalorder %s32, 1
      %p349 = por %p347, %p348
      %p350 = scmp.ne.s32.totalorder %s339, %s340
      %p351 = scmp.eq.s32.totalorder %s32, 0
      %p352 = por %p350, %p351
      %p353 = scmp.ne.s32.totalorder %s339, %s340
      %p354 = scmp.eq.s32.totalorder %s33, 1
      %p355 = por %p353, %p354
      %p357 = scmp.ne.s32.totalorder %s340, %s356
      %p358 = scmp.eq.s32.totalorder %s33, 0
      %p359 = por %p357, %p358
      %s360 = ssub.s32 %s27, %s34
      %p361 = scmp.eq.s32.totalorder %s360, 0
      %s363 = sadd.s32 %s362, 1
      %s364 = scalar_select %p361, %s362, %s363
      %p367 = pneg %p361
      %p368 = scmp.eq.s32.totalorder %s27, 1
      %p369 = por %p367, %p368
      %p370 = scmp.ne.s32.totalorder %s362, %s365
      %p371 = scmp.eq.s32.totalorder %s27, 0
      %p372 = por %p370, %p371
      %p373 = scmp.ne.s32.totalorder %s362, %s365
      %p374 = scmp.eq.s32.totalorder %s32, 1
      %p375 = por %p373, %p374
      %p376 = scmp.ne.s32.totalorder %s365, %s366
      %p377 = scmp.eq.s32.totalorder %s32, 0
      %p378 = por %p376, %p377
      %p379 = scmp.ne.s32.totalorder %s365, %s366
      %p380 = scmp.eq.s32.totalorder %s33, 1
      %p381 = por %p379, %p380
      %p383 = scmp.ne.s32.totalorder %s366, %s382
      %p384 = scmp.eq.s32.totalorder %s33, 0
      %p385 = por %p383, %p384
      %p386 = scmp.le.s32.totalorder 1, %s27
      %p387 = scmp.lt.s32.totalorder %s27, 3
      %p388 = pnand %p386, %p387
      %p389 = pneg %p388
      // Predicated region
      $region9: #{tpu_custom_call.1} parent=5 // pred_check
        _
      $region10: #{tpu_custom_call.1} parent=5 // pred_check_branch
        %391 = sbr.rel (%p388) target = $region12
      $region11: #{tpu_custom_call.1} parent=5 // pred_region
        %s392 = ssub.s32 %s27, 1
        // Predicated region
        $region13: #{tpu_custom_call.1} parent=11 // pred_check
          %p393 = pneg %p74
        $region14: #{tpu_custom_call.1} parent=11 // pred_check_branch
          %395 = sbr.rel (%p393) target = $region16
        $region15: #{tpu_custom_call.1} parent=11 // pred_region
          %s397 = ssub.s32 64, 64
          %398 = vsyncadd [#allocation7], %s397
          %s400 = sshll.u32 [#allocation6], 4
          %s401 = int_to_ptr.vmem [resolvable:$true] %s400
          %403 = dma.hbm_to_vmem [thread:$0]  %s1, 64, %s401, [#allocation7]
        $region16: #{tpu_custom_call.1} parent=11 // pred_fallthru
          _
        // Predicated region
        $region17: #{tpu_custom_call.1} parent=11 // pred_check
          %p404 = pneg %p95
        $region18: #{tpu_custom_call.1} parent=11 // pred_check_branch
          %406 = sbr.rel (%p404) target = $region20
        $region19: #{tpu_custom_call.1} parent=11 // pred_region
          %s408 = ssub.s32 64, 64
          %409 = vsyncadd [#allocation7], %s408
          %s411 = sshll.u32 [#allocation8], 4
          %s412 = int_to_ptr.vmem [resolvable:$true] %s411
          %414 = dma.hbm_to_vmem [thread:$0]  %s2, 64, %s412, [#allocation7]
        $region20: #{tpu_custom_call.1} parent=11 // pred_fallthru
          _
        // Predicated region
        $region21: #{tpu_custom_call.1} parent=11 // pred_check
          %p415 = pneg %p116
        $region22: #{tpu_custom_call.1} parent=11 // pred_check_branch
          %417 = sbr.rel (%p415) target = $region24
        $region23: #{tpu_custom_call.1} parent=11 // pred_region
          %s419 = ssub.s32 128, 128
          %420 = vsyncadd [#allocation10], %s419
          %s421 = sshll.u32 [#allocation9], 4
          %s422 = int_to_ptr.vmem [resolvable:$true] %s421
          %427 = dma.hbm_to_vmem [thread:$0]  %s3, 128, %s422, [#allocation10], 64, 64, 4
        $region24: #{tpu_custom_call.1} parent=11 // pred_fallthru
          _
        // Predicated region
        $region25: #{tpu_custom_call.1} parent=11 // pred_check
          %p428 = pneg %p137
        $region26: #{tpu_custom_call.1} parent=11 // pred_check_branch
          %430 = sbr.rel (%p428) target = $region28
        $region27: #{tpu_custom_call.1} parent=11 // pred_region
          _
        $region28: #{tpu_custom_call.1} parent=11 // pred_fallthru
          _
        // Predicated region
        $region29: #{tpu_custom_call.1} parent=11 // pred_check
          %p431 = pneg %p158
        $region30: #{tpu_custom_call.1} parent=11 // pred_check_branch
          %433 = sbr.rel (%p431) target = $region32
        $region31: #{tpu_custom_call.1} parent=11 // pred_region
          _
        $region32: #{tpu_custom_call.1} parent=11 // pred_fallthru
          _
        // Predicated region
        $region33: #{tpu_custom_call.1} parent=11 // pred_check
          %p434 = pneg %p179
        $region34: #{tpu_custom_call.1} parent=11 // pred_check_branch
          %436 = sbr.rel (%p434) target = $region36
        $region35: #{tpu_custom_call.1} parent=11 // pred_region
          _
        $region36: #{tpu_custom_call.1} parent=11 // pred_fallthru
          _
        // Predicated region
        $region37: #{tpu_custom_call.1} parent=11 // pred_check
          %p437 = pneg %p200
        $region38: #{tpu_custom_call.1} parent=11 // pred_check_branch
          %439 = sbr.rel (%p437) target = $region40
        $region39: #{tpu_custom_call.1} parent=11 // pred_region
          _
        $region40: #{tpu_custom_call.1} parent=11 // pred_fallthru
          _
        // Predicated region
        $region41: #{tpu_custom_call.1} parent=11 // pred_check
          %p440 = pneg %p221
        $region42: #{tpu_custom_call.1} parent=11 // pred_check_branch
          %442 = sbr.rel (%p440) target = $region44
        $region43: #{tpu_custom_call.1} parent=11 // pred_region
          _
        $region44: #{tpu_custom_call.1} parent=11 // pred_fallthru
          _
        // Predicated region
        $region45: #{tpu_custom_call.1} parent=11 // pred_check
          %p443 = pneg %p242
        $region46: #{tpu_custom_call.1} parent=11 // pred_check_branch
          %445 = sbr.rel (%p443) target = $region48
        $region47: #{tpu_custom_call.1} parent=11 // pred_region
          _
        $region48: #{tpu_custom_call.1} parent=11 // pred_fallthru
          _
        // Predicated region
        $region49: #{tpu_custom_call.1} parent=11 // pred_check
          %p446 = pneg %p263
        $region50: #{tpu_custom_call.1} parent=11 // pred_check_branch
          %448 = sbr.rel (%p446) target = $region52
        $region51: #{tpu_custom_call.1} parent=11 // pred_region
          %s450 = ssub.s32 160, 160
          %451 = vsyncadd [#allocation10], %s450
          %s453 = sshll.u32 [#allocation11], 4
          %s454 = int_to_ptr.vmem [resolvable:$true] %s453
          %456 = dma.hbm_to_vmem [thread:$0]  %s10, 160, %s454, [#allocation10]
        $region52: #{tpu_custom_call.1} parent=11 // pred_fallthru
          _
        // Predicated region
        $region53: #{tpu_custom_call.1} parent=11 // pred_check
          %p457 = pneg %p284
        $region54: #{tpu_custom_call.1} parent=11 // pred_check_branch
          %459 = sbr.rel (%p457) target = $region56
        $region55: #{tpu_custom_call.1} parent=11 // pred_region
          _
        $region56: #{tpu_custom_call.1} parent=11 // pred_fallthru
          _
        // Predicated region
        $region57: #{tpu_custom_call.1} parent=11 // pred_check
          %p460 = pneg %p305
        $region58: #{tpu_custom_call.1} parent=11 // pred_check_branch
          %462 = sbr.rel (%p460) target = $region60
        $region59: #{tpu_custom_call.1} parent=11 // pred_region
          _
        $region60: #{tpu_custom_call.1} parent=11 // pred_fallthru
          _
        // Predicated region
        $region61: #{tpu_custom_call.1} parent=11 // pred_check
          %p463 = pneg %p326
        $region62: #{tpu_custom_call.1} parent=11 // pred_check_branch
          %465 = sbr.rel (%p463) target = $region64
        $region63: #{tpu_custom_call.1} parent=11 // pred_region
          _
        $region64: #{tpu_custom_call.1} parent=11 // pred_fallthru
          _
      $region12: #{tpu_custom_call.1} parent=5 // pred_fallthru
        _
      %p466 = scmp.lt.s32.totalorder %s27, 2
      // Predicated region
      $region65: #{tpu_custom_call.1} parent=5 // pred_check
        %p467 = pneg %p466
      $region66: #{tpu_custom_call.1} parent=5 // pred_check_branch
        %469 = sbr.rel (%p467) target = $region68
      $region67: #{tpu_custom_call.1} parent=5 // pred_region
        // Predicated region
        $region69: #{tpu_custom_call.1} parent=67 // pred_check
          %p470 = pneg %p47
        $region70: #{tpu_custom_call.1} parent=67 // pred_check_branch
          %472 = sbr.rel (%p470) target = $region72
        $region71: #{tpu_custom_call.1} parent=67 // pred_region
          %s473 = sand.u32 %s37, 1
          %s474 = scalar_lea.sflag [#allocation5], %s473
          %s475 = sand.u32 %s37, 1
          %s476 = smul.addr %s475, 72
          %s477 = scalar_lea.vmem [#allocation4], %s476
          %s479 = ssub.s32 1152, 1152
          %480 = vsyncadd %s474, %s479
          %s481 = smul.addr %s27, 18
          %s482 = smul.addr %s481, 64
          %s483 = scalar_lea.hbm %s0, %s482
          %s485 = sshll.u32 %s477, 4
          %s486 = int_to_ptr.vmem [resolvable:$true] %s485
          %488 = dma.hbm_to_vmem [thread:$0]  %s483, 1152, %s486, %s474
        $region72: #{tpu_custom_call.1} parent=67 // pred_fallthru
          _
      $region68: #{tpu_custom_call.1} parent=5 // pred_fallthru
        _
      %p489 = scmp.le.s32.totalorder 1, %s27
      %p490 = scmp.lt.s32.totalorder %s27, 3
      %p491 = pnand %p489, %p490
      %p492 = pneg %p491
      // Predicated region
      $region73: #{tpu_custom_call.1} parent=5 // pred_check
        _
      $region74: #{tpu_custom_call.1} parent=5 // pred_check_branch
        %494 = sbr.rel (%p491) target = $region76
      $region75: #{tpu_custom_call.1} parent=5 // pred_region
        %s495 = ssub.s32 %s27, 1
        %s496 = sand.u32 %s40, 1
        %s497 = scalar_lea.sflag [#allocation5], %s496
        %s498 = sand.u32 %s40, 1
        %s499 = smul.addr %s498, 72
        %s500 = scalar_lea.vmem [#allocation4], %s499
        // Predicated region
        $region77: #{tpu_custom_call.1} parent=75 // pred_check
          %p501 = pneg %p53
        $region78: #{tpu_custom_call.1} parent=75 // pred_check_branch
          %503 = sbr.rel (%p501) target = $region80
        $region79: #{tpu_custom_call.1} parent=75 // pred_region
          %504 = dma.done %s497, 1152
        $region80: #{tpu_custom_call.1} parent=75 // pred_fallthru
          _
        // Predicated region
        $region81: #{tpu_custom_call.1} parent=75 // pred_check
          %p505 = pneg %p74
        $region82: #{tpu_custom_call.1} parent=75 // pred_check_branch
          %507 = sbr.rel (%p505) target = $region84
        $region83: #{tpu_custom_call.1} parent=75 // pred_region
          %508 = dma.done [#allocation7], 64
        $region84: #{tpu_custom_call.1} parent=75 // pred_fallthru
          _
        // Predicated region
        $region85: #{tpu_custom_call.1} parent=75 // pred_check
          %p509 = pneg %p95
        $region86: #{tpu_custom_call.1} parent=75 // pred_check_branch
          %511 = sbr.rel (%p509) target = $region88
        $region87: #{tpu_custom_call.1} parent=75 // pred_region
          %512 = dma.done [#allocation7], 64
        $region88: #{tpu_custom_call.1} parent=75 // pred_fallthru
          _
        // Predicated region
        $region89: #{tpu_custom_call.1} parent=75 // pred_check
          %p513 = pneg %p116
        $region90: #{tpu_custom_call.1} parent=75 // pred_check_branch
          %515 = sbr.rel (%p513) target = $region92
        $region91: #{tpu_custom_call.1} parent=75 // pred_region
          %516 = dma.done [#allocation10], 128
        $region92: #{tpu_custom_call.1} parent=75 // pred_fallthru
          _
        // Predicated region
        $region93: #{tpu_custom_call.1} parent=75 // pred_check
          %p517 = pneg %p263
        $region94: #{tpu_custom_call.1} parent=75 // pred_check_branch
          %519 = sbr.rel (%p517) target = $region96
        $region95: #{tpu_custom_call.1} parent=75 // pred_region
          %520 = dma.done [#allocation10], 160
        $region96: #{tpu_custom_call.1} parent=75 // pred_fallthru
          _
        %s521 = sand.u32 %s40, 1
        %s522 = scalar_lea.sflag [#allocation5], %s521
        %s523 = sand.u32 %s40, 1
        %s524 = smul.addr %s523, 72
        %s525 = scalar_lea.vmem [#allocation4], %s524
        %p526 = pneg %p53
        %p527 = pneg %p50
        %p528 = pneg %p74
        %p529 = pneg %p71
        %p530 = pneg %p95
        %p531 = pneg %p92
        %p532 = pneg %p116
        %p533 = pneg %p113
        %p534 = pneg %p137
        %p535 = pneg %p134
        %p536 = pneg %p158
        %p537 = pneg %p155
        %p538 = pneg %p179
        %p539 = pneg %p176
        %p540 = pneg %p200
        %p541 = pneg %p197
        %p542 = pneg %p221
        %p543 = pneg %p218
        %p544 = pneg %p242
        %p545 = pneg %p239
        %p546 = pneg %p263
        %p547 = pneg %p260
        %p548 = pneg %p284
        %p549 = pneg %p281
        %p550 = pneg %p305
        %p551 = pneg %p302
        %p552 = pneg %p326
        %p553 = pneg %p323
        %p554 = pneg %p352
        %p555 = pneg %p349
        %p556 = scmp.lt.s32.totalorder %s32, 1
        %s557 = scalar_select %p556, %s32, 1
        %s558 = smul.addr %s557, 2
        %s559 = smul.addr %s558, 8
        %s560 = scalar_lea.vmem %s14, %s559
        %p561 = pneg %p378
        %p562 = pneg %p375
        %p563 = scmp.lt.s32.totalorder %s32, 1
        %s564 = scalar_select %p563, %s32, 1
        %s565 = smul.addr %s564, 2
        %s566 = smul.addr %s565, 8
        %s567 = scalar_lea.vmem %s15, %s566
        %p568 = scmp.lt.s32.totalorder %s32, 1
        %s569 = scalar_select %p568, %s32, 1
        %s570 = smul.addr %s569, 2
        %s571 = smul.addr %s570, 8
        %s572 = scalar_lea.vmem %s14, %s571
        %p573 = scmp.lt.s32.totalorder %s32, 1
        %s574 = scalar_select %p573, %s32, 1
        %s575 = smul.addr %s574, 2
        %s576 = smul.addr %s575, 8
        %s577 = scalar_lea.vmem %s15, %s576
        %v579 = vld [vmem:[%s500] sm:$0xff]
        %v580 = vld [vmem:[%s500 + $0x8] sm:$0xff]
        %v581 = vld [vmem:[%s500 + $0x10] sm:$0xff]
        %v582 = vld [vmem:[%s500 + $0x18] sm:$0xff]
        %v583 = vld [vmem:[%s500 + $0x20] sm:$0xff]
        %v584 = vld [vmem:[%s500 + $0x28] sm:$0xff]
        %v585 = vld [vmem:[%s500 + $0x30] sm:$0xff]
        %v586 = vld [vmem:[%s500 + $0x38] sm:$0xff]
        %v587 = vld [vmem:[%s500 + $0x40] sm:$0xff]
        %v597 = vunpack.c.l.b16 %v579
        %v598 = vunpack.c.h.b16 %v579
        %v599 = vunpack.c.l.b16 %v580
        %v600 = vunpack.c.h.b16 %v580
        %v601 = vunpack.c.l.b16 %v581
        %v602 = vunpack.c.h.b16 %v581
        %v603 = vunpack.c.l.b16 %v582
        %v604 = vunpack.c.h.b16 %v582
        %v605 = vunpack.c.l.b16 %v583
        %v606 = vunpack.c.h.b16 %v583
        %v607 = vunpack.c.l.b16 %v584
        %v608 = vunpack.c.h.b16 %v584
        %v609 = vunpack.c.l.b16 %v585
        %v610 = vunpack.c.h.b16 %v585
        %v611 = vunpack.c.l.b16 %v586
        %v612 = vunpack.c.h.b16 %v586
        %v613 = vunpack.c.l.b16 %v587
        %v614 = vpack.c.b16 %v597, %v597
        %v615 = vpack.c.b16 %v598, %v598
        %v616 = vpack.c.b16 %v599, %v599
        %v617 = vpack.c.b16 %v600, %v600
        %v618 = vpack.c.b16 %v601, %v601
        %v619 = vpack.c.b16 %v602, %v602
        %v620 = vpack.c.b16 %v603, %v603
        %v621 = vpack.c.b16 %v604, %v604
        %v622 = vpack.c.b16 %v605, %v605
        %v623 = vpack.c.b16 %v606, %v606
        %v624 = vpack.c.b16 %v607, %v607
        %v625 = vpack.c.b16 %v608, %v608
        %v626 = vpack.c.b16 %v609, %v609
        %v627 = vpack.c.b16 %v610, %v610
        %v628 = vpack.c.b16 %v611, %v611
        %v629 = vpack.c.b16 %v612, %v612
        %v630 = vpack.c.b16 %v613, %v613
        %631 = vrot.lane.b32.xlu0 %v614, 1
        %v632 = vpop.permute.xlu0 %631
        %633 = vrot.lane.b32.xlu0 %v615, 1
        %v634 = vpop.permute.xlu0 %633
        %635 = vrot.lane.b32.xlu0 %v616, 1
        %v636 = vpop.permute.xlu0 %635
        %637 = vrot.lane.b32.xlu0 %v617, 1
        %v638 = vpop.permute.xlu0 %637
        %639 = vrot.lane.b32.xlu0 %v618, 1
        %v640 = vpop.permute.xlu0 %639
        %641 = vrot.lane.b32.xlu0 %v619, 1
        %v642 = vpop.permute.xlu0 %641
        %643 = vrot.lane.b32.xlu0 %v620, 1
        %v644 = vpop.permute.xlu0 %643
        %645 = vrot.lane.b32.xlu0 %v621, 1
        %v646 = vpop.permute.xlu0 %645
        %647 = vrot.lane.b32.xlu0 %v622, 1
        %v648 = vpop.permute.xlu0 %647
        %649 = vrot.lane.b32.xlu0 %v623, 1
        %v650 = vpop.permute.xlu0 %649
        %651 = vrot.lane.b32.xlu0 %v624, 1
        %v652 = vpop.permute.xlu0 %651
        %653 = vrot.lane.b32.xlu0 %v625, 1
        %v654 = vpop.permute.xlu0 %653
        %655 = vrot.lane.b32.xlu0 %v626, 1
        %v656 = vpop.permute.xlu0 %655
        %657 = vrot.lane.b32.xlu0 %v627, 1
        %v658 = vpop.permute.xlu0 %657
        %659 = vrot.lane.b32.xlu0 %v628, 1
        %v660 = vpop.permute.xlu0 %659
        %661 = vrot.lane.b32.xlu0 %v629, 1
        %v662 = vpop.permute.xlu0 %661
        %663 = vrot.lane.b32.xlu0 %v630, 1
        %v664 = vpop.permute.xlu0 %663
        %vm665 = vcmask 7168
        %v666 = vsel %vm665, %v632, %v634
        %v667 = vsel %vm665, %v634, %v636
        %v668 = vsel %vm665, %v636, %v638
        %v669 = vsel %vm665, %v638, %v640
        %v670 = vsel %vm665, %v640, %v642
        %v671 = vsel %vm665, %v642, %v644
        %v672 = vsel %vm665, %v644, %v646
        %v673 = vsel %vm665, %v646, %v648
        %v674 = vsel %vm665, %v648, %v650
        %v675 = vsel %vm665, %v650, %v652
        %v676 = vsel %vm665, %v652, %v654
        %v677 = vsel %vm665, %v654, %v656
        %v678 = vsel %vm665, %v656, %v658
        %v679 = vsel %vm665, %v658, %v660
        %v680 = vsel %vm665, %v660, %v662
        %v681 = vsel %vm665, %v662, %v664
        %vm699 = vcmask 1043464
        %700 = vst.msk [vmem:[#allocation2 + $0x8] sm:$0xf] %vm699, %v632
        %701 = vst [vmem:[#allocation2 + $0x10] sm:$0xf] %v666
        %702 = vst [vmem:[#allocation2 + $0x18] sm:$0xf] %v667
        %703 = vst [vmem:[#allocation2 + $0x20] sm:$0xf] %v668
        %704 = vst [vmem:[#allocation2 + $0x28] sm:$0xf] %v669
        %705 = vst [vmem:[#allocation2 + $0x30] sm:$0xf] %v670
        %706 = vst [vmem:[#allocation2 + $0x38] sm:$0xf] %v671
        %707 = vst [vmem:[#allocation2 + $0x40] sm:$0xf] %v672
        %708 = vst [vmem:[#allocation2 + $0x48] sm:$0xf] %v673
        %709 = vst [vmem:[#allocation2 + $0x50] sm:$0xf] %v674
        %710 = vst [vmem:[#allocation2 + $0x58] sm:$0xf] %v675
        %711 = vst [vmem:[#allocation2 + $0x60] sm:$0xf] %v676
        %712 = vst [vmem:[#allocation2 + $0x68] sm:$0xf] %v677
        %713 = vst [vmem:[#allocation2 + $0x70] sm:$0xf] %v678
        %714 = vst [vmem:[#allocation2 + $0x78] sm:$0xf] %v679
        %715 = vst [vmem:[#allocation2 + $0x80] sm:$0xf] %v680
        %716 = vst [vmem:[#allocation2 + $0x88] sm:$0xf] %v681
        %717 = vst [vmem:[#allocation2] sm:$0xf] 0
        %vm718 = vcmask 3072
        %719 = vst.msk [vmem:[#allocation2 + $0x8] sm:$0xf] %vm718, 0
        %737 = vst [vmem:[#allocation2 + $0x8] sm:$0xf0] %v614
        %738 = vst [vmem:[#allocation2 + $0x10] sm:$0xf0] %v615
        %739 = vst [vmem:[#allocation2 + $0x18] sm:$0xf0] %v616
        %740 = vst [vmem:[#allocation2 + $0x20] sm:$0xf0] %v617
        %741 = vst [vmem:[#allocation2 + $0x28] sm:$0xf0] %v618
        %742 = vst [vmem:[#allocation2 + $0x30] sm:$0xf0] %v619
        %743 = vst [vmem:[#allocation2 + $0x38] sm:$0xf0] %v620
        %744 = vst [vmem:[#allocation2 + $0x40] sm:$0xf0] %v621
        %745 = vst [vmem:[#allocation2 + $0x48] sm:$0xf0] %v622
        %746 = vst [vmem:[#allocation2 + $0x50] sm:$0xf0] %v623
        %747 = vst [vmem:[#allocation2 + $0x58] sm:$0xf0] %v624
        %748 = vst [vmem:[#allocation2 + $0x60] sm:$0xf0] %v625
        %749 = vst [vmem:[#allocation2 + $0x68] sm:$0xf0] %v626
        %750 = vst [vmem:[#allocation2 + $0x70] sm:$0xf0] %v627
        %751 = vst [vmem:[#allocation2 + $0x78] sm:$0xf0] %v628
        %752 = vst [vmem:[#allocation2 + $0x80] sm:$0xf0] %v629
        %753 = vst [vmem:[#allocation2 + $0x88] sm:$0xf0] %v630
        %754 = vst [vmem:[#allocation2] sm:$0xf0] 0
        %v755 = vunpack.c.h.b16 %v587
        %v756 = vpack.c.b16 %v755, %v755
        %757 = vrot.lane.b32.xlu0 %v614, 127
        %v758 = vpop.permute.xlu0 %757
        %759 = vrot.lane.b32.xlu0 %v615, 127
        %v760 = vpop.permute.xlu0 %759
        %761 = vrot.lane.b32.xlu0 %v616, 127
        %v762 = vpop.permute.xlu0 %761
        %763 = vrot.lane.b32.xlu0 %v617, 127
        %v764 = vpop.permute.xlu0 %763
        %765 = vrot.lane.b32.xlu0 %v618, 127
        %v766 = vpop.permute.xlu0 %765
        %767 = vrot.lane.b32.xlu0 %v619, 127
        %v768 = vpop.permute.xlu0 %767
        %769 = vrot.lane.b32.xlu0 %v620, 127
        %v770 = vpop.permute.xlu0 %769
        %771 = vrot.lane.b32.xlu0 %v621, 127
        %v772 = vpop.permute.xlu0 %771
        %773 = vrot.lane.b32.xlu0 %v622, 127
        %v774 = vpop.permute.xlu0 %773
        %775 = vrot.lane.b32.xlu0 %v623, 127
        %v776 = vpop.permute.xlu0 %775
        %777 = vrot.lane.b32.xlu0 %v624, 127
        %v778 = vpop.permute.xlu0 %777
        %779 = vrot.lane.b32.xlu0 %v625, 127
        %v780 = vpop.permute.xlu0 %779
        %781 = vrot.lane.b32.xlu0 %v626, 127
        %v782 = vpop.permute.xlu0 %781
        %783 = vrot.lane.b32.xlu0 %v627, 127
        %v784 = vpop.permute.xlu0 %783
        %785 = vrot.lane.b32.xlu0 %v628, 127
        %v786 = vpop.permute.xlu0 %785
        %787 = vrot.lane.b32.xlu0 %v629, 127
        %v788 = vpop.permute.xlu0 %787
        %789 = vrot.lane.b32.xlu0 %v630, 127
        %v790 = vpop.permute.xlu0 %789
        %791 = vrot.lane.b32.xlu0 %v756, 127
        %v792 = vpop.permute.xlu0 %791
        %vm793 = vcmask 1039360
        %v794 = vsel %vm793, %v758, %v760
        %v795 = vsel %vm793, %v760, %v762
        %v796 = vsel %vm793, %v762, %v764
        %v797 = vsel %vm793, %v764, %v766
        %v798 = vsel %vm793, %v766, %v768
        %v799 = vsel %vm793, %v768, %v770
        %v800 = vsel %vm793, %v770, %v772
        %v801 = vsel %vm793, %v772, %v774
        %v802 = vsel %vm793, %v774, %v776
        %v803 = vsel %vm793, %v776, %v778
        %v804 = vsel %vm793, %v778, %v780
        %v805 = vsel %vm793, %v780, %v782
        %v806 = vsel %vm793, %v782, %v784
        %v807 = vsel %vm793, %v784, %v786
        %v808 = vsel %vm793, %v786, %v788
        %v809 = vsel %vm793, %v788, %v790
        %v810 = vsel %vm793, %v790, %v792
        %vm829 = vcmask 1044472
        %830 = vst.msk [vmem:[#allocation2 + $0x90] sm:$0xf] %vm829, %v758
        %831 = vst [vmem:[#allocation2 + $0x98] sm:$0xf] %v794
        %832 = vst [vmem:[#allocation2 + $0xa0] sm:$0xf] %v795
        %833 = vst [vmem:[#allocation2 + $0xa8] sm:$0xf] %v796
        %834 = vst [vmem:[#allocation2 + $0xb0] sm:$0xf] %v797
        %835 = vst [vmem:[#allocation2 + $0xb8] sm:$0xf] %v798
        %836 = vst [vmem:[#allocation2 + $0xc0] sm:$0xf] %v799
        %837 = vst [vmem:[#allocation2 + $0xc8] sm:$0xf] %v800
        %838 = vst [vmem:[#allocation2 + $0xd0] sm:$0xf] %v801
        %839 = vst [vmem:[#allocation2 + $0xd8] sm:$0xf] %v802
        %840 = vst [vmem:[#allocation2 + $0xe0] sm:$0xf] %v803
        %841 = vst [vmem:[#allocation2 + $0xe8] sm:$0xf] %v804
        %842 = vst [vmem:[#allocation2 + $0xf0] sm:$0xf] %v805
        %843 = vst [vmem:[#allocation2 + $0xf8] sm:$0xf] %v806
        %844 = vst [vmem:[#allocation2 + $0x100] sm:$0xf] %v807
        %845 = vst [vmem:[#allocation2 + $0x108] sm:$0xf] %v808
        %846 = vst [vmem:[#allocation2 + $0x110] sm:$0xf] %v809
        %847 = vst [vmem:[#allocation2 + $0x118] sm:$0xf] %v810
        %vm848 = vcmask 1035264
        %849 = vst.msk [vmem:[#allocation2 + $0x90] sm:$0xf] %vm848, 0
        %850 = vrot.lane.b32.xlu0 %v756, 1
        %v851 = vpop.permute.xlu0 %850
        %v852 = vsel %vm665, %v664, %v851
        %vm854 = vcmask 1047564
        %855 = vst.msk [vmem:[#allocation2 + $0x90] sm:$0xf0] %vm854, %v632
        %856 = vst [vmem:[#allocation2 + $0x98] sm:$0xf0] %v666
        %857 = vst [vmem:[#allocation2 + $0xa0] sm:$0xf0] %v667
        %858 = vst [vmem:[#allocation2 + $0xa8] sm:$0xf0] %v668
        %859 = vst [vmem:[#allocation2 + $0xb0] sm:$0xf0] %v669
        %860 = vst [vmem:[#allocation2 + $0xb8] sm:$0xf0] %v670
        %861 = vst [vmem:[#allocation2 + $0xc0] sm:$0xf0] %v671
        %862 = vst [vmem:[#allocation2 + $0xc8] sm:$0xf0] %v672
        %863 = vst [vmem:[#allocation2 + $0xd0] sm:$0xf0] %v673
        %864 = vst [vmem:[#allocation2 + $0xd8] sm:$0xf0] %v674
        %865 = vst [vmem:[#allocation2 + $0xe0] sm:$0xf0] %v675
        %866 = vst [vmem:[#allocation2 + $0xe8] sm:$0xf0] %v676
        %867 = vst [vmem:[#allocation2 + $0xf0] sm:$0xf0] %v677
        %868 = vst [vmem:[#allocation2 + $0xf8] sm:$0xf0] %v678
        %869 = vst [vmem:[#allocation2 + $0x100] sm:$0xf0] %v679
        %870 = vst [vmem:[#allocation2 + $0x108] sm:$0xf0] %v680
        %871 = vst [vmem:[#allocation2 + $0x110] sm:$0xf0] %v681
        %872 = vst [vmem:[#allocation2 + $0x118] sm:$0xf0] %v852
        %vm873 = vcmask 7172
        %874 = vst.msk [vmem:[#allocation2 + $0x90] sm:$0xf0] %vm873, 0
        %876 = vst [vmem:[#allocation2 + $0x120] sm:$0xf] %v614
        %877 = vst [vmem:[#allocation2 + $0x128] sm:$0xf] %v615
        %878 = vst [vmem:[#allocation2 + $0x130] sm:$0xf] %v616
        %879 = vst [vmem:[#allocation2 + $0x138] sm:$0xf] %v617
        %880 = vst [vmem:[#allocation2 + $0x140] sm:$0xf] %v618
        %881 = vst [vmem:[#allocation2 + $0x148] sm:$0xf] %v619
        %882 = vst [vmem:[#allocation2 + $0x150] sm:$0xf] %v620
        %883 = vst [vmem:[#allocation2 + $0x158] sm:$0xf] %v621
        %884 = vst [vmem:[#allocation2 + $0x160] sm:$0xf] %v622
        %885 = vst [vmem:[#allocation2 + $0x168] sm:$0xf] %v623
        %886 = vst [vmem:[#allocation2 + $0x170] sm:$0xf] %v624
        %887 = vst [vmem:[#allocation2 + $0x178] sm:$0xf] %v625
        %888 = vst [vmem:[#allocation2 + $0x180] sm:$0xf] %v626
        %889 = vst [vmem:[#allocation2 + $0x188] sm:$0xf] %v627
        %890 = vst [vmem:[#allocation2 + $0x190] sm:$0xf] %v628
        %891 = vst [vmem:[#allocation2 + $0x198] sm:$0xf] %v629
        %892 = vst [vmem:[#allocation2 + $0x1a0] sm:$0xf] %v630
        %893 = vst [vmem:[#allocation2 + $0x1a8] sm:$0xf] %v756
        %895 = vst [vmem:[#allocation2 + $0x120] sm:$0xf0] %v794
        %896 = vst [vmem:[#allocation2 + $0x128] sm:$0xf0] %v795
        %897 = vst [vmem:[#allocation2 + $0x130] sm:$0xf0] %v796
        %898 = vst [vmem:[#allocation2 + $0x138] sm:$0xf0] %v797
        %899 = vst [vmem:[#allocation2 + $0x140] sm:$0xf0] %v798
        %900 = vst [vmem:[#allocation2 + $0x148] sm:$0xf0] %v799
        %901 = vst [vmem:[#allocation2 + $0x150] sm:$0xf0] %v800
        %902 = vst [vmem:[#allocation2 + $0x158] sm:$0xf0] %v801
        %903 = vst [vmem:[#allocation2 + $0x160] sm:$0xf0] %v802
        %904 = vst [vmem:[#allocation2 + $0x168] sm:$0xf0] %v803
        %905 = vst [vmem:[#allocation2 + $0x170] sm:$0xf0] %v804
        %906 = vst [vmem:[#allocation2 + $0x178] sm:$0xf0] %v805
        %907 = vst [vmem:[#allocation2 + $0x180] sm:$0xf0] %v806
        %908 = vst [vmem:[#allocation2 + $0x188] sm:$0xf0] %v807
        %909 = vst [vmem:[#allocation2 + $0x190] sm:$0xf0] %v808
        %910 = vst [vmem:[#allocation2 + $0x198] sm:$0xf0] %v809
        %911 = vst [vmem:[#allocation2 + $0x1a0] sm:$0xf0] %v810
        %vm912 = vcmask 1039364
        %913 = vst.msk [vmem:[#allocation2 + $0x1a8] sm:$0xf0] %vm912, %v792
        %vm914 = vcmask 1048572
        %915 = vst.msk [vmem:[#allocation2 + $0x1a8] sm:$0xf0] %vm914, 0
        %917 = vst [vmem:[#allocation2 + $0x1b0] sm:$0xf] %v666
        %918 = vst [vmem:[#allocation2 + $0x1b8] sm:$0xf] %v667
        %919 = vst [vmem:[#allocation2 + $0x1c0] sm:$0xf] %v668
        %920 = vst [vmem:[#allocation2 + $0x1c8] sm:$0xf] %v669
        %921 = vst [vmem:[#allocation2 + $0x1d0] sm:$0xf] %v670
        %922 = vst [vmem:[#allocation2 + $0x1d8] sm:$0xf] %v671
        %923 = vst [vmem:[#allocation2 + $0x1e0] sm:$0xf] %v672
        %924 = vst [vmem:[#allocation2 + $0x1e8] sm:$0xf] %v673
        %925 = vst [vmem:[#allocation2 + $0x1f0] sm:$0xf] %v674
        %926 = vst [vmem:[#allocation2 + $0x1f8] sm:$0xf] %v675
        %927 = vst [vmem:[#allocation2 + $0x200] sm:$0xf] %v676
        %928 = vst [vmem:[#allocation2 + $0x208] sm:$0xf] %v677
        %929 = vst [vmem:[#allocation2 + $0x210] sm:$0xf] %v678
        %930 = vst [vmem:[#allocation2 + $0x218] sm:$0xf] %v679
        %931 = vst [vmem:[#allocation2 + $0x220] sm:$0xf] %v680
        %932 = vst [vmem:[#allocation2 + $0x228] sm:$0xf] %v681
        %933 = vst [vmem:[#allocation2 + $0x230] sm:$0xf] %v852
        %934 = vst.msk [vmem:[#allocation2 + $0x238] sm:$0xf] %vm718, %v851
        %935 = vst.msk [vmem:[#allocation2 + $0x238] sm:$0xf] %vm699, 0
        %936 = vst [vmem:[#allocation2 + $0x1b0] sm:$0xf0] %v615
        %937 = vst [vmem:[#allocation2 + $0x1b8] sm:$0xf0] %v616
        %938 = vst [vmem:[#allocation2 + $0x1c0] sm:$0xf0] %v617
        %939 = vst [vmem:[#allocation2 + $0x1c8] sm:$0xf0] %v618
        %940 = vst [vmem:[#allocation2 + $0x1d0] sm:$0xf0] %v619
        %941 = vst [vmem:[#allocation2 + $0x1d8] sm:$0xf0] %v620
        %942 = vst [vmem:[#allocation2 + $0x1e0] sm:$0xf0] %v621
        %943 = vst [vmem:[#allocation2 + $0x1e8] sm:$0xf0] %v622
        %944 = vst [vmem:[#allocation2 + $0x1f0] sm:$0xf0] %v623
        %945 = vst [vmem:[#allocation2 + $0x1f8] sm:$0xf0] %v624
        %946 = vst [vmem:[#allocation2 + $0x200] sm:$0xf0] %v625
        %947 = vst [vmem:[#allocation2 + $0x208] sm:$0xf0] %v626
        %948 = vst [vmem:[#allocation2 + $0x210] sm:$0xf0] %v627
        %949 = vst [vmem:[#allocation2 + $0x218] sm:$0xf0] %v628
        %950 = vst [vmem:[#allocation2 + $0x220] sm:$0xf0] %v629
        %951 = vst [vmem:[#allocation2 + $0x228] sm:$0xf0] %v630
        %952 = vst [vmem:[#allocation2 + $0x230] sm:$0xf0] %v756
        %953 = vst [vmem:[#allocation2 + $0x238] sm:$0xf0] 0
        %954 = vst [vmem:[#allocation2 + $0x240] sm:$0xf] %v795
        %955 = vst [vmem:[#allocation2 + $0x248] sm:$0xf] %v796
        %956 = vst [vmem:[#allocation2 + $0x250] sm:$0xf] %v797
        %957 = vst [vmem:[#allocation2 + $0x258] sm:$0xf] %v798
        %958 = vst [vmem:[#allocation2 + $0x260] sm:$0xf] %v799
        %959 = vst [vmem:[#allocation2 + $0x268] sm:$0xf] %v800
        %960 = vst [vmem:[#allocation2 + $0x270] sm:$0xf] %v801
        %961 = vst [vmem:[#allocation2 + $0x278] sm:$0xf] %v802
        %962 = vst [vmem:[#allocation2 + $0x280] sm:$0xf] %v803
        %963 = vst [vmem:[#allocation2 + $0x288] sm:$0xf] %v804
        %964 = vst [vmem:[#allocation2 + $0x290] sm:$0xf] %v805
        %965 = vst [vmem:[#allocation2 + $0x298] sm:$0xf] %v806
        %966 = vst [vmem:[#allocation2 + $0x2a0] sm:$0xf] %v807
        %967 = vst [vmem:[#allocation2 + $0x2a8] sm:$0xf] %v808
        %968 = vst [vmem:[#allocation2 + $0x2b0] sm:$0xf] %v809
        %969 = vst [vmem:[#allocation2 + $0x2b8] sm:$0xf] %v810
        %970 = vst.msk [vmem:[#allocation2 + $0x2c0] sm:$0xf] %vm848, %v792
        %971 = vst.msk [vmem:[#allocation2 + $0x2c0] sm:$0xf] %vm829, 0
        %972 = vst [vmem:[#allocation2 + $0x2c8] sm:$0xf] 0
        %v973 = vld [vmem:[#allocation6] sm:$0xf]
        %v974 = vld [vmem:[#allocation2] sm:$0xff]
        %v975 = vld [vmem:[#allocation2 + $0x8] sm:$0xff]
        %v976 = vld [vmem:[#allocation2 + $0x10] sm:$0xff]
        %v977 = vld [vmem:[#allocation2 + $0x18] sm:$0xff]
        %v978 = vld [vmem:[#allocation2 + $0x20] sm:$0xff]
        %v979 = vld [vmem:[#allocation2 + $0x28] sm:$0xff]
        %v980 = vld [vmem:[#allocation2 + $0x30] sm:$0xff]
        %v981 = vld [vmem:[#allocation2 + $0x38] sm:$0xff]
        %v982 = vld [vmem:[#allocation2 + $0x40] sm:$0xff]
        %v983 = vld [vmem:[#allocation2 + $0x48] sm:$0xff]
        %v984 = vld [vmem:[#allocation2 + $0x50] sm:$0xff]
        %v985 = vld [vmem:[#allocation2 + $0x58] sm:$0xff]
        %v986 = vld [vmem:[#allocation2 + $0x60] sm:$0xff]
        %v987 = vld [vmem:[#allocation2 + $0x68] sm:$0xff]
        %v988 = vld [vmem:[#allocation2 + $0x70] sm:$0xff]
        %v989 = vld [vmem:[#allocation2 + $0x78] sm:$0xff]
        %v990 = vld [vmem:[#allocation2 + $0x80] sm:$0xff]
        %v991 = vld [vmem:[#allocation2 + $0x88] sm:$0xff]
        %v992 = vld [vmem:[#allocation2 + $0x90] sm:$0xff]
        %v993 = vld [vmem:[#allocation2 + $0x98] sm:$0xff]
        %v994 = vld [vmem:[#allocation2 + $0xa0] sm:$0xff]
        %v995 = vld [vmem:[#allocation2 + $0xa8] sm:$0xff]
        %v996 = vld [vmem:[#allocation2 + $0xb0] sm:$0xff]
        %v997 = vld [vmem:[#allocation2 + $0xb8] sm:$0xff]
        %v998 = vld [vmem:[#allocation2 + $0xc0] sm:$0xff]
        %v999 = vld [vmem:[#allocation2 + $0xc8] sm:$0xff]
        %v1000 = vld [vmem:[#allocation2 + $0xd0] sm:$0xff]
        %v1001 = vld [vmem:[#allocation2 + $0xd8] sm:$0xff]
        %v1002 = vld [vmem:[#allocation2 + $0xe0] sm:$0xff]
        %v1003 = vld [vmem:[#allocation2 + $0xe8] sm:$0xff]
        %v1004 = vld [vmem:[#allocation2 + $0xf0] sm:$0xff]
        %v1005 = vld [vmem:[#allocation2 + $0xf8] sm:$0xff]
        %v1006 = vld [vmem:[#allocation2 + $0x100] sm:$0xff]
        %v1007 = vld [vmem:[#allocation2 + $0x108] sm:$0xff]
        %v1008 = vld [vmem:[#allocation2 + $0x110] sm:$0xff]
        %v1009 = vld [vmem:[#allocation2 + $0x118] sm:$0xff]
        %v1010 = vld [vmem:[#allocation2 + $0x120] sm:$0xff]
        %v1011 = vld [vmem:[#allocation2 + $0x128] sm:$0xff]
        %v1012 = vld [vmem:[#allocation2 + $0x130] sm:$0xff]
        %v1013 = vld [vmem:[#allocation2 + $0x138] sm:$0xff]
        %v1014 = vld [vmem:[#allocation2 + $0x140] sm:$0xff]
        %v1015 = vld [vmem:[#allocation2 + $0x148] sm:$0xff]
        %v1016 = vld [vmem:[#allocation2 + $0x150] sm:$0xff]
        %v1017 = vld [vmem:[#allocation2 + $0x158] sm:$0xff]
        %v1018 = vld [vmem:[#allocation2 + $0x160] sm:$0xff]
        %v1019 = vld [vmem:[#allocation2 + $0x168] sm:$0xff]
        %v1020 = vld [vmem:[#allocation2 + $0x170] sm:$0xff]
        %v1021 = vld [vmem:[#allocation2 + $0x178] sm:$0xff]
        %v1022 = vld [vmem:[#allocation2 + $0x180] sm:$0xff]
        %v1023 = vld [vmem:[#allocation2 + $0x188] sm:$0xff]
        %v1024 = vld [vmem:[#allocation2 + $0x190] sm:$0xff]
        %v1025 = vld [vmem:[#allocation2 + $0x198] sm:$0xff]
        %v1026 = vld [vmem:[#allocation2 + $0x1a0] sm:$0xff]
        %v1027 = vld [vmem:[#allocation2 + $0x1a8] sm:$0xff]
        %v1028 = vld [vmem:[#allocation2 + $0x1b0] sm:$0xff]
        %v1029 = vld [vmem:[#allocation2 + $0x1b8] sm:$0xff]
        %v1030 = vld [vmem:[#allocation2 + $0x1c0] sm:$0xff]
        %v1031 = vld [vmem:[#allocation2 + $0x1c8] sm:$0xff]
        %v1032 = vld [vmem:[#allocation2 + $0x1d0] sm:$0xff]
        %v1033 = vld [vmem:[#allocation2 + $0x1d8] sm:$0xff]
        %v1034 = vld [vmem:[#allocation2 + $0x1e0] sm:$0xff]
        %v1035 = vld [vmem:[#allocation2 + $0x1e8] sm:$0xff]
        %v1036 = vld [vmem:[#allocation2 + $0x1f0] sm:$0xff]
        %v1037 = vld [vmem:[#allocation2 + $0x1f8] sm:$0xff]
        %v1038 = vld [vmem:[#allocation2 + $0x200] sm:$0xff]
        %v1039 = vld [vmem:[#allocation2 + $0x208] sm:$0xff]
        %v1040 = vld [vmem:[#allocation2 + $0x210] sm:$0xff]
        %v1041 = vld [vmem:[#allocation2 + $0x218] sm:$0xff]
        %v1042 = vld [vmem:[#allocation2 + $0x220] sm:$0xff]
        %v1043 = vld [vmem:[#allocation2 + $0x228] sm:$0xff]
        %v1044 = vld [vmem:[#allocation2 + $0x230] sm:$0xff]
        %v1045 = vld [vmem:[#allocation2 + $0x238] sm:$0xff]
        %v1046 = vld [vmem:[#allocation2 + $0x240] sm:$0xf]
        %v1047 = vld [vmem:[#allocation2 + $0x248] sm:$0xf]
        %v1048 = vld [vmem:[#allocation2 + $0x250] sm:$0xf]
        %v1049 = vld [vmem:[#allocation2 + $0x258] sm:$0xf]
        %v1050 = vld [vmem:[#allocation2 + $0x260] sm:$0xf]
        %v1051 = vld [vmem:[#allocation2 + $0x268] sm:$0xf]
        %v1052 = vld [vmem:[#allocation2 + $0x270] sm:$0xf]
        %v1053 = vld [vmem:[#allocation2 + $0x278] sm:$0xf]
        %v1054 = vld [vmem:[#allocation2 + $0x280] sm:$0xf]
        %v1055 = vld [vmem:[#allocation2 + $0x288] sm:$0xf]
        %v1056 = vld [vmem:[#allocation2 + $0x290] sm:$0xf]
        %v1057 = vld [vmem:[#allocation2 + $0x298] sm:$0xf]
        %v1058 = vld [vmem:[#allocation2 + $0x2a0] sm:$0xf]
        %v1059 = vld [vmem:[#allocation2 + $0x2a8] sm:$0xf]
        %v1060 = vld [vmem:[#allocation2 + $0x2b0] sm:$0xf]
        %v1061 = vld [vmem:[#allocation2 + $0x2b8] sm:$0xf]
        %v1062 = vld [vmem:[#allocation2 + $0x2c0] sm:$0xf]
        %v1063 = vld [vmem:[#allocation2 + $0x2c8] sm:$0xf]
        %v1064 = vld [vmem:[%s5] sm:$0xff]
        %1066 = vset.pattern.permute.xlu0 0
        %1067 = vperm.xlu0 %1066, %v1064
        %v1068 = vpop.permute.xlu0 %1067
        %vm1070 = vcmask 588800
        %v1072 = vsel %vm1070, %v973, 0
        %vm1074 = vcmask 1043456
        %v1076 = vsel %vm1074, %v1046, 0
        %v1079 = vsel %vm1074, %v1047, 0
        %v1082 = vsel %vm1074, %v1048, 0
        %v1085 = vsel %vm1074, %v1049, 0
        %v1088 = vsel %vm1074, %v1050, 0
        %v1091 = vsel %vm1074, %v1051, 0
        %v1094 = vsel %vm1074, %v1052, 0
        %v1097 = vsel %vm1074, %v1053, 0
        %v1100 = vsel %vm1074, %v1054, 0
        %v1103 = vsel %vm1074, %v1055, 0
        %v1106 = vsel %vm1074, %v1056, 0
        %v1109 = vsel %vm1074, %v1057, 0
        %v1112 = vsel %vm1074, %v1058, 0
        %v1115 = vsel %vm1074, %v1059, 0
        %v1118 = vsel %vm1074, %v1060, 0
        %v1121 = vsel %vm1074, %v1061, 0
        %v1124 = vsel %vm1074, %v1062, 0
        %v1127 = vsel %vm1074, %v1063, 0
        %1129 = vmatprep.subr.bf16.mxu0 %v975
        %1130 = vmatpush1.bf16.msra.mxu0 %v974
        %1131 = vmatprep.subr.bf16.mxu0 %v993
        %1132 = vmatpush1.bf16.msra.mxu0 %v992
        %1133 = vmatprep.subr.bf16.mxu0 %v1011
        %1134 = vmatpush1.bf16.msra.mxu0 %v1010
        %1135 = vmatprep.subr.bf16.mxu0 %v1029
        %1136 = vmatpush1.bf16.msra.mxu0 %v1028
        %1137 = vmatprep.subr.bf16.mxu0 %v1079
        %1138 = vmatpush1.bf16.msra.mxu0 %v1076
        %1139 = vmatprep.subr.bf16.mxu0 0
        %1140 = vmatpush1.bf16.msra.mxu0 0
        %1141 = vmatprep.subr.bf16.mxu0 0
        %1142 = vmatpush1.bf16.msra.mxu0 0
        %1143 = vmatprep.subr.bf16.mxu0 0
        %1144 = vmatpush1.bf16.msra.mxu0 0
        %1145 = vmatprep.subr.bf16.mxu0 0
        %1146 = vmatpush1.bf16.msra.mxu0 0
        %1147 = vmatprep.subr.bf16.mxu0 0
        %1148 = vmatpush1.bf16.msra.mxu0 0
        %1149 = vmatprep.subr.bf16.mxu0 0
        %1150 = vmatpush1.bf16.msra.mxu0 0
        %1151 = vmatprep.subr.bf16.mxu0 0
        %1152 = vmatpush1.bf16.msra.mxu0 0
        %1153 = vmatprep.subr.bf16.mxu0 0
        %1154 = vmatpush1.bf16.msra.mxu0 0
        %1155 = vmatprep.subr.bf16.mxu0 0
        %1156 = vmatpush1.bf16.msra.mxu0 0
        %1157 = vmatprep.subr.bf16.mxu0 0
        %1158 = vmatpush1.bf16.msra.mxu0 0
        %1159 = vmatprep.subr.bf16.mxu0 0
        %1160 = vmatpush1.bf16.msra.mxu0 0
        %1161 = vmatprep.mubr.bf16.mxu0 0
        %1162 = vmatmul.mubr.bf16.gmra.mrb[0].mxu0 %v1072
        %v1163 = vpop.f32.mrb[0].mxu0
        %v1164 = vadd.f32 %v1068, %v1163
        %v1165 = vpop.f32.mrb[0].mxu0
        %v1166 = vadd.f32 %v1068, %v1165
        %v1167 = vpop.f32.mrb[0].mxu0
        %v1168 = vpop.f32.mrb[0].mxu0
        %1169 = vdwg.mxu0
        %1170 = vmatprep.subr.bf16.mxu0 %v977
        %1171 = vmatpush1.bf16.msra.mxu0 %v976
        %1172 = vmatprep.subr.bf16.mxu0 %v995
        %1173 = vmatpush1.bf16.msra.mxu0 %v994
        %1174 = vmatprep.subr.bf16.mxu0 %v1013
        %1175 = vmatpush1.bf16.msra.mxu0 %v1012
        %1176 = vmatprep.subr.bf16.mxu0 %v1031
        %1177 = vmatpush1.bf16.msra.mxu0 %v1030
        %1178 = vmatprep.subr.bf16.mxu0 %v1085
        %1179 = vmatpush1.bf16.msra.mxu0 %v1082
        %1180 = vmatprep.subr.bf16.mxu0 0
        %1181 = vmatpush1.bf16.msra.mxu0 0
        %1182 = vmatprep.subr.bf16.mxu0 0
        %1183 = vmatpush1.bf16.msra.mxu0 0
        %1184 = vmatprep.subr.bf16.mxu0 0
        %1185 = vmatpush1.bf16.msra.mxu0 0
        %1186 = vmatprep.subr.bf16.mxu0 0
        %1187 = vmatpush1.bf16.msra.mxu0 0
        %1188 = vmatprep.subr.bf16.mxu0 0
        %1189 = vmatpush1.bf16.msra.mxu0 0
        %1190 = vmatprep.subr.bf16.mxu0 0
        %1191 = vmatpush1.bf16.msra.mxu0 0
        %1192 = vmatprep.subr.bf16.mxu0 0
        %1193 = vmatpush1.bf16.msra.mxu0 0
        %1194 = vmatprep.subr.bf16.mxu0 0
        %1195 = vmatpush1.bf16.msra.mxu0 0
        %1196 = vmatprep.subr.bf16.mxu0 0
        %1197 = vmatpush1.bf16.msra.mxu0 0
        %1198 = vmatprep.subr.bf16.mxu0 0
        %1199 = vmatpush1.bf16.msra.mxu0 0
        %1200 = vmatprep.subr.bf16.mxu0 0
        %1201 = vmatpush1.bf16.msra.mxu0 0
        %1202 = vmatprep.mubr.bf16.mxu0 0
        %1203 = vmatmul.mubr.bf16.gmra.mrb[0].mxu0 %v1072
        %v1204 = vpop.f32.mrb[0].mxu0
        %v1205 = vadd.f32 %v1068, %v1204
        %v1206 = vpop.f32.mrb[0].mxu0
        %v1207 = vadd.f32 %v1068, %v1206
        %v1208 = vpop.f32.mrb[0].mxu0
        %v1209 = vpop.f32.mrb[0].mxu0
        %1210 = vdwg.mxu0
        %1211 = vmatprep.subr.bf16.mxu0 %v979
        %1212 = vmatpush1.bf16.msra.mxu0 %v978
        %1213 = vmatprep.subr.bf16.mxu0 %v997
        %1214 = vmatpush1.bf16.msra.mxu0 %v996
        %1215 = vmatprep.subr.bf16.mxu0 %v1015
        %1216 = vmatpush1.bf16.msra.mxu0 %v1014
        %1217 = vmatprep.subr.bf16.mxu0 %v1033
        %1218 = vmatpush1.bf16.msra.mxu0 %v1032
        %1219 = vmatprep.subr.bf16.mxu0 %v1091
        %1220 = vmatpush1.bf16.msra.mxu0 %v1088
        %1221 = vmatprep.subr.bf16.mxu0 0
        %1222 = vmatpush1.bf16.msra.mxu0 0
        %1223 = vmatprep.subr.bf16.mxu0 0
        %1224 = vmatpush1.bf16.msra.mxu0 0
        %1225 = vmatprep.subr.bf16.mxu0 0
        %1226 = vmatpush1.bf16.msra.mxu0 0
        %1227 = vmatprep.subr.bf16.mxu0 0
        %1228 = vmatpush1.bf16.msra.mxu0 0
        %1229 = vmatprep.subr.bf16.mxu0 0
        %1230 = vmatpush1.bf16.msra.mxu0 0
        %1231 = vmatprep.subr.bf16.mxu0 0
        %1232 = vmatpush1.bf16.msra.mxu0 0
        %1233 = vmatprep.subr.bf16.mxu0 0
        %1234 = vmatpush1.bf16.msra.mxu0 0
        %1235 = vmatprep.subr.bf16.mxu0 0
        %1236 = vmatpush1.bf16.msra.mxu0 0
        %1237 = vmatprep.subr.bf16.mxu0 0
        %1238 = vmatpush1.bf16.msra.mxu0 0
        %1239 = vmatprep.subr.bf16.mxu0 0
        %1240 = vmatpush1.bf16.msra.mxu0 0
        %1241 = vmatprep.subr.bf16.mxu0 0
        %1242 = vmatpush1.bf16.msra.mxu0 0
        %1243 = vmatprep.mubr.bf16.mxu0 0
        %1244 = vmatmul.mubr.bf16.gmra.mrb[0].mxu0 %v1072
        %v1245 = vpop.f32.mrb[0].mxu0
        %v1246 = vadd.f32 %v1068, %v1245
        %v1247 = vpop.f32.mrb[0].mxu0
        %v1248 = vadd.f32 %v1068, %v1247
        %v1249 = vpop.f32.mrb[0].mxu0
        %v1250 = vpop.f32.mrb[0].mxu0
        %1251 = vdwg.mxu0
        %1252 = vmatprep.subr.bf16.mxu0 %v981
        %1253 = vmatpush1.bf16.msra.mxu0 %v980
        %1254 = vmatprep.subr.bf16.mxu0 %v999
        %1255 = vmatpush1.bf16.msra.mxu0 %v998
        %1256 = vmatprep.subr.bf16.mxu0 %v1017
        %1257 = vmatpush1.bf16.msra.mxu0 %v1016
        %1258 = vmatprep.subr.bf16.mxu0 %v1035
        %1259 = vmatpush1.bf16.msra.mxu0 %v1034
        %1260 = vmatprep.subr.bf16.mxu0 %v1097
        %1261 = vmatpush1.bf16.msra.mxu0 %v1094
        %1262 = vmatprep.subr.bf16.mxu0 0
        %1263 = vmatpush1.bf16.msra.mxu0 0
        %1264 = vmatprep.subr.bf16.mxu0 0
        %1265 = vmatpush1.bf16.msra.mxu0 0
        %1266 = vmatprep.subr.bf16.mxu0 0
        %1267 = vmatpush1.bf16.msra.mxu0 0
        %1268 = vmatprep.subr.bf16.mxu0 0
        %1269 = vmatpush1.bf16.msra.mxu0 0
        %1270 = vmatprep.subr.bf16.mxu0 0
        %1271 = vmatpush1.bf16.msra.mxu0 0
        %1272 = vmatprep.subr.bf16.mxu0 0
        %1273 = vmatpush1.bf16.msra.mxu0 0
        %1274 = vmatprep.subr.bf16.mxu0 0
        %1275 = vmatpush1.bf16.msra.mxu0 0
        %1276 = vmatprep.subr.bf16.mxu0 0
        %1277 = vmatpush1.bf16.msra.mxu0 0
        %1278 = vmatprep.subr.bf16.mxu0 0
        %1279 = vmatpush1.bf16.msra.mxu0 0
        %1280 = vmatprep.subr.bf16.mxu0 0
        %1281 = vmatpush1.bf16.msra.mxu0 0
        %1282 = vmatprep.subr.bf16.mxu0 0
        %1283 = vmatpush1.bf16.msra.mxu0 0
        %1284 = vmatprep.mubr.bf16.mxu0 0
        %1285 = vmatmul.mubr.bf16.gmra.mrb[0].mxu0 %v1072
        %v1286 = vpop.f32.mrb[0].mxu0
        %v1287 = vadd.f32 %v1068, %v1286
        %v1288 = vpop.f32.mrb[0].mxu0
        %v1289 = vadd.f32 %v1068, %v1288
        %v1290 = vpop.f32.mrb[0].mxu0
        %v1291 = vpop.f32.mrb[0].mxu0
        %1292 = vdwg.mxu0
        %1293 = vmatprep.subr.bf16.mxu0 %v983
        %1294 = vmatpush1.bf16.msra.mxu0 %v982
        %1295 = vmatprep.subr.bf16.mxu0 %v1001
        %1296 = vmatpush1.bf16.msra.mxu0 %v1000
        %1297 = vmatprep.subr.bf16.mxu0 %v1019
        %1298 = vmatpush1.bf16.msra.mxu0 %v1018
        %1299 = vmatprep.subr.bf16.mxu0 %v1037
        %1300 = vmatpush1.bf16.msra.mxu0 %v1036
        %1301 = vmatprep.subr.bf16.mxu0 %v1103
        %1302 = vmatpush1.bf16.msra.mxu0 %v1100
        %1303 = vmatprep.subr.bf16.mxu0 0
        %1304 = vmatpush1.bf16.msra.mxu0 0
        %1305 = vmatprep.subr.bf16.mxu0 0
        %1306 = vmatpush1.bf16.msra.mxu0 0
        %1307 = vmatprep.subr.bf16.mxu0 0
        %1308 = vmatpush1.bf16.msra.mxu0 0
        %1309 = vmatprep.subr.bf16.mxu0 0
        %1310 = vmatpush1.bf16.msra.mxu0 0
        %1311 = vmatprep.subr.bf16.mxu0 0
        %1312 = vmatpush1.bf16.msra.mxu0 0
        %1313 = vmatprep.subr.bf16.mxu0 0
        %1314 = vmatpush1.bf16.msra.mxu0 0
        %1315 = vmatprep.subr.bf16.mxu0 0
        %1316 = vmatpush1.bf16.msra.mxu0 0
        %1317 = vmatprep.subr.bf16.mxu0 0
        %1318 = vmatpush1.bf16.msra.mxu0 0
        %1319 = vmatprep.subr.bf16.mxu0 0
        %1320 = vmatpush1.bf16.msra.mxu0 0
        %1321 = vmatprep.subr.bf16.mxu0 0
        %1322 = vmatpush1.bf16.msra.mxu0 0
        %1323 = vmatprep.subr.bf16.mxu0 0
        %1324 = vmatpush1.bf16.msra.mxu0 0
        %1325 = vmatprep.mubr.bf16.mxu0 0
        %1326 = vmatmul.mubr.bf16.gmra.mrb[0].mxu0 %v1072
        %v1327 = vpop.f32.mrb[0].mxu0
        %v1328 = vadd.f32 %v1068, %v1327
        %v1329 = vpop.f32.mrb[0].mxu0
        %v1330 = vadd.f32 %v1068, %v1329
        %v1331 = vpop.f32.mrb[0].mxu0
        %v1332 = vpop.f32.mrb[0].mxu0
        %1333 = vdwg.mxu0
        %1334 = vmatprep.subr.bf16.mxu0 %v985
        %1335 = vmatpush1.bf16.msra.mxu0 %v984
        %1336 = vmatprep.subr.bf16.mxu0 %v1003
        %1337 = vmatpush1.bf16.msra.mxu0 %v1002
        %1338 = vmatprep.subr.bf16.mxu0 %v1021
        %1339 = vmatpush1.bf16.msra.mxu0 %v1020
        %1340 = vmatprep.subr.bf16.mxu0 %v1039
        %1341 = vmatpush1.bf16.msra.mxu0 %v1038
        %1342 = vmatprep.subr.bf16.mxu0 %v1109
        %1343 = vmatpush1.bf16.msra.mxu0 %v1106
        %1344 = vmatprep.subr.bf16.mxu0 0
        %1345 = vmatpush1.bf16.msra.mxu0 0
        %1346 = vmatprep.subr.bf16.mxu0 0
        %1347 = vmatpush1.bf16.msra.mxu0 0
        %1348 = vmatprep.subr.bf16.mxu0 0
        %1349 = vmatpush1.bf16.msra.mxu0 0
        %1350 = vmatprep.subr.bf16.mxu0 0
        %1351 = vmatpush1.bf16.msra.mxu0 0
        %1352 = vmatprep.subr.bf16.mxu0 0
        %1353 = vmatpush1.bf16.msra.mxu0 0
        %1354 = vmatprep.subr.bf16.mxu0 0
        %1355 = vmatpush1.bf16.msra.mxu0 0
        %1356 = vmatprep.subr.bf16.mxu0 0
        %1357 = vmatpush1.bf16.msra.mxu0 0
        %1358 = vmatprep.subr.bf16.mxu0 0
        %1359 = vmatpush1.bf16.msra.mxu0 0
        %1360 = vmatprep.subr.bf16.mxu0 0
        %1361 = vmatpush1.bf16.msra.mxu0 0
        %1362 = vmatprep.subr.bf16.mxu0 0
        %1363 = vmatpush1.bf16.msra.mxu0 0
        %1364 = vmatprep.subr.bf16.mxu0 0
        %1365 = vmatpush1.bf16.msra.mxu0 0
        %1366 = vmatprep.mubr.bf16.mxu0 0
        %1367 = vmatmul.mubr.bf16.gmra.mrb[0].mxu0 %v1072
        %v1368 = vpop.f32.mrb[0].mxu0
        %v1369 = vadd.f32 %v1068, %v1368
        %v1370 = vpop.f32.mrb[0].mxu0
        %v1371 = vadd.f32 %v1068, %v1370
        %v1372 = vpop.f32.mrb[0].mxu0
        %v1373 = vpop.f32.mrb[0].mxu0
        %1374 = vdwg.mxu0
        %1375 = vmatprep.subr.bf16.mxu0 %v987
        %1376 = vmatpush1.bf16.msra.mxu0 %v986
        %1377 = vmatprep.subr.bf16.mxu0 %v1005
        %1378 = vmatpush1.bf16.msra.mxu0 %v1004
        %1379 = vmatprep.subr.bf16.mxu0 %v1023
        %1380 = vmatpush1.bf16.msra.mxu0 %v1022
        %1381 = vmatprep.subr.bf16.mxu0 %v1041
        %1382 = vmatpush1.bf16.msra.mxu0 %v1040
        %1383 = vmatprep.subr.bf16.mxu0 %v1115
        %1384 = vmatpush1.bf16.msra.mxu0 %v1112
        %1385 = vmatprep.subr.bf16.mxu0 0
        %1386 = vmatpush1.bf16.msra.mxu0 0
        %1387 = vmatprep.subr.bf16.mxu0 0
        %1388 = vmatpush1.bf16.msra.mxu0 0
        %1389 = vmatprep.subr.bf16.mxu0 0
        %1390 = vmatpush1.bf16.msra.mxu0 0
        %1391 = vmatprep.subr.bf16.mxu0 0
        %1392 = vmatpush1.bf16.msra.mxu0 0
        %1393 = vmatprep.subr.bf16.mxu0 0
        %1394 = vmatpush1.bf16.msra.mxu0 0
        %1395 = vmatprep.subr.bf16.mxu0 0
        %1396 = vmatpush1.bf16.msra.mxu0 0
        %1397 = vmatprep.subr.bf16.mxu0 0
        %1398 = vmatpush1.bf16.msra.mxu0 0
        %1399 = vmatprep.subr.bf16.mxu0 0
        %1400 = vmatpush1.bf16.msra.mxu0 0
        %1401 = vmatprep.subr.bf16.mxu0 0
        %1402 = vmatpush1.bf16.msra.mxu0 0
        %1403 = vmatprep.subr.bf16.mxu0 0
        %1404 = vmatpush1.bf16.msra.mxu0 0
        %1405 = vmatprep.subr.bf16.mxu0 0
        %1406 = vmatpush1.bf16.msra.mxu0 0
        %1407 = vmatprep.mubr.bf16.mxu0 0
        %1408 = vmatmul.mubr.bf16.gmra.mrb[0].mxu0 %v1072
        %v1409 = vpop.f32.mrb[0].mxu0
        %v1410 = vadd.f32 %v1068, %v1409
        %v1411 = vpop.f32.mrb[0].mxu0
        %v1412 = vadd.f32 %v1068, %v1411
        %v1413 = vpop.f32.mrb[0].mxu0
        %v1414 = vpop.f32.mrb[0].mxu0
        %1415 = vdwg.mxu0
        %1416 = vmatprep.subr.bf16.mxu0 %v989
        %1417 = vmatpush1.bf16.msra.mxu0 %v988
        %1418 = vmatprep.subr.bf16.mxu0 %v1007
        %1419 = vmatpush1.bf16.msra.mxu0 %v1006
        %1420 = vmatprep.subr.bf16.mxu0 %v1025
        %1421 = vmatpush1.bf16.msra.mxu0 %v1024
        %1422 = vmatprep.subr.bf16.mxu0 %v1043
        %1423 = vmatpush1.bf16.msra.mxu0 %v1042
        %1424 = vmatprep.subr.bf16.mxu0 %v1121
        %1425 = vmatpush1.bf16.msra.mxu0 %v1118
        %1426 = vmatprep.subr.bf16.mxu0 0
        %1427 = vmatpush1.bf16.msra.mxu0 0
        %1428 = vmatprep.subr.bf16.mxu0 0
        %1429 = vmatpush1.bf16.msra.mxu0 0
        %1430 = vmatprep.subr.bf16.mxu0 0
        %1431 = vmatpush1.bf16.msra.mxu0 0
        %1432 = vmatprep.subr.bf16.mxu0 0
        %1433 = vmatpush1.bf16.msra.mxu0 0
        %1434 = vmatprep.subr.bf16.mxu0 0
        %1435 = vmatpush1.bf16.msra.mxu0 0
        %1436 = vmatprep.subr.bf16.mxu0 0
        %1437 = vmatpush1.bf16.msra.mxu0 0
        %1438 = vmatprep.subr.bf16.mxu0 0
        %1439 = vmatpush1.bf16.msra.mxu0 0
        %1440 = vmatprep.subr.bf16.mxu0 0
        %1441 = vmatpush1.bf16.msra.mxu0 0
        %1442 = vmatprep.subr.bf16.mxu0 0
        %1443 = vmatpush1.bf16.msra.mxu0 0
        %1444 = vmatprep.subr.bf16.mxu0 0
        %1445 = vmatpush1.bf16.msra.mxu0 0
        %1446 = vmatprep.subr.bf16.mxu0 0
        %1447 = vmatpush1.bf16.msra.mxu0 0
        %1448 = vmatprep.mubr.bf16.mxu0 0
        %1449 = vmatmul.mubr.bf16.gmra.mrb[0].mxu0 %v1072
        %v1450 = vpop.f32.mrb[0].mxu0
        %v1451 = vadd.f32 %v1068, %v1450
        %v1452 = vpop.f32.mrb[0].mxu0
        %v1453 = vadd.f32 %v1068, %v1452
        %v1454 = vpop.f32.mrb[0].mxu0
        %v1455 = vpop.f32.mrb[0].mxu0
        %1456 = vdwg.mxu0
        %1457 = vmatprep.subr.bf16.mxu0 %v991
        %1458 = vmatpush1.bf16.msra.mxu0 %v990
        %1459 = vmatprep.subr.bf16.mxu0 %v1009
        %1460 = vmatpush1.bf16.msra.mxu0 %v1008
        %1461 = vmatprep.subr.bf16.mxu0 %v1027
        %1462 = vmatpush1.bf16.msra.mxu0 %v1026
        %1463 = vmatprep.subr.bf16.mxu0 %v1045
        %1464 = vmatpush1.bf16.msra.mxu0 %v1044
        %1465 = vmatprep.subr.bf16.mxu0 %v1127
        %1466 = vmatpush1.bf16.msra.mxu0 %v1124
        %1467 = vmatprep.subr.bf16.mxu0 0
        %1468 = vmatpush1.bf16.msra.mxu0 0
        %1469 = vmatprep.subr.bf16.mxu0 0
        %1470 = vmatpush1.bf16.msra.mxu0 0
        %1471 = vmatprep.subr.bf16.mxu0 0
        %1472 = vmatpush1.bf16.msra.mxu0 0
        %1473 = vmatprep.subr.bf16.mxu0 0
        %1474 = vmatpush1.bf16.msra.mxu0 0
        %1475 = vmatprep.subr.bf16.mxu0 0
        %1476 = vmatpush1.bf16.msra.mxu0 0
        %1477 = vmatprep.subr.bf16.mxu0 0
        %1478 = vmatpush1.bf16.msra.mxu0 0
        %1479 = vmatprep.subr.bf16.mxu0 0
        %1480 = vmatpush1.bf16.msra.mxu0 0
        %1481 = vmatprep.subr.bf16.mxu0 0
        %1482 = vmatpush1.bf16.msra.mxu0 0
        %1483 = vmatprep.subr.bf16.mxu0 0
        %1484 = vmatpush1.bf16.msra.mxu0 0
        %1485 = vmatprep.subr.bf16.mxu0 0
        %1486 = vmatpush1.bf16.msra.mxu0 0
        %1487 = vmatprep.subr.bf16.mxu0 0
        %1488 = vmatpush1.bf16.msra.mxu0 0
        %1489 = vmatprep.mubr.bf16.mxu0 0
        %1490 = vmatmul.mubr.bf16.gmra.mrb[0].mxu0 %v1072
        %v1491 = vpop.f32.mrb[0].mxu0
        %v1492 = vadd.f32 %v1068, %v1491
        %v1493 = vpop.f32.mrb[0].mxu0
        %v1494 = vadd.f32 %v1068, %v1493
        %v1495 = vpop.f32.mrb[0].mxu0
        %v1496 = vpop.f32.mrb[0].mxu0
        %1497 = vdwg.mxu0
        %v1498 = vmax.f32 %v1164, 0.0
        %v1499 = vmax.f32 %v1166, 0.0
        %v1500 = vmax.f32 %v1205, 0.0
        %v1501 = vmax.f32 %v1207, 0.0
        %v1502 = vmax.f32 %v1246, 0.0
        %v1503 = vmax.f32 %v1248, 0.0
        %v1504 = vmax.f32 %v1287, 0.0
        %v1505 = vmax.f32 %v1289, 0.0
        %v1506 = vmax.f32 %v1328, 0.0
        %v1507 = vmax.f32 %v1330, 0.0
        %v1508 = vmax.f32 %v1369, 0.0
        %v1509 = vmax.f32 %v1371, 0.0
        %v1510 = vmax.f32 %v1410, 0.0
        %v1511 = vmax.f32 %v1412, 0.0
        %v1512 = vmax.f32 %v1451, 0.0
        %v1513 = vmax.f32 %v1453, 0.0
        %v1514 = vmax.f32 %v1492, 0.0
        %v1515 = vmax.f32 %v1494, 0.0
        %v1516 = vld [vmem:[%s9] sm:$0xff]
        %v1517 = vld [vmem:[%s9 + $0x8] sm:$0xff]
        %v1518 = vld [vmem:[%s9 + $0x10] sm:$0x3]
        %v1522 = vlaneseq
        %v1523 = vshrl.u32 %v1522, 7
        %v1524 = vsub.s32 0, %v1523
        %v1525 = vrot.slane %v1516, %v1524
        %v1526 = vlaneseq
        %v1527 = vshrl.u32 %v1526, 7
        %v1528 = vsub.s32 1, %v1527
        %v1529 = vrot.slane %v1516, %v1528
        %v1530 = vlaneseq
        %v1531 = vshrl.u32 %v1530, 7
        %v1532 = vsub.s32 2, %v1531
        %v1533 = vrot.slane %v1516, %v1532
        %v1534 = vlaneseq
        %v1535 = vshrl.u32 %v1534, 7
        %v1536 = vsub.s32 3, %v1535
        %v1537 = vrot.slane %v1516, %v1536
        %v1538 = vlaneseq
        %v1539 = vshrl.u32 %v1538, 7
        %v1540 = vsub.s32 4, %v1539
        %v1541 = vrot.slane %v1516, %v1540
        %v1542 = vlaneseq
        %v1543 = vshrl.u32 %v1542, 7
        %v1544 = vsub.s32 5, %v1543
        %v1545 = vrot.slane %v1516, %v1544
        %v1546 = vlaneseq
        %v1547 = vshrl.u32 %v1546, 7
        %v1548 = vsub.s32 6, %v1547
        %v1549 = vrot.slane %v1516, %v1548
        %v1550 = vlaneseq
        %v1551 = vshrl.u32 %v1550, 7
        %v1552 = vsub.s32 7, %v1551
        %v1553 = vrot.slane %v1516, %v1552
        %v1554 = vlaneseq
        %v1555 = vshrl.u32 %v1554, 7
        %v1556 = vsub.s32 0, %v1555
        %v1557 = vrot.slane %v1517, %v1556
        %v1558 = vlaneseq
        %v1559 = vshrl.u32 %v1558, 7
        %v1560 = vsub.s32 1, %v1559
        %v1561 = vrot.slane %v1517, %v1560
        %v1562 = vlaneseq
        %v1563 = vshrl.u32 %v1562, 7
        %v1564 = vsub.s32 2, %v1563
        %v1565 = vrot.slane %v1517, %v1564
        %v1566 = vlaneseq
        %v1567 = vshrl.u32 %v1566, 7
        %v1568 = vsub.s32 3, %v1567
        %v1569 = vrot.slane %v1517, %v1568
        %v1570 = vlaneseq
        %v1571 = vshrl.u32 %v1570, 7
        %v1572 = vsub.s32 4, %v1571
        %v1573 = vrot.slane %v1517, %v1572
        %v1574 = vlaneseq
        %v1575 = vshrl.u32 %v1574, 7
        %v1576 = vsub.s32 5, %v1575
        %v1577 = vrot.slane %v1517, %v1576
        %v1578 = vlaneseq
        %v1579 = vshrl.u32 %v1578, 7
        %v1580 = vsub.s32 6, %v1579
        %v1581 = vrot.slane %v1517, %v1580
        %v1582 = vlaneseq
        %v1583 = vshrl.u32 %v1582, 7
        %v1584 = vsub.s32 7, %v1583
        %v1585 = vrot.slane %v1517, %v1584
        %v1586 = vlaneseq
        %v1587 = vshrl.u32 %v1586, 7
        %v1588 = vsub.s32 0, %v1587
        %v1589 = vrot.slane %v1518, %v1588
        %v1590 = vlaneseq
        %v1591 = vshrl.u32 %v1590, 7
        %v1592 = vsub.s32 1, %v1591
        %v1593 = vrot.slane %v1518, %v1592
        %v1612 = vmul.f32 %v1498, %v1525
        %v1613 = vmul.f32 %v1499, %v1529
        %v1614 = vmul.f32 %v1500, %v1533
        %v1615 = vmul.f32 %v1501, %v1537
        %v1616 = vmul.f32 %v1502, %v1541
        %v1617 = vmul.f32 %v1503, %v1545
        %v1618 = vmul.f32 %v1504, %v1549
        %v1619 = vmul.f32 %v1505, %v1553
        %v1620 = vmul.f32 %v1506, %v1557
        %v1621 = vmul.f32 %v1507, %v1561
        %v1622 = vmul.f32 %v1508, %v1565
        %v1623 = vmul.f32 %v1509, %v1569
        %v1624 = vmul.f32 %v1510, %v1573
        %v1625 = vmul.f32 %v1511, %v1577
        %v1626 = vmul.f32 %v1512, %v1581
        %v1627 = vmul.f32 %v1513, %v1585
        %v1628 = vmul.f32 %v1514, %v1589
        %v1629 = vmul.f32 %v1515, %v1593
        %v1630 = vpack.c.bf16 %v1612, %v1612
        %v1631 = vpack.c.bf16 %v1613, %v1613
        %v1632 = vpack.c.bf16 %v1614, %v1614
        %v1633 = vpack.c.bf16 %v1615, %v1615
        %v1634 = vpack.c.bf16 %v1616, %v1616
        %v1635 = vpack.c.bf16 %v1617, %v1617
        %v1636 = vpack.c.bf16 %v1618, %v1618
        %v1637 = vpack.c.bf16 %v1619, %v1619
        %v1638 = vpack.c.bf16 %v1620, %v1620
        %v1639 = vpack.c.bf16 %v1621, %v1621
        %v1640 = vpack.c.bf16 %v1622, %v1622
        %v1641 = vpack.c.bf16 %v1623, %v1623
        %v1642 = vpack.c.bf16 %v1624, %v1624
        %v1643 = vpack.c.bf16 %v1625, %v1625
        %v1644 = vpack.c.bf16 %v1626, %v1626
        %v1645 = vpack.c.bf16 %v1627, %v1627
        %v1646 = vpack.c.bf16 %v1628, %v1628
        %v1647 = vpack.c.bf16 %v1629, %v1629
        %1665 = vrot.lane.b32.xlu0 %v1630, 1
        %v1666 = vpop.permute.xlu0 %1665
        %1667 = vrot.lane.b32.xlu0 %v1631, 1
        %v1668 = vpop.permute.xlu0 %1667
        %1669 = vrot.lane.b32.xlu0 %v1632, 1
        %v1670 = vpop.permute.xlu0 %1669
        %1671 = vrot.lane.b32.xlu0 %v1633, 1
        %v1672 = vpop.permute.xlu0 %1671
        %1673 = vrot.lane.b32.xlu0 %v1634, 1
        %v1674 = vpop.permute.xlu0 %1673
        %1675 = vrot.lane.b32.xlu0 %v1635, 1
        %v1676 = vpop.permute.xlu0 %1675
        %1677 = vrot.lane.b32.xlu0 %v1636, 1
        %v1678 = vpop.permute.xlu0 %1677
        %1679 = vrot.lane.b32.xlu0 %v1637, 1
        %v1680 = vpop.permute.xlu0 %1679
        %1681 = vrot.lane.b32.xlu0 %v1638, 1
        %v1682 = vpop.permute.xlu0 %1681
        %1683 = vrot.lane.b32.xlu0 %v1639, 1
        %v1684 = vpop.permute.xlu0 %1683
        %1685 = vrot.lane.b32.xlu0 %v1640, 1
        %v1686 = vpop.permute.xlu0 %1685
        %1687 = vrot.lane.b32.xlu0 %v1641, 1
        %v1688 = vpop.permute.xlu0 %1687
        %1689 = vrot.lane.b32.xlu0 %v1642, 1
        %v1690 = vpop.permute.xlu0 %1689
        %1691 = vrot.lane.b32.xlu0 %v1643, 1
        %v1692 = vpop.permute.xlu0 %1691
        %1693 = vrot.lane.b32.xlu0 %v1644, 1
        %v1694 = vpop.permute.xlu0 %1693
        %1695 = vrot.lane.b32.xlu0 %v1645, 1
        %v1696 = vpop.permute.xlu0 %1695
        %1697 = vrot.lane.b32.xlu0 %v1646, 1
        %v1698 = vpop.permute.xlu0 %1697
        %v1699 = vsel %vm665, %v1666, %v1668
        %v1700 = vsel %vm665, %v1668, %v1670
        %v1701 = vsel %vm665, %v1670, %v1672
        %v1702 = vsel %vm665, %v1672, %v1674
        %v1703 = vsel %vm665, %v1674, %v1676
        %v1704 = vsel %vm665, %v1676, %v1678
        %v1705 = vsel %vm665, %v1678, %v1680
        %v1706 = vsel %vm665, %v1680, %v1682
        %v1707 = vsel %vm665, %v1682, %v1684
        %v1708 = vsel %vm665, %v1684, %v1686
        %v1709 = vsel %vm665, %v1686, %v1688
        %v1710 = vsel %vm665, %v1688, %v1690
        %v1711 = vsel %vm665, %v1690, %v1692
        %v1712 = vsel %vm665, %v1692, %v1694
        %v1713 = vsel %vm665, %v1694, %v1696
        %v1714 = vsel %vm665, %v1696, %v1698
        %1732 = vst.msk [vmem:[#allocation2 + $0x8] sm:$0xf] %vm699, %v1666
        %1733 = vst [vmem:[#allocation2 + $0x10] sm:$0xf] %v1699
        %1734 = vst [vmem:[#allocation2 + $0x18] sm:$0xf] %v1700
        %1735 = vst [vmem:[#allocation2 + $0x20] sm:$0xf] %v1701
        %1736 = vst [vmem:[#allocation2 + $0x28] sm:$0xf] %v1702
        %1737 = vst [vmem:[#allocation2 + $0x30] sm:$0xf] %v1703
        %1738 = vst [vmem:[#allocation2 + $0x38] sm:$0xf] %v1704
        %1739 = vst [vmem:[#allocation2 + $0x40] sm:$0xf] %v1705
        %1740 = vst [vmem:[#allocation2 + $0x48] sm:$0xf] %v1706
        %1741 = vst [vmem:[#allocation2 + $0x50] sm:$0xf] %v1707
        %1742 = vst [vmem:[#allocation2 + $0x58] sm:$0xf] %v1708
        %1743 = vst [vmem:[#allocation2 + $0x60] sm:$0xf] %v1709
        %1744 = vst [vmem:[#allocation2 + $0x68] sm:$0xf] %v1710
        %1745 = vst [vmem:[#allocation2 + $0x70] sm:$0xf] %v1711
        %1746 = vst [vmem:[#allocation2 + $0x78] sm:$0xf] %v1712
        %1747 = vst [vmem:[#allocation2 + $0x80] sm:$0xf] %v1713
        %1748 = vst [vmem:[#allocation2 + $0x88] sm:$0xf] %v1714
        %1749 = vst [vmem:[#allocation2] sm:$0xf] 0
        %1750 = vst.msk [vmem:[#allocation2 + $0x8] sm:$0xf] %vm718, 0
        %v1751 = vrot.slane %v1630, 4
        %v1752 = vrot.slane %v1631, 4
        %v1753 = vrot.slane %v1632, 4
        %v1754 = vrot.slane %v1633, 4
        %v1755 = vrot.slane %v1634, 4
        %v1756 = vrot.slane %v1635, 4
        %v1757 = vrot.slane %v1636, 4
        %v1758 = vrot.slane %v1637, 4
        %v1759 = vrot.slane %v1638, 4
        %v1760 = vrot.slane %v1639, 4
        %v1761 = vrot.slane %v1640, 4
        %v1762 = vrot.slane %v1641, 4
        %v1763 = vrot.slane %v1642, 4
        %v1764 = vrot.slane %v1643, 4
        %v1765 = vrot.slane %v1644, 4
        %v1766 = vrot.slane %v1645, 4
        %v1767 = vrot.slane %v1646, 4
        %1785 = vst [vmem:[#allocation2 + $0x8] sm:$0xf0] %v1751
        %1786 = vst [vmem:[#allocation2 + $0x10] sm:$0xf0] %v1752
        %1787 = vst [vmem:[#allocation2 + $0x18] sm:$0xf0] %v1753
        %1788 = vst [vmem:[#allocation2 + $0x20] sm:$0xf0] %v1754
        %1789 = vst [vmem:[#allocation2 + $0x28] sm:$0xf0] %v1755
        %1790 = vst [vmem:[#allocation2 + $0x30] sm:$0xf0] %v1756
        %1791 = vst [vmem:[#allocation2 + $0x38] sm:$0xf0] %v1757
        %1792 = vst [vmem:[#allocation2 + $0x40] sm:$0xf0] %v1758
        %1793 = vst [vmem:[#allocation2 + $0x48] sm:$0xf0] %v1759
        %1794 = vst [vmem:[#allocation2 + $0x50] sm:$0xf0] %v1760
        %1795 = vst [vmem:[#allocation2 + $0x58] sm:$0xf0] %v1761
        %1796 = vst [vmem:[#allocation2 + $0x60] sm:$0xf0] %v1762
        %1797 = vst [vmem:[#allocation2 + $0x68] sm:$0xf0] %v1763
        %1798 = vst [vmem:[#allocation2 + $0x70] sm:$0xf0] %v1764
        %1799 = vst [vmem:[#allocation2 + $0x78] sm:$0xf0] %v1765
        %1800 = vst [vmem:[#allocation2 + $0x80] sm:$0xf0] %v1766
        %1801 = vst [vmem:[#allocation2 + $0x88] sm:$0xf0] %v1767
        %1802 = vst [vmem:[#allocation2] sm:$0xf0] 0
        %1804 = vrot.lane.b32.xlu0 %v1630, 127
        %v1805 = vpop.permute.xlu0 %1804
        %1806 = vrot.lane.b32.xlu0 %v1631, 127
        %v1807 = vpop.permute.xlu0 %1806
        %1808 = vrot.lane.b32.xlu0 %v1632, 127
        %v1809 = vpop.permute.xlu0 %1808
        %1810 = vrot.lane.b32.xlu0 %v1633, 127
        %v1811 = vpop.permute.xlu0 %1810
        %1812 = vrot.lane.b32.xlu0 %v1634, 127
        %v1813 = vpop.permute.xlu0 %1812
        %1814 = vrot.lane.b32.xlu0 %v1635, 127
        %v1815 = vpop.permute.xlu0 %1814
        %1816 = vrot.lane.b32.xlu0 %v1636, 127
        %v1817 = vpop.permute.xlu0 %1816
        %1818 = vrot.lane.b32.xlu0 %v1637, 127
        %v1819 = vpop.permute.xlu0 %1818
        %1820 = vrot.lane.b32.xlu0 %v1638, 127
        %v1821 = vpop.permute.xlu0 %1820
        %1822 = vrot.lane.b32.xlu0 %v1639, 127
        %v1823 = vpop.permute.xlu0 %1822
        %1824 = vrot.lane.b32.xlu0 %v1640, 127
        %v1825 = vpop.permute.xlu0 %1824
        %1826 = vrot.lane.b32.xlu0 %v1641, 127
        %v1827 = vpop.permute.xlu0 %1826
        %1828 = vrot.lane.b32.xlu0 %v1642, 127
        %v1829 = vpop.permute.xlu0 %1828
        %1830 = vrot.lane.b32.xlu0 %v1643, 127
        %v1831 = vpop.permute.xlu0 %1830
        %1832 = vrot.lane.b32.xlu0 %v1644, 127
        %v1833 = vpop.permute.xlu0 %1832
        %1834 = vrot.lane.b32.xlu0 %v1645, 127
        %v1835 = vpop.permute.xlu0 %1834
        %1836 = vrot.lane.b32.xlu0 %v1646, 127
        %v1837 = vpop.permute.xlu0 %1836
        %1838 = vrot.lane.b32.xlu0 %v1647, 127
        %v1839 = vpop.permute.xlu0 %1838
        %v1840 = vsel %vm793, %v1805, %v1807
        %v1841 = vsel %vm793, %v1807, %v1809
        %v1842 = vsel %vm793, %v1809, %v1811
        %v1843 = vsel %vm793, %v1811, %v1813
        %v1844 = vsel %vm793, %v1813, %v1815
        %v1845 = vsel %vm793, %v1815, %v1817
        %v1846 = vsel %vm793, %v1817, %v1819
        %v1847 = vsel %vm793, %v1819, %v1821
        %v1848 = vsel %vm793, %v1821, %v1823
        %v1849 = vsel %vm793, %v1823, %v1825
        %v1850 = vsel %vm793, %v1825, %v1827
        %v1851 = vsel %vm793, %v1827, %v1829
        %v1852 = vsel %vm793, %v1829, %v1831
        %v1853 = vsel %vm793, %v1831, %v1833
        %v1854 = vsel %vm793, %v1833, %v1835
        %v1855 = vsel %vm793, %v1835, %v1837
        %v1856 = vsel %vm793, %v1837, %v1839
        %1875 = vst.msk [vmem:[#allocation2 + $0x90] sm:$0xf] %vm829, %v1805
        %1876 = vst [vmem:[#allocation2 + $0x98] sm:$0xf] %v1840
        %1877 = vst [vmem:[#allocation2 + $0xa0] sm:$0xf] %v1841
        %1878 = vst [vmem:[#allocation2 + $0xa8] sm:$0xf] %v1842
        %1879 = vst [vmem:[#allocation2 + $0xb0] sm:$0xf] %v1843
        %1880 = vst [vmem:[#allocation2 + $0xb8] sm:$0xf] %v1844
        %1881 = vst [vmem:[#allocation2 + $0xc0] sm:$0xf] %v1845
        %1882 = vst [vmem:[#allocation2 + $0xc8] sm:$0xf] %v1846
        %1883 = vst [vmem:[#allocation2 + $0xd0] sm:$0xf] %v1847
        %1884 = vst [vmem:[#allocation2 + $0xd8] sm:$0xf] %v1848
        %1885 = vst [vmem:[#allocation2 + $0xe0] sm:$0xf] %v1849
        %1886 = vst [vmem:[#allocation2 + $0xe8] sm:$0xf] %v1850
        %1887 = vst [vmem:[#allocation2 + $0xf0] sm:$0xf] %v1851
        %1888 = vst [vmem:[#allocation2 + $0xf8] sm:$0xf] %v1852
        %1889 = vst [vmem:[#allocation2 + $0x100] sm:$0xf] %v1853
        %1890 = vst [vmem:[#allocation2 + $0x108] sm:$0xf] %v1854
        %1891 = vst [vmem:[#allocation2 + $0x110] sm:$0xf] %v1855
        %1892 = vst [vmem:[#allocation2 + $0x118] sm:$0xf] %v1856
        %1893 = vst.msk [vmem:[#allocation2 + $0x90] sm:$0xf] %vm848, 0
        %v1894 = vrot.slane %v1647, 4
        %1895 = vrot.lane.b32.xlu0 %v1751, 1
        %v1896 = vpop.permute.xlu0 %1895
        %1897 = vrot.lane.b32.xlu0 %v1752, 1
        %v1898 = vpop.permute.xlu0 %1897
        %1899 = vrot.lane.b32.xlu0 %v1753, 1
        %v1900 = vpop.permute.xlu0 %1899
        %1901 = vrot.lane.b32.xlu0 %v1754, 1
        %v1902 = vpop.permute.xlu0 %1901
        %1903 = vrot.lane.b32.xlu0 %v1755, 1
        %v1904 = vpop.permute.xlu0 %1903
        %1905 = vrot.lane.b32.xlu0 %v1756, 1
        %v1906 = vpop.permute.xlu0 %1905
        %1907 = vrot.lane.b32.xlu0 %v1757, 1
        %v1908 = vpop.permute.xlu0 %1907
        %1909 = vrot.lane.b32.xlu0 %v1758, 1
        %v1910 = vpop.permute.xlu0 %1909
        %1911 = vrot.lane.b32.xlu0 %v1759, 1
        %v1912 = vpop.permute.xlu0 %1911
        %1913 = vrot.lane.b32.xlu0 %v1760, 1
        %v1914 = vpop.permute.xlu0 %1913
        %1915 = vrot.lane.b32.xlu0 %v1761, 1
        %v1916 = vpop.permute.xlu0 %1915
        %1917 = vrot.lane.b32.xlu0 %v1762, 1
        %v1918 = vpop.permute.xlu0 %1917
        %1919 = vrot.lane.b32.xlu0 %v1763, 1
        %v1920 = vpop.permute.xlu0 %1919
        %1921 = vrot.lane.b32.xlu0 %v1764, 1
        %v1922 = vpop.permute.xlu0 %1921
        %1923 = vrot.lane.b32.xlu0 %v1765, 1
        %v1924 = vpop.permute.xlu0 %1923
        %1925 = vrot.lane.b32.xlu0 %v1766, 1
        %v1926 = vpop.permute.xlu0 %1925
        %1927 = vrot.lane.b32.xlu0 %v1767, 1
        %v1928 = vpop.permute.xlu0 %1927
        %1929 = vrot.lane.b32.xlu0 %v1894, 1
        %v1930 = vpop.permute.xlu0 %1929
        %v1931 = vsel %vm665, %v1896, %v1898
        %v1932 = vsel %vm665, %v1898, %v1900
        %v1933 = vsel %vm665, %v1900, %v1902
        %v1934 = vsel %vm665, %v1902, %v1904
        %v1935 = vsel %vm665, %v1904, %v1906
        %v1936 = vsel %vm665, %v1906, %v1908
        %v1937 = vsel %vm665, %v1908, %v1910
        %v1938 = vsel %vm665, %v1910, %v1912
        %v1939 = vsel %vm665, %v1912, %v1914
        %v1940 = vsel %vm665, %v1914, %v1916
        %v1941 = vsel %vm665, %v1916, %v1918
        %v1942 = vsel %vm665, %v1918, %v1920
        %v1943 = vsel %vm665, %v1920, %v1922
        %v1944 = vsel %vm665, %v1922, %v1924
        %v1945 = vsel %vm665, %v1924, %v1926
        %v1946 = vsel %vm665, %v1926, %v1928
        %v1947 = vsel %vm665, %v1928, %v1930
        %1966 = vst.msk [vmem:[#allocation2 + $0x90] sm:$0xf0] %vm854, %v1896
        %1967 = vst [vmem:[#allocation2 + $0x98] sm:$0xf0] %v1931
        %1968 = vst [vmem:[#allocation2 + $0xa0] sm:$0xf0] %v1932
        %1969 = vst [vmem:[#allocation2 + $0xa8] sm:$0xf0] %v1933
        %1970 = vst [vmem:[#allocation2 + $0xb0] sm:$0xf0] %v1934
        %1971 = vst [vmem:[#allocation2 + $0xb8] sm:$0xf0] %v1935
        %1972 = vst [vmem:[#allocation2 + $0xc0] sm:$0xf0] %v1936
        %1973 = vst [vmem:[#allocation2 + $0xc8] sm:$0xf0] %v1937
        %1974 = vst [vmem:[#allocation2 + $0xd0] sm:$0xf0] %v1938
        %1975 = vst [vmem:[#allocation2 + $0xd8] sm:$0xf0] %v1939
        %1976 = vst [vmem:[#allocation2 + $0xe0] sm:$0xf0] %v1940
        %1977 = vst [vmem:[#allocation2 + $0xe8] sm:$0xf0] %v1941
        %1978 = vst [vmem:[#allocation2 + $0xf0] sm:$0xf0] %v1942
        %1979 = vst [vmem:[#allocation2 + $0xf8] sm:$0xf0] %v1943
        %1980 = vst [vmem:[#allocation2 + $0x100] sm:$0xf0] %v1944
        %1981 = vst [vmem:[#allocation2 + $0x108] sm:$0xf0] %v1945
        %1982 = vst [vmem:[#allocation2 + $0x110] sm:$0xf0] %v1946
        %1983 = vst [vmem:[#allocation2 + $0x118] sm:$0xf0] %v1947
        %1984 = vst.msk [vmem:[#allocation2 + $0x90] sm:$0xf0] %vm873, 0
        %1985 = vst [vmem:[#allocation2 + $0x120] sm:$0xf] %v1630
        %1986 = vst [vmem:[#allocation2 + $0x128] sm:$0xf] %v1631
        %1987 = vst [vmem:[#allocation2 + $0x130] sm:$0xf] %v1632
        %1988 = vst [vmem:[#allocation2 + $0x138] sm:$0xf] %v1633
        %1989 = vst [vmem:[#allocation2 + $0x140] sm:$0xf] %v1634
        %1990 = vst [vmem:[#allocation2 + $0x148] sm:$0xf] %v1635
        %1991 = vst [vmem:[#allocation2 + $0x150] sm:$0xf] %v1636
        %1992 = vst [vmem:[#allocation2 + $0x158] sm:$0xf] %v1637
        %1993 = vst [vmem:[#allocation2 + $0x160] sm:$0xf] %v1638
        %1994 = vst [vmem:[#allocation2 + $0x168] sm:$0xf] %v1639
        %1995 = vst [vmem:[#allocation2 + $0x170] sm:$0xf] %v1640
        %1996 = vst [vmem:[#allocation2 + $0x178] sm:$0xf] %v1641
        %1997 = vst [vmem:[#allocation2 + $0x180] sm:$0xf] %v1642
        %1998 = vst [vmem:[#allocation2 + $0x188] sm:$0xf] %v1643
        %1999 = vst [vmem:[#allocation2 + $0x190] sm:$0xf] %v1644
        %2000 = vst [vmem:[#allocation2 + $0x198] sm:$0xf] %v1645
        %2001 = vst [vmem:[#allocation2 + $0x1a0] sm:$0xf] %v1646
        %2002 = vst [vmem:[#allocation2 + $0x1a8] sm:$0xf] %v1647
        %2003 = vrot.lane.b32.xlu0 %v1751, 127
        %v2004 = vpop.permute.xlu0 %2003
        %2005 = vrot.lane.b32.xlu0 %v1752, 127
        %v2006 = vpop.permute.xlu0 %2005
        %2007 = vrot.lane.b32.xlu0 %v1753, 127
        %v2008 = vpop.permute.xlu0 %2007
        %2009 = vrot.lane.b32.xlu0 %v1754, 127
        %v2010 = vpop.permute.xlu0 %2009
        %2011 = vrot.lane.b32.xlu0 %v1755, 127
        %v2012 = vpop.permute.xlu0 %2011
        %2013 = vrot.lane.b32.xlu0 %v1756, 127
        %v2014 = vpop.permute.xlu0 %2013
        %2015 = vrot.lane.b32.xlu0 %v1757, 127
        %v2016 = vpop.permute.xlu0 %2015
        %2017 = vrot.lane.b32.xlu0 %v1758, 127
        %v2018 = vpop.permute.xlu0 %2017
        %2019 = vrot.lane.b32.xlu0 %v1759, 127
        %v2020 = vpop.permute.xlu0 %2019
        %2021 = vrot.lane.b32.xlu0 %v1760, 127
        %v2022 = vpop.permute.xlu0 %2021
        %2023 = vrot.lane.b32.xlu0 %v1761, 127
        %v2024 = vpop.permute.xlu0 %2023
        %2025 = vrot.lane.b32.xlu0 %v1762, 127
        %v2026 = vpop.permute.xlu0 %2025
        %2027 = vrot.lane.b32.xlu0 %v1763, 127
        %v2028 = vpop.permute.xlu0 %2027
        %2029 = vrot.lane.b32.xlu0 %v1764, 127
        %v2030 = vpop.permute.xlu0 %2029
        %2031 = vrot.lane.b32.xlu0 %v1765, 127
        %v2032 = vpop.permute.xlu0 %2031
        %2033 = vrot.lane.b32.xlu0 %v1766, 127
        %v2034 = vpop.permute.xlu0 %2033
        %2035 = vrot.lane.b32.xlu0 %v1767, 127
        %v2036 = vpop.permute.xlu0 %2035
        %2037 = vrot.lane.b32.xlu0 %v1894, 127
        %v2038 = vpop.permute.xlu0 %2037
        %v2039 = vsel %vm793, %v2004, %v2006
        %v2040 = vsel %vm793, %v2006, %v2008
        %v2041 = vsel %vm793, %v2008, %v2010
        %v2042 = vsel %vm793, %v2010, %v2012
        %v2043 = vsel %vm793, %v2012, %v2014
        %v2044 = vsel %vm793, %v2014, %v2016
        %v2045 = vsel %vm793, %v2016, %v2018
        %v2046 = vsel %vm793, %v2018, %v2020
        %v2047 = vsel %vm793, %v2020, %v2022
        %v2048 = vsel %vm793, %v2022, %v2024
        %v2049 = vsel %vm793, %v2024, %v2026
        %v2050 = vsel %vm793, %v2026, %v2028
        %v2051 = vsel %vm793, %v2028, %v2030
        %v2052 = vsel %vm793, %v2030, %v2032
        %v2053 = vsel %vm793, %v2032, %v2034
        %v2054 = vsel %vm793, %v2034, %v2036
        %v2055 = vsel %vm793, %v2036, %v2038
        %2074 = vst [vmem:[#allocation2 + $0x120] sm:$0xf0] %v2039
        %2075 = vst [vmem:[#allocation2 + $0x128] sm:$0xf0] %v2040
        %2076 = vst [vmem:[#allocation2 + $0x130] sm:$0xf0] %v2041
        %2077 = vst [vmem:[#allocation2 + $0x138] sm:$0xf0] %v2042
        %2078 = vst [vmem:[#allocation2 + $0x140] sm:$0xf0] %v2043
        %2079 = vst [vmem:[#allocation2 + $0x148] sm:$0xf0] %v2044
        %2080 = vst [vmem:[#allocation2 + $0x150] sm:$0xf0] %v2045
        %2081 = vst [vmem:[#allocation2 + $0x158] sm:$0xf0] %v2046
        %2082 = vst [vmem:[#allocation2 + $0x160] sm:$0xf0] %v2047
        %2083 = vst [vmem:[#allocation2 + $0x168] sm:$0xf0] %v2048
        %2084 = vst [vmem:[#allocation2 + $0x170] sm:$0xf0] %v2049
        %2085 = vst [vmem:[#allocation2 + $0x178] sm:$0xf0] %v2050
        %2086 = vst [vmem:[#allocation2 + $0x180] sm:$0xf0] %v2051
        %2087 = vst [vmem:[#allocation2 + $0x188] sm:$0xf0] %v2052
        %2088 = vst [vmem:[#allocation2 + $0x190] sm:$0xf0] %v2053
        %2089 = vst [vmem:[#allocation2 + $0x198] sm:$0xf0] %v2054
        %2090 = vst [vmem:[#allocation2 + $0x1a0] sm:$0xf0] %v2055
        %2091 = vst.msk [vmem:[#allocation2 + $0x1a8] sm:$0xf0] %vm912, %v2038
        %2092 = vst.msk [vmem:[#allocation2 + $0x1a8] sm:$0xf0] %vm914, 0
        %2093 = vrot.lane.b32.xlu0 %v1647, 1
        %v2094 = vpop.permute.xlu0 %2093
        %v2095 = vsel %vm665, %v1698, %v2094
        %2098 = vst [vmem:[#allocation2 + $0x1b0] sm:$0xf] %v1699
        %2099 = vst [vmem:[#allocation2 + $0x1b8] sm:$0xf] %v1700
        %2100 = vst [vmem:[#allocation2 + $0x1c0] sm:$0xf] %v1701
        %2101 = vst [vmem:[#allocation2 + $0x1c8] sm:$0xf] %v1702
        %2102 = vst [vmem:[#allocation2 + $0x1d0] sm:$0xf] %v1703
        %2103 = vst [vmem:[#allocation2 + $0x1d8] sm:$0xf] %v1704
        %2104 = vst [vmem:[#allocation2 + $0x1e0] sm:$0xf] %v1705
        %2105 = vst [vmem:[#allocation2 + $0x1e8] sm:$0xf] %v1706
        %2106 = vst [vmem:[#allocation2 + $0x1f0] sm:$0xf] %v1707
        %2107 = vst [vmem:[#allocation2 + $0x1f8] sm:$0xf] %v1708
        %2108 = vst [vmem:[#allocation2 + $0x200] sm:$0xf] %v1709
        %2109 = vst [vmem:[#allocation2 + $0x208] sm:$0xf] %v1710
        %2110 = vst [vmem:[#allocation2 + $0x210] sm:$0xf] %v1711
        %2111 = vst [vmem:[#allocation2 + $0x218] sm:$0xf] %v1712
        %2112 = vst [vmem:[#allocation2 + $0x220] sm:$0xf] %v1713
        %2113 = vst [vmem:[#allocation2 + $0x228] sm:$0xf] %v1714
        %2114 = vst [vmem:[#allocation2 + $0x230] sm:$0xf] %v2095
        %2115 = vst.msk [vmem:[#allocation2 + $0x238] sm:$0xf] %vm718, %v2094
        %2116 = vst.msk [vmem:[#allocation2 + $0x238] sm:$0xf] %vm699, 0
        %2118 = vst [vmem:[#allocation2 + $0x1b0] sm:$0xf0] %v1752
        %2119 = vst [vmem:[#allocation2 + $0x1b8] sm:$0xf0] %v1753
        %2120 = vst [vmem:[#allocation2 + $0x1c0] sm:$0xf0] %v1754
        %2121 = vst [vmem:[#allocation2 + $0x1c8] sm:$0xf0] %v1755
        %2122 = vst [vmem:[#allocation2 + $0x1d0] sm:$0xf0] %v1756
        %2123 = vst [vmem:[#allocation2 + $0x1d8] sm:$0xf0] %v1757
        %2124 = vst [vmem:[#allocation2 + $0x1e0] sm:$0xf0] %v1758
        %2125 = vst [vmem:[#allocation2 + $0x1e8] sm:$0xf0] %v1759
        %2126 = vst [vmem:[#allocation2 + $0x1f0] sm:$0xf0] %v1760
        %2127 = vst [vmem:[#allocation2 + $0x1f8] sm:$0xf0] %v1761
        %2128 = vst [vmem:[#allocation2 + $0x200] sm:$0xf0] %v1762
        %2129 = vst [vmem:[#allocation2 + $0x208] sm:$0xf0] %v1763
        %2130 = vst [vmem:[#allocation2 + $0x210] sm:$0xf0] %v1764
        %2131 = vst [vmem:[#allocation2 + $0x218] sm:$0xf0] %v1765
        %2132 = vst [vmem:[#allocation2 + $0x220] sm:$0xf0] %v1766
        %2133 = vst [vmem:[#allocation2 + $0x228] sm:$0xf0] %v1767
        %2134 = vst [vmem:[#allocation2 + $0x230] sm:$0xf0] %v1894
        %2135 = vst [vmem:[#allocation2 + $0x238] sm:$0xf0] 0
        %2137 = vst [vmem:[#allocation2 + $0x240] sm:$0xf] %v1841
        %2138 = vst [vmem:[#allocation2 + $0x248] sm:$0xf] %v1842
        %2139 = vst [vmem:[#allocation2 + $0x250] sm:$0xf] %v1843
        %2140 = vst [vmem:[#allocation2 + $0x258] sm:$0xf] %v1844
        %2141 = vst [vmem:[#allocation2 + $0x260] sm:$0xf] %v1845
        %2142 = vst [vmem:[#allocation2 + $0x268] sm:$0xf] %v1846
        %2143 = vst [vmem:[#allocation2 + $0x270] sm:$0xf] %v1847
        %2144 = vst [vmem:[#allocation2 + $0x278] sm:$0xf] %v1848
        %2145 = vst [vmem:[#allocation2 + $0x280] sm:$0xf] %v1849
        %2146 = vst [vmem:[#allocation2 + $0x288] sm:$0xf] %v1850
        %2147 = vst [vmem:[#allocation2 + $0x290] sm:$0xf] %v1851
        %2148 = vst [vmem:[#allocation2 + $0x298] sm:$0xf] %v1852
        %2149 = vst [vmem:[#allocation2 + $0x2a0] sm:$0xf] %v1853
        %2150 = vst [vmem:[#allocation2 + $0x2a8] sm:$0xf] %v1854
        %2151 = vst [vmem:[#allocation2 + $0x2b0] sm:$0xf] %v1855
        %2152 = vst [vmem:[#allocation2 + $0x2b8] sm:$0xf] %v1856
        %2153 = vst.msk [vmem:[#allocation2 + $0x2c0] sm:$0xf] %vm848, %v1839
        %2154 = vst.msk [vmem:[#allocation2 + $0x2c0] sm:$0xf] %vm829, 0
        %2155 = vst [vmem:[#allocation2 + $0x2c8] sm:$0xf] 0
        %v2156 = vld [vmem:[#allocation8] sm:$0xf]
        %v2157 = vld [vmem:[#allocation2] sm:$0xff]
        %v2158 = vld [vmem:[#allocation2 + $0x8] sm:$0xff]
        %v2159 = vld [vmem:[#allocation2 + $0x10] sm:$0xff]
        %v2160 = vld [vmem:[#allocation2 + $0x18] sm:$0xff]
        %v2161 = vld [vmem:[#allocation2 + $0x20] sm:$0xff]
        %v2162 = vld [vmem:[#allocation2 + $0x28] sm:$0xff]
        %v2163 = vld [vmem:[#allocation2 + $0x30] sm:$0xff]
        %v2164 = vld [vmem:[#allocation2 + $0x38] sm:$0xff]
        %v2165 = vld [vmem:[#allocation2 + $0x40] sm:$0xff]
        %v2166 = vld [vmem:[#allocation2 + $0x48] sm:$0xff]
        %v2167 = vld [vmem:[#allocation2 + $0x50] sm:$0xff]
        %v2168 = vld [vmem:[#allocation2 + $0x58] sm:$0xff]
        %v2169 = vld [vmem:[#allocation2 + $0x60] sm:$0xff]
        %v2170 = vld [vmem:[#allocation2 + $0x68] sm:$0xff]
        %v2171 = vld [vmem:[#allocation2 + $0x70] sm:$0xff]
        %v2172 = vld [vmem:[#allocation2 + $0x78] sm:$0xff]
        %v2173 = vld [vmem:[#allocation2 + $0x80] sm:$0xff]
        %v2174 = vld [vmem:[#allocation2 + $0x88] sm:$0xff]
        %v2175 = vld [vmem:[#allocation2 + $0x90] sm:$0xff]
        %v2176 = vld [vmem:[#allocation2 + $0x98] sm:$0xff]
        %v2177 = vld [vmem:[#allocation2 + $0xa0] sm:$0xff]
        %v2178 = vld [vmem:[#allocation2 + $0xa8] sm:$0xff]
        %v2179 = vld [vmem:[#allocation2 + $0xb0] sm:$0xff]
        %v2180 = vld [vmem:[#allocation2 + $0xb8] sm:$0xff]
        %v2181 = vld [vmem:[#allocation2 + $0xc0] sm:$0xff]
        %v2182 = vld [vmem:[#allocation2 + $0xc8] sm:$0xff]
        %v2183 = vld [vmem:[#allocation2 + $0xd0] sm:$0xff]
        %v2184 = vld [vmem:[#allocation2 + $0xd8] sm:$0xff]
        %v2185 = vld [vmem:[#allocation2 + $0xe0] sm:$0xff]
        %v2186 = vld [vmem:[#allocation2 + $0xe8] sm:$0xff]
        %v2187 = vld [vmem:[#allocation2 + $0xf0] sm:$0xff]
        %v2188 = vld [vmem:[#allocation2 + $0xf8] sm:$0xff]
        %v2189 = vld [vmem:[#allocation2 + $0x100] sm:$0xff]
        %v2190 = vld [vmem:[#allocation2 + $0x108] sm:$0xff]
        %v2191 = vld [vmem:[#allocation2 + $0x110] sm:$0xff]
        %v2192 = vld [vmem:[#allocation2 + $0x118] sm:$0xff]
        %v2193 = vld [vmem:[#allocation2 + $0x120] sm:$0xff]
        %v2194 = vld [vmem:[#allocation2 + $0x128] sm:$0xff]
        %v2195 = vld [vmem:[#allocation2 + $0x130] sm:$0xff]
        %v2196 = vld [vmem:[#allocation2 + $0x138] sm:$0xff]
        %v2197 = vld [vmem:[#allocation2 + $0x140] sm:$0xff]
        %v2198 = vld [vmem:[#allocation2 + $0x148] sm:$0xff]
        %v2199 = vld [vmem:[#allocation2 + $0x150] sm:$0xff]
        %v2200 = vld [vmem:[#allocation2 + $0x158] sm:$0xff]
        %v2201 = vld [vmem:[#allocation2 + $0x160] sm:$0xff]
        %v2202 = vld [vmem:[#allocation2 + $0x168] sm:$0xff]
        %v2203 = vld [vmem:[#allocation2 + $0x170] sm:$0xff]
        %v2204 = vld [vmem:[#allocation2 + $0x178] sm:$0xff]
        %v2205 = vld [vmem:[#allocation2 + $0x180] sm:$0xff]
        %v2206 = vld [vmem:[#allocation2 + $0x188] sm:$0xff]
        %v2207 = vld [vmem:[#allocation2 + $0x190] sm:$0xff]
        %v2208 = vld [vmem:[#allocation2 + $0x198] sm:$0xff]
        %v2209 = vld [vmem:[#allocation2 + $0x1a0] sm:$0xff]
        %v2210 = vld [vmem:[#allocation2 + $0x1a8] sm:$0xff]
        %v2211 = vld [vmem:[#allocation2 + $0x1b0] sm:$0xff]
        %v2212 = vld [vmem:[#allocation2 + $0x1b8] sm:$0xff]
        %v2213 = vld [vmem:[#allocation2 + $0x1c0] sm:$0xff]
        %v2214 = vld [vmem:[#allocation2 + $0x1c8] sm:$0xff]
        %v2215 = vld [vmem:[#allocation2 + $0x1d0] sm:$0xff]
        %v2216 = vld [vmem:[#allocation2 + $0x1d8] sm:$0xff]
        %v2217 = vld [vmem:[#allocation2 + $0x1e0] sm:$0xff]
        %v2218 = vld [vmem:[#allocation2 + $0x1e8] sm:$0xff]
        %v2219 = vld [vmem:[#allocation2 + $0x1f0] sm:$0xff]
        %v2220 = vld [vmem:[#allocation2 + $0x1f8] sm:$0xff]
        %v2221 = vld [vmem:[#allocation2 + $0x200] sm:$0xff]
        %v2222 = vld [vmem:[#allocation2 + $0x208] sm:$0xff]
        %v2223 = vld [vmem:[#allocation2 + $0x210] sm:$0xff]
        %v2224 = vld [vmem:[#allocation2 + $0x218] sm:$0xff]
        %v2225 = vld [vmem:[#allocation2 + $0x220] sm:$0xff]
        %v2226 = vld [vmem:[#allocation2 + $0x228] sm:$0xff]
        %v2227 = vld [vmem:[#allocation2 + $0x230] sm:$0xff]
        %v2228 = vld [vmem:[#allocation2 + $0x238] sm:$0xff]
        %v2229 = vld [vmem:[#allocation2 + $0x240] sm:$0xf]
        %v2230 = vld [vmem:[#allocation2 + $0x248] sm:$0xf]
        %v2231 = vld [vmem:[#allocation2 + $0x250] sm:$0xf]
        %v2232 = vld [vmem:[#allocation2 + $0x258] sm:$0xf]
        %v2233 = vld [vmem:[#allocation2 + $0x260] sm:$0xf]
        %v2234 = vld [vmem:[#allocation2 + $0x268] sm:$0xf]
        %v2235 = vld [vmem:[#allocation2 + $0x270] sm:$0xf]
        %v2236 = vld [vmem:[#allocation2 + $0x278] sm:$0xf]
        %v2237 = vld [vmem:[#allocation2 + $0x280] sm:$0xf]
        %v2238 = vld [vmem:[#allocation2 + $0x288] sm:$0xf]
        %v2239 = vld [vmem:[#allocation2 + $0x290] sm:$0xf]
        %v2240 = vld [vmem:[#allocation2 + $0x298] sm:$0xf]
        %v2241 = vld [vmem:[#allocation2 + $0x2a0] sm:$0xf]
        %v2242 = vld [vmem:[#allocation2 + $0x2a8] sm:$0xf]
        %v2243 = vld [vmem:[#allocation2 + $0x2b0] sm:$0xf]
        %v2244 = vld [vmem:[#allocation2 + $0x2b8] sm:$0xf]
        %v2245 = vld [vmem:[#allocation2 + $0x2c0] sm:$0xf]
        %v2246 = vld [vmem:[#allocation2 + $0x2c8] sm:$0xf]
        %v2247 = vld [vmem:[%s6] sm:$0xff]
        %2249 = vset.pattern.permute.xlu0 0
        %2250 = vperm.xlu0 %2249, %v2247
        %v2251 = vpop.permute.xlu0 %2250
        %v2254 = vsel %vm1070, %v2156, 0
        %v2257 = vsel %vm1074, %v2229, 0
        %v2260 = vsel %vm1074, %v2230, 0
        %v2263 = vsel %vm1074, %v2231, 0
        %v2266 = vsel %vm1074, %v2232, 0
        %v2269 = vsel %vm1074, %v2233, 0
        %v2272 = vsel %vm1074, %v2234, 0
        %v2275 = vsel %vm1074, %v2235, 0
        %v2278 = vsel %vm1074, %v2236, 0
        %v2281 = vsel %vm1074, %v2237, 0
        %v2284 = vsel %vm1074, %v2238, 0
        %v2287 = vsel %vm1074, %v2239, 0
        %v2290 = vsel %vm1074, %v2240, 0
        %v2293 = vsel %vm1074, %v2241, 0
        %v2296 = vsel %vm1074, %v2242, 0
        %v2299 = vsel %vm1074, %v2243, 0
        %v2302 = vsel %vm1074, %v2244, 0
        %v2305 = vsel %vm1074, %v2245, 0
        %v2308 = vsel %vm1074, %v2246, 0
        %2310 = vmatprep.subr.bf16.mxu0 %v2158
        %2311 = vmatpush1.bf16.msra.mxu0 %v2157
        %2312 = vmatprep.subr.bf16.mxu0 %v2176
        %2313 = vmatpush1.bf16.msra.mxu0 %v2175
        %2314 = vmatprep.subr.bf16.mxu0 %v2194
        %2315 = vmatpush1.bf16.msra.mxu0 %v2193
        %2316 = vmatprep.subr.bf16.mxu0 %v2212
        %2317 = vmatpush1.bf16.msra.mxu0 %v2211
        %2318 = vmatprep.subr.bf16.mxu0 %v2260
        %2319 = vmatpush1.bf16.msra.mxu0 %v2257
        %2320 = vmatprep.subr.bf16.mxu0 0
        %2321 = vmatpush1.bf16.msra.mxu0 0
        %2322 = vmatprep.subr.bf16.mxu0 0
        %2323 = vmatpush1.bf16.msra.mxu0 0
        %2324 = vmatprep.subr.bf16.mxu0 0
        %2325 = vmatpush1.bf16.msra.mxu0 0
        %2326 = vmatprep.subr.bf16.mxu0 0
        %2327 = vmatpush1.bf16.msra.mxu0 0
        %2328 = vmatprep.subr.bf16.mxu0 0
        %2329 = vmatpush1.bf16.msra.mxu0 0
        %2330 = vmatprep.subr.bf16.mxu0 0
        %2331 = vmatpush1.bf16.msra.mxu0 0
        %2332 = vmatprep.subr.bf16.mxu0 0
        %2333 = vmatpush1.bf16.msra.mxu0 0
        %2334 = vmatprep.subr.bf16.mxu0 0
        %2335 = vmatpush1.bf16.msra.mxu0 0
        %2336 = vmatprep.subr.bf16.mxu0 0
        %2337 = vmatpush1.bf16.msra.mxu0 0
        %2338 = vmatprep.subr.bf16.mxu0 0
        %2339 = vmatpush1.bf16.msra.mxu0 0
        %2340 = vmatprep.subr.bf16.mxu0 0
        %2341 = vmatpush1.bf16.msra.mxu0 0
        %2342 = vmatprep.mubr.bf16.mxu0 0
        %2343 = vmatmul.mubr.bf16.gmra.mrb[0].mxu0 %v2254
        %v2344 = vpop.f32.mrb[0].mxu0
        %v2345 = vpop.f32.mrb[0].mxu0
        %v2346 = vadd.f32 %v2251, %v2345
        %v2347 = vpop.f32.mrb[0].mxu0
        %v2348 = vpop.f32.mrb[0].mxu0
        %2349 = vdwg.mxu0
        %2350 = vmatprep.subr.bf16.mxu0 %v2160
        %2351 = vmatpush1.bf16.msra.mxu0 %v2159
        %2352 = vmatprep.subr.bf16.mxu0 %v2178
        %2353 = vmatpush1.bf16.msra.mxu0 %v2177
        %2354 = vmatprep.subr.bf16.mxu0 %v2196
        %2355 = vmatpush1.bf16.msra.mxu0 %v2195
        %2356 = vmatprep.subr.bf16.mxu0 %v2214
        %2357 = vmatpush1.bf16.msra.mxu0 %v2213
        %2358 = vmatprep.subr.bf16.mxu0 %v2266
        %2359 = vmatpush1.bf16.msra.mxu0 %v2263
        %2360 = vmatprep.subr.bf16.mxu0 0
        %2361 = vmatpush1.bf16.msra.mxu0 0
        %2362 = vmatprep.subr.bf16.mxu0 0
        %2363 = vmatpush1.bf16.msra.mxu0 0
        %2364 = vmatprep.subr.bf16.mxu0 0
        %2365 = vmatpush1.bf16.msra.mxu0 0
        %2366 = vmatprep.subr.bf16.mxu0 0
        %2367 = vmatpush1.bf16.msra.mxu0 0
        %2368 = vmatprep.subr.bf16.mxu0 0
        %2369 = vmatpush1.bf16.msra.mxu0 0
        %2370 = vmatprep.subr.bf16.mxu0 0
        %2371 = vmatpush1.bf16.msra.mxu0 0
        %2372 = vmatprep.subr.bf16.mxu0 0
        %2373 = vmatpush1.bf16.msra.mxu0 0
        %2374 = vmatprep.subr.bf16.mxu0 0
        %2375 = vmatpush1.bf16.msra.mxu0 0
        %2376 = vmatprep.subr.bf16.mxu0 0
        %2377 = vmatpush1.bf16.msra.mxu0 0
        %2378 = vmatprep.subr.bf16.mxu0 0
        %2379 = vmatpush1.bf16.msra.mxu0 0
        %2380 = vmatprep.subr.bf16.mxu0 0
        %2381 = vmatpush1.bf16.msra.mxu0 0
        %2382 = vmatprep.mubr.bf16.mxu0 0
        %2383 = vmatmul.mubr.bf16.gmra.mrb[0].mxu0 %v2254
        %v2384 = vpop.f32.mrb[0].mxu0
        %v2385 = vadd.f32 %v2251, %v2384
        %v2386 = vpop.f32.mrb[0].mxu0
        %v2387 = vadd.f32 %v2251, %v2386
        %v2388 = vpop.f32.mrb[0].mxu0
        %v2389 = vpop.f32.mrb[0].mxu0
        %2390 = vdwg.mxu0
        %2391 = vmatprep.subr.bf16.mxu0 %v2162
        %2392 = vmatpush1.bf16.msra.mxu0 %v2161
        %2393 = vmatprep.subr.bf16.mxu0 %v2180
        %2394 = vmatpush1.bf16.msra.mxu0 %v2179
        %2395 = vmatprep.subr.bf16.mxu0 %v2198
        %2396 = vmatpush1.bf16.msra.mxu0 %v2197
        %2397 = vmatprep.subr.bf16.mxu0 %v2216
        %2398 = vmatpush1.bf16.msra.mxu0 %v2215
        %2399 = vmatprep.subr.bf16.mxu0 %v2272
        %2400 = vmatpush1.bf16.msra.mxu0 %v2269
        %2401 = vmatprep.subr.bf16.mxu0 0
        %2402 = vmatpush1.bf16.msra.mxu0 0
        %2403 = vmatprep.subr.bf16.mxu0 0
        %2404 = vmatpush1.bf16.msra.mxu0 0
        %2405 = vmatprep.subr.bf16.mxu0 0
        %2406 = vmatpush1.bf16.msra.mxu0 0
        %2407 = vmatprep.subr.bf16.mxu0 0
        %2408 = vmatpush1.bf16.msra.mxu0 0
        %2409 = vmatprep.subr.bf16.mxu0 0
        %2410 = vmatpush1.bf16.msra.mxu0 0
        %2411 = vmatprep.subr.bf16.mxu0 0
        %2412 = vmatpush1.bf16.msra.mxu0 0
        %2413 = vmatprep.subr.bf16.mxu0 0
        %2414 = vmatpush1.bf16.msra.mxu0 0
        %2415 = vmatprep.subr.bf16.mxu0 0
        %2416 = vmatpush1.bf16.msra.mxu0 0
        %2417 = vmatprep.subr.bf16.mxu0 0
        %2418 = vmatpush1.bf16.msra.mxu0 0
        %2419 = vmatprep.subr.bf16.mxu0 0
        %2420 = vmatpush1.bf16.msra.mxu0 0
        %2421 = vmatprep.subr.bf16.mxu0 0
        %2422 = vmatpush1.bf16.msra.mxu0 0
        %2423 = vmatprep.mubr.bf16.mxu0 0
        %2424 = vmatmul.mubr.bf16.gmra.mrb[0].mxu0 %v2254
        %v2425 = vpop.f32.mrb[0].mxu0
        %v2426 = vadd.f32 %v2251, %v2425
        %v2427 = vpop.f32.mrb[0].mxu0
        %v2428 = vadd.f32 %v2251, %v2427
        %v2429 = vpop.f32.mrb[0].mxu0
        %v2430 = vpop.f32.mrb[0].mxu0
        %2431 = vdwg.mxu0
        %2432 = vmatprep.subr.bf16.mxu0 %v2164
        %2433 = vmatpush1.bf16.msra.mxu0 %v2163
        %2434 = vmatprep.subr.bf16.mxu0 %v2182
        %2435 = vmatpush1.bf16.msra.mxu0 %v2181
        %2436 = vmatprep.subr.bf16.mxu0 %v2200
        %2437 = vmatpush1.bf16.msra.mxu0 %v2199
        %2438 = vmatprep.subr.bf16.mxu0 %v2218
        %2439 = vmatpush1.bf16.msra.mxu0 %v2217
        %2440 = vmatprep.subr.bf16.mxu0 %v2278
        %2441 = vmatpush1.bf16.msra.mxu0 %v2275
        %2442 = vmatprep.subr.bf16.mxu0 0
        %2443 = vmatpush1.bf16.msra.mxu0 0
        %2444 = vmatprep.subr.bf16.mxu0 0
        %2445 = vmatpush1.bf16.msra.mxu0 0
        %2446 = vmatprep.subr.bf16.mxu0 0
        %2447 = vmatpush1.bf16.msra.mxu0 0
        %2448 = vmatprep.subr.bf16.mxu0 0
        %2449 = vmatpush1.bf16.msra.mxu0 0
        %2450 = vmatprep.subr.bf16.mxu0 0
        %2451 = vmatpush1.bf16.msra.mxu0 0
        %2452 = vmatprep.subr.bf16.mxu0 0
        %2453 = vmatpush1.bf16.msra.mxu0 0
        %2454 = vmatprep.subr.bf16.mxu0 0
        %2455 = vmatpush1.bf16.msra.mxu0 0
        %2456 = vmatprep.subr.bf16.mxu0 0
        %2457 = vmatpush1.bf16.msra.mxu0 0
        %2458 = vmatprep.subr.bf16.mxu0 0
        %2459 = vmatpush1.bf16.msra.mxu0 0
        %2460 = vmatprep.subr.bf16.mxu0 0
        %2461 = vmatpush1.bf16.msra.mxu0 0
        %2462 = vmatprep.subr.bf16.mxu0 0
        %2463 = vmatpush1.bf16.msra.mxu0 0
        %2464 = vmatprep.mubr.bf16.mxu0 0
        %2465 = vmatmul.mubr.bf16.gmra.mrb[0].mxu0 %v2254
        %v2466 = vpop.f32.mrb[0].mxu0
        %v2467 = vadd.f32 %v2251, %v2466
        %v2468 = vpop.f32.mrb[0].mxu0
        %v2469 = vadd.f32 %v2251, %v2468
        %v2470 = vpop.f32.mrb[0].mxu0
        %v2471 = vpop.f32.mrb[0].mxu0
        %2472 = vdwg.mxu0
        %2473 = vmatprep.subr.bf16.mxu0 %v2166
        %2474 = vmatpush1.bf16.msra.mxu0 %v2165
        %2475 = vmatprep.subr.bf16.mxu0 %v2184
        %2476 = vmatpush1.bf16.msra.mxu0 %v2183
        %2477 = vmatprep.subr.bf16.mxu0 %v2202
        %2478 = vmatpush1.bf16.msra.mxu0 %v2201
        %2479 = vmatprep.subr.bf16.mxu0 %v2220
        %2480 = vmatpush1.bf16.msra.mxu0 %v2219
        %2481 = vmatprep.subr.bf16.mxu0 %v2284
        %2482 = vmatpush1.bf16.msra.mxu0 %v2281
        %2483 = vmatprep.subr.bf16.mxu0 0
        %2484 = vmatpush1.bf16.msra.mxu0 0
        %2485 = vmatprep.subr.bf16.mxu0 0
        %2486 = vmatpush1.bf16.msra.mxu0 0
        %2487 = vmatprep.subr.bf16.mxu0 0
        %2488 = vmatpush1.bf16.msra.mxu0 0
        %2489 = vmatprep.subr.bf16.mxu0 0
        %2490 = vmatpush1.bf16.msra.mxu0 0
        %2491 = vmatprep.subr.bf16.mxu0 0
        %2492 = vmatpush1.bf16.msra.mxu0 0
        %2493 = vmatprep.subr.bf16.mxu0 0
        %2494 = vmatpush1.bf16.msra.mxu0 0
        %2495 = vmatprep.subr.bf16.mxu0 0
        %2496 = vmatpush1.bf16.msra.mxu0 0
        %2497 = vmatprep.subr.bf16.mxu0 0
        %2498 = vmatpush1.bf16.msra.mxu0 0
        %2499 = vmatprep.subr.bf16.mxu0 0
        %2500 = vmatpush1.bf16.msra.mxu0 0
        %2501 = vmatprep.subr.bf16.mxu0 0
        %2502 = vmatpush1.bf16.msra.mxu0 0
        %2503 = vmatprep.subr.bf16.mxu0 0
        %2504 = vmatpush1.bf16.msra.mxu0 0
        %2505 = vmatprep.mubr.bf16.mxu0 0
        %2506 = vmatmul.mubr.bf16.gmra.mrb[0].mxu0 %v2254
        %v2507 = vpop.f32.mrb[0].mxu0
        %v2508 = vadd.f32 %v2251, %v2507
        %v2509 = vpop.f32.mrb[0].mxu0
        %v2510 = vadd.f32 %v2251, %v2509
        %v2511 = vpop.f32.mrb[0].mxu0
        %v2512 = vpop.f32.mrb[0].mxu0
        %2513 = vdwg.mxu0
        %2514 = vmatprep.subr.bf16.mxu0 %v2168
        %2515 = vmatpush1.bf16.msra.mxu0 %v2167
        %2516 = vmatprep.subr.bf16.mxu0 %v2186
        %2517 = vmatpush1.bf16.msra.mxu0 %v2185
        %2518 = vmatprep.subr.bf16.mxu0 %v2204
        %2519 = vmatpush1.bf16.msra.mxu0 %v2203
        %2520 = vmatprep.subr.bf16.mxu0 %v2222
        %2521 = vmatpush1.bf16.msra.mxu0 %v2221
        %2522 = vmatprep.subr.bf16.mxu0 %v2290
        %2523 = vmatpush1.bf16.msra.mxu0 %v2287
        %2524 = vmatprep.subr.bf16.mxu0 0
        %2525 = vmatpush1.bf16.msra.mxu0 0
        %2526 = vmatprep.subr.bf16.mxu0 0
        %2527 = vmatpush1.bf16.msra.mxu0 0
        %2528 = vmatprep.subr.bf16.mxu0 0
        %2529 = vmatpush1.bf16.msra.mxu0 0
        %2530 = vmatprep.subr.bf16.mxu0 0
        %2531 = vmatpush1.bf16.msra.mxu0 0
        %2532 = vmatprep.subr.bf16.mxu0 0
        %2533 = vmatpush1.bf16.msra.mxu0 0
        %2534 = vmatprep.subr.bf16.mxu0 0
        %2535 = vmatpush1.bf16.msra.mxu0 0
        %2536 = vmatprep.subr.bf16.mxu0 0
        %2537 = vmatpush1.bf16.msra.mxu0 0
        %2538 = vmatprep.subr.bf16.mxu0 0
        %2539 = vmatpush1.bf16.msra.mxu0 0
        %2540 = vmatprep.subr.bf16.mxu0 0
        %2541 = vmatpush1.bf16.msra.mxu0 0
        %2542 = vmatprep.subr.bf16.mxu0 0
        %2543 = vmatpush1.bf16.msra.mxu0 0
        %2544 = vmatprep.subr.bf16.mxu0 0
        %2545 = vmatpush1.bf16.msra.mxu0 0
        %2546 = vmatprep.mubr.bf16.mxu0 0
        %2547 = vmatmul.mubr.bf16.gmra.mrb[0].mxu0 %v2254
        %v2548 = vpop.f32.mrb[0].mxu0
        %v2549 = vadd.f32 %v2251, %v2548
        %v2550 = vpop.f32.mrb[0].mxu0
        %v2551 = vadd.f32 %v2251, %v2550
        %v2552 = vpop.f32.mrb[0].mxu0
        %v2553 = vpop.f32.mrb[0].mxu0
        %2554 = vdwg.mxu0
        %2555 = vmatprep.subr.bf16.mxu0 %v2170
        %2556 = vmatpush1.bf16.msra.mxu0 %v2169
        %2557 = vmatprep.subr.bf16.mxu0 %v2188
        %2558 = vmatpush1.bf16.msra.mxu0 %v2187
        %2559 = vmatprep.subr.bf16.mxu0 %v2206
        %2560 = vmatpush1.bf16.msra.mxu0 %v2205
        %2561 = vmatprep.subr.bf16.mxu0 %v2224
        %2562 = vmatpush1.bf16.msra.mxu0 %v2223
        %2563 = vmatprep.subr.bf16.mxu0 %v2296
        %2564 = vmatpush1.bf16.msra.mxu0 %v2293
        %2565 = vmatprep.subr.bf16.mxu0 0
        %2566 = vmatpush1.bf16.msra.mxu0 0
        %2567 = vmatprep.subr.bf16.mxu0 0
        %2568 = vmatpush1.bf16.msra.mxu0 0
        %2569 = vmatprep.subr.bf16.mxu0 0
        %2570 = vmatpush1.bf16.msra.mxu0 0
        %2571 = vmatprep.subr.bf16.mxu0 0
        %2572 = vmatpush1.bf16.msra.mxu0 0
        %2573 = vmatprep.subr.bf16.mxu0 0
        %2574 = vmatpush1.bf16.msra.mxu0 0
        %2575 = vmatprep.subr.bf16.mxu0 0
        %2576 = vmatpush1.bf16.msra.mxu0 0
        %2577 = vmatprep.subr.bf16.mxu0 0
        %2578 = vmatpush1.bf16.msra.mxu0 0
        %2579 = vmatprep.subr.bf16.mxu0 0
        %2580 = vmatpush1.bf16.msra.mxu0 0
        %2581 = vmatprep.subr.bf16.mxu0 0
        %2582 = vmatpush1.bf16.msra.mxu0 0
        %2583 = vmatprep.subr.bf16.mxu0 0
        %2584 = vmatpush1.bf16.msra.mxu0 0
        %2585 = vmatprep.subr.bf16.mxu0 0
        %2586 = vmatpush1.bf16.msra.mxu0 0
        %2587 = vmatprep.mubr.bf16.mxu0 0
        %2588 = vmatmul.mubr.bf16.gmra.mrb[0].mxu0 %v2254
        %v2589 = vpop.f32.mrb[0].mxu0
        %v2590 = vadd.f32 %v2251, %v2589
        %v2591 = vpop.f32.mrb[0].mxu0
        %v2592 = vadd.f32 %v2251, %v2591
        %v2593 = vpop.f32.mrb[0].mxu0
        %v2594 = vpop.f32.mrb[0].mxu0
        %2595 = vdwg.mxu0
        %2596 = vmatprep.subr.bf16.mxu0 %v2172
        %2597 = vmatpush1.bf16.msra.mxu0 %v2171
        %2598 = vmatprep.subr.bf16.mxu0 %v2190
        %2599 = vmatpush1.bf16.msra.mxu0 %v2189
        %2600 = vmatprep.subr.bf16.mxu0 %v2208
        %2601 = vmatpush1.bf16.msra.mxu0 %v2207
        %2602 = vmatprep.subr.bf16.mxu0 %v2226
        %2603 = vmatpush1.bf16.msra.mxu0 %v2225
        %2604 = vmatprep.subr.bf16.mxu0 %v2302
        %2605 = vmatpush1.bf16.msra.mxu0 %v2299
        %2606 = vmatprep.subr.bf16.mxu0 0
        %2607 = vmatpush1.bf16.msra.mxu0 0
        %2608 = vmatprep.subr.bf16.mxu0 0
        %2609 = vmatpush1.bf16.msra.mxu0 0
        %2610 = vmatprep.subr.bf16.mxu0 0
        %2611 = vmatpush1.bf16.msra.mxu0 0
        %2612 = vmatprep.subr.bf16.mxu0 0
        %2613 = vmatpush1.bf16.msra.mxu0 0
        %2614 = vmatprep.subr.bf16.mxu0 0
        %2615 = vmatpush1.bf16.msra.mxu0 0
        %2616 = vmatprep.subr.bf16.mxu0 0
        %2617 = vmatpush1.bf16.msra.mxu0 0
        %2618 = vmatprep.subr.bf16.mxu0 0
        %2619 = vmatpush1.bf16.msra.mxu0 0
        %2620 = vmatprep.subr.bf16.mxu0 0
        %2621 = vmatpush1.bf16.msra.mxu0 0
        %2622 = vmatprep.subr.bf16.mxu0 0
        %2623 = vmatpush1.bf16.msra.mxu0 0
        %2624 = vmatprep.subr.bf16.mxu0 0
        %2625 = vmatpush1.bf16.msra.mxu0 0
        %2626 = vmatprep.subr.bf16.mxu0 0
        %2627 = vmatpush1.bf16.msra.mxu0 0
        %2628 = vmatprep.mubr.bf16.mxu0 0
        %2629 = vmatmul.mubr.bf16.gmra.mrb[0].mxu0 %v2254
        %v2630 = vpop.f32.mrb[0].mxu0
        %v2631 = vadd.f32 %v2251, %v2630
        %v2632 = vpop.f32.mrb[0].mxu0
        %v2633 = vadd.f32 %v2251, %v2632
        %v2634 = vpop.f32.mrb[0].mxu0
        %v2635 = vpop.f32.mrb[0].mxu0
        %2636 = vdwg.mxu0
        %2637 = vmatprep.subr.bf16.mxu0 %v2174
        %2638 = vmatpush1.bf16.msra.mxu0 %v2173
        %2639 = vmatprep.subr.bf16.mxu0 %v2192
        %2640 = vmatpush1.bf16.msra.mxu0 %v2191
        %2641 = vmatprep.subr.bf16.mxu0 %v2210
        %2642 = vmatpush1.bf16.msra.mxu0 %v2209
        %2643 = vmatprep.subr.bf16.mxu0 %v2228
        %2644 = vmatpush1.bf16.msra.mxu0 %v2227
        %2645 = vmatprep.subr.bf16.mxu0 %v2308
        %2646 = vmatpush1.bf16.msra.mxu0 %v2305
        %2647 = vmatprep.subr.bf16.mxu0 0
        %2648 = vmatpush1.bf16.msra.mxu0 0
        %2649 = vmatprep.subr.bf16.mxu0 0
        %2650 = vmatpush1.bf16.msra.mxu0 0
        %2651 = vmatprep.subr.bf16.mxu0 0
        %2652 = vmatpush1.bf16.msra.mxu0 0
        %2653 = vmatprep.subr.bf16.mxu0 0
        %2654 = vmatpush1.bf16.msra.mxu0 0
        %2655 = vmatprep.subr.bf16.mxu0 0
        %2656 = vmatpush1.bf16.msra.mxu0 0
        %2657 = vmatprep.subr.bf16.mxu0 0
        %2658 = vmatpush1.bf16.msra.mxu0 0
        %2659 = vmatprep.subr.bf16.mxu0 0
        %2660 = vmatpush1.bf16.msra.mxu0 0
        %2661 = vmatprep.subr.bf16.mxu0 0
        %2662 = vmatpush1.bf16.msra.mxu0 0
        %2663 = vmatprep.subr.bf16.mxu0 0
        %2664 = vmatpush1.bf16.msra.mxu0 0
        %2665 = vmatprep.subr.bf16.mxu0 0
        %2666 = vmatpush1.bf16.msra.mxu0 0
        %2667 = vmatprep.subr.bf16.mxu0 0
        %2668 = vmatpush1.bf16.msra.mxu0 0
        %2669 = vmatprep.mubr.bf16.mxu0 0
        %2670 = vmatmul.mubr.bf16.gmra.mrb[0].mxu0 %v2254
        %v2671 = vpop.f32.mrb[0].mxu0
        %v2672 = vadd.f32 %v2251, %v2671
        %v2673 = vpop.f32.mrb[0].mxu0
        %v2674 = vpop.f32.mrb[0].mxu0
        %v2675 = vpop.f32.mrb[0].mxu0
        %2676 = vdwg.mxu0
        %v2677 = vmax.f32 %v2346, 0.0
        %v2678 = vmax.f32 %v2385, 0.0
        %v2679 = vmax.f32 %v2387, 0.0
        %v2680 = vmax.f32 %v2426, 0.0
        %v2681 = vmax.f32 %v2428, 0.0
        %v2682 = vmax.f32 %v2467, 0.0
        %v2683 = vmax.f32 %v2469, 0.0
        %v2684 = vmax.f32 %v2508, 0.0
        %v2685 = vmax.f32 %v2510, 0.0
        %v2686 = vmax.f32 %v2549, 0.0
        %v2687 = vmax.f32 %v2551, 0.0
        %v2688 = vmax.f32 %v2590, 0.0
        %v2689 = vmax.f32 %v2592, 0.0
        %v2690 = vmax.f32 %v2631, 0.0
        %v2691 = vmax.f32 %v2633, 0.0
        %v2692 = vmax.f32 %v2672, 0.0
        %v2693 = vpack.c.bf16 %v2677, %v2677
        %v2694 = vpack.c.bf16 %v2678, %v2678
        %v2695 = vpack.c.bf16 %v2679, %v2679
        %v2696 = vpack.c.bf16 %v2680, %v2680
        %v2697 = vpack.c.bf16 %v2681, %v2681
        %v2698 = vpack.c.bf16 %v2682, %v2682
        %v2699 = vpack.c.bf16 %v2683, %v2683
        %v2700 = vpack.c.bf16 %v2684, %v2684
        %v2701 = vpack.c.bf16 %v2685, %v2685
        %v2702 = vpack.c.bf16 %v2686, %v2686
        %v2703 = vpack.c.bf16 %v2687, %v2687
        %v2704 = vpack.c.bf16 %v2688, %v2688
        %v2705 = vpack.c.bf16 %v2689, %v2689
        %v2706 = vpack.c.bf16 %v2690, %v2690
        %v2707 = vpack.c.bf16 %v2691, %v2691
        %v2708 = vpack.c.bf16 %v2692, %v2692
        %v2709 = vld [vmem:[%s11] sm:$0xf]
        %v2710 = vld [vmem:[%s11 + $0x4] sm:$0xf]
        %v2711 = vld [vmem:[%s11 + $0x8] sm:$0xf]
        %v2712 = vld [vmem:[%s11 + $0xc] sm:$0xf]
        %v2713 = vld [vmem:[%s11 + $0x10] sm:$0xf]
        %v2714 = vld [vmem:[%s11 + $0x14] sm:$0xf]
        %v2715 = vld [vmem:[%s11 + $0x18] sm:$0xf]
        %v2716 = vld [vmem:[%s11 + $0x1c] sm:$0xf]
        %v2717 = vld [vmem:[%s11 + $0x20] sm:$0xf]
        %v2718 = vld [vmem:[%s11 + $0x24] sm:$0xf]
        %v2719 = vld [vmem:[%s11 + $0x28] sm:$0xf]
        %v2720 = vld [vmem:[%s11 + $0x2c] sm:$0xf]
        %v2721 = vld [vmem:[%s11 + $0x30] sm:$0xf]
        %v2722 = vld [vmem:[%s11 + $0x34] sm:$0xf]
        %v2723 = vld [vmem:[%s11 + $0x38] sm:$0xf]
        %v2724 = vld [vmem:[%s11 + $0x3c] sm:$0xf]
        %2725 = vst [vmem:[#allocation3] sm:$0xf] 0
        %2726 = vst [vmem:[#allocation3 + $0x48] sm:$0xf] 0
        %v2727 = vadd.bf16 %v2693, %v2694
        %v2744 = vunpack.c.l.b16 %v2709
        %v2745 = vunpack.c.l.b16 %v2710
        %v2746 = vunpack.c.l.b16 %v2711
        %v2747 = vunpack.c.l.b16 %v2712
        %v2748 = vunpack.c.l.b16 %v2713
        %v2749 = vunpack.c.l.b16 %v2714
        %v2750 = vunpack.c.l.b16 %v2715
        %v2751 = vunpack.c.l.b16 %v2716
        %v2752 = vunpack.c.l.b16 %v2717
        %v2753 = vunpack.c.l.b16 %v2718
        %v2754 = vunpack.c.l.b16 %v2719
        %v2755 = vunpack.c.l.b16 %v2720
        %v2756 = vunpack.c.l.b16 %v2721
        %v2757 = vunpack.c.l.b16 %v2722
        %v2758 = vunpack.c.l.b16 %v2723
        %v2759 = vunpack.c.l.b16 %v2724
        %v2760 = vpack.c.b16 %v2745, %v2744
        %v2761 = vpack.c.b16 %v2747, %v2746
        %v2762 = vpack.c.b16 %v2749, %v2748
        %v2763 = vpack.c.b16 %v2751, %v2750
        %v2764 = vpack.c.b16 %v2753, %v2752
        %v2765 = vpack.c.b16 %v2755, %v2754
        %v2766 = vpack.c.b16 %v2757, %v2756
        %v2767 = vpack.c.b16 %v2759, %v2758
        %2776 = vmatprep.subr.bf16.mxu0 0
        %2777 = vmatpush1.bf16.msra.mxu0 %v2760
        %2778 = vmatprep.subr.bf16.mxu0 0
        %2779 = vmatpush1.bf16.msra.mxu0 %v2761
        %2780 = vmatprep.subr.bf16.mxu0 0
        %2781 = vmatpush1.bf16.msra.mxu0 %v2762
        %2782 = vmatprep.subr.bf16.mxu0 0
        %2783 = vmatpush1.bf16.msra.mxu0 %v2763
        %2784 = vmatprep.subr.bf16.mxu0 0
        %2785 = vmatpush1.bf16.msra.mxu0 %v2764
        %2786 = vmatprep.subr.bf16.mxu0 0
        %2787 = vmatpush1.bf16.msra.mxu0 %v2765
        %2788 = vmatprep.subr.bf16.mxu0 0
        %2789 = vmatpush1.bf16.msra.mxu0 %v2766
        %2790 = vmatprep.subr.bf16.mxu0 0
        %2791 = vmatpush1.bf16.msra.mxu0 %v2767
        %2792 = vmatprep.subr.bf16.mxu0 0
        %2793 = vmatpush1.bf16.msra.mxu0 0
        %2794 = vmatprep.subr.bf16.mxu0 0
        %2795 = vmatpush1.bf16.msra.mxu0 0
        %2796 = vmatprep.subr.bf16.mxu0 0
        %2797 = vmatpush1.bf16.msra.mxu0 0
        %2798 = vmatprep.subr.bf16.mxu0 0
        %2799 = vmatpush1.bf16.msra.mxu0 0
        %2800 = vmatprep.subr.bf16.mxu0 0
        %2801 = vmatpush1.bf16.msra.mxu0 0
        %2802 = vmatprep.subr.bf16.mxu0 0
        %2803 = vmatpush1.bf16.msra.mxu0 0
        %2804 = vmatprep.subr.bf16.mxu0 0
        %2805 = vmatpush1.bf16.msra.mxu0 0
        %2806 = vmatprep.subr.bf16.mxu0 0
        %2807 = vmatpush1.bf16.msra.mxu0 0
        %2808 = vmatprep.mubr.bf16.mxu0 0
        %2809 = vmatmul.mubr.bf16.gmra.mrb[0].mxu0 %v2727
        %v2810 = vpop.f32.mrb[0].mxu0
        %v2811 = vadd.f32 0.0, %v2810
        %v2812 = vpop.f32.mrb[0].mxu0
        %v2813 = vpop.f32.mrb[0].mxu0
        %v2814 = vpop.f32.mrb[0].mxu0
        %2815 = vdwg.mxu0
        %v2816 = vmul.f32 %v2811, 0.5
        %v2817 = vpack.c.bf16 %v2816, %v2816
        %2818 = vst [vmem:[#allocation3 + $0x8] sm:$0xf] %v2817
        %v2819 = vadd.bf16 %v2695, %v2696
        %2820 = vmatprep.subr.bf16.mxu0 0
        %2821 = vmatpush1.bf16.msra.mxu0 %v2760
        %2822 = vmatprep.subr.bf16.mxu0 0
        %2823 = vmatpush1.bf16.msra.mxu0 %v2761
        %2824 = vmatprep.subr.bf16.mxu0 0
        %2825 = vmatpush1.bf16.msra.mxu0 %v2762
        %2826 = vmatprep.subr.bf16.mxu0 0
        %2827 = vmatpush1.bf16.msra.mxu0 %v2763
        %2828 = vmatprep.subr.bf16.mxu0 0
        %2829 = vmatpush1.bf16.msra.mxu0 %v2764
        %2830 = vmatprep.subr.bf16.mxu0 0
        %2831 = vmatpush1.bf16.msra.mxu0 %v2765
        %2832 = vmatprep.subr.bf16.mxu0 0
        %2833 = vmatpush1.bf16.msra.mxu0 %v2766
        %2834 = vmatprep.subr.bf16.mxu0 0
        %2835 = vmatpush1.bf16.msra.mxu0 %v2767
        %2836 = vmatprep.subr.bf16.mxu0 0
        %2837 = vmatpush1.bf16.msra.mxu0 0
        %2838 = vmatprep.subr.bf16.mxu0 0
        %2839 = vmatpush1.bf16.msra.mxu0 0
        %2840 = vmatprep.subr.bf16.mxu0 0
        %2841 = vmatpush1.bf16.msra.mxu0 0
        %2842 = vmatprep.subr.bf16.mxu0 0
        %2843 = vmatpush1.bf16.msra.mxu0 0
        %2844 = vmatprep.subr.bf16.mxu0 0
        %2845 = vmatpush1.bf16.msra.mxu0 0
        %2846 = vmatprep.subr.bf16.mxu0 0
        %2847 = vmatpush1.bf16.msra.mxu0 0
        %2848 = vmatprep.subr.bf16.mxu0 0
        %2849 = vmatpush1.bf16.msra.mxu0 0
        %2850 = vmatprep.subr.bf16.mxu0 0
        %2851 = vmatpush1.bf16.msra.mxu0 0
        %2852 = vmatprep.mubr.bf16.mxu0 0
        %2853 = vmatmul.mubr.bf16.gmra.mrb[0].mxu0 %v2819
        %v2854 = vpop.f32.mrb[0].mxu0
        %v2855 = vadd.f32 0.0, %v2854
        %v2856 = vpop.f32.mrb[0].mxu0
        %v2857 = vpop.f32.mrb[0].mxu0
        %v2858 = vpop.f32.mrb[0].mxu0
        %2859 = vdwg.mxu0
        %v2860 = vmul.f32 %v2855, 0.5
        %v2861 = vpack.c.bf16 %v2860, %v2860
        %2862 = vst [vmem:[#allocation3 + $0x10] sm:$0xf] %v2861
        %v2863 = vadd.bf16 %v2697, %v2698
        %2864 = vmatprep.subr.bf16.mxu0 0
        %2865 = vmatpush1.bf16.msra.mxu0 %v2760
        %2866 = vmatprep.subr.bf16.mxu0 0
        %2867 = vmatpush1.bf16.msra.mxu0 %v2761
        %2868 = vmatprep.subr.bf16.mxu0 0
        %2869 = vmatpush1.bf16.msra.mxu0 %v2762
        %2870 = vmatprep.subr.bf16.mxu0 0
        %2871 = vmatpush1.bf16.msra.mxu0 %v2763
        %2872 = vmatprep.subr.bf16.mxu0 0
        %2873 = vmatpush1.bf16.msra.mxu0 %v2764
        %2874 = vmatprep.subr.bf16.mxu0 0
        %2875 = vmatpush1.bf16.msra.mxu0 %v2765
        %2876 = vmatprep.subr.bf16.mxu0 0
        %2877 = vmatpush1.bf16.msra.mxu0 %v2766
        %2878 = vmatprep.subr.bf16.mxu0 0
        %2879 = vmatpush1.bf16.msra.mxu0 %v2767
        %2880 = vmatprep.subr.bf16.mxu0 0
        %2881 = vmatpush1.bf16.msra.mxu0 0
        %2882 = vmatprep.subr.bf16.mxu0 0
        %2883 = vmatpush1.bf16.msra.mxu0 0
        %2884 = vmatprep.subr.bf16.mxu0 0
        %2885 = vmatpush1.bf16.msra.mxu0 0
        %2886 = vmatprep.subr.bf16.mxu0 0
        %2887 = vmatpush1.bf16.msra.mxu0 0
        %2888 = vmatprep.subr.bf16.mxu0 0
        %2889 = vmatpush1.bf16.msra.mxu0 0
        %2890 = vmatprep.subr.bf16.mxu0 0
        %2891 = vmatpush1.bf16.msra.mxu0 0
        %2892 = vmatprep.subr.bf16.mxu0 0
        %2893 = vmatpush1.bf16.msra.mxu0 0
        %2894 = vmatprep.subr.bf16.mxu0 0
        %2895 = vmatpush1.bf16.msra.mxu0 0
        %2896 = vmatprep.mubr.bf16.mxu0 0
        %2897 = vmatmul.mubr.bf16.gmra.mrb[0].mxu0 %v2863
        %v2898 = vpop.f32.mrb[0].mxu0
        %v2899 = vadd.f32 0.0, %v2898
        %v2900 = vpop.f32.mrb[0].mxu0
        %v2901 = vpop.f32.mrb[0].mxu0
        %v2902 = vpop.f32.mrb[0].mxu0
        %2903 = vdwg.mxu0
        %v2904 = vmul.f32 %v2899, 0.5
        %v2905 = vpack.c.bf16 %v2904, %v2904
        %2906 = vst [vmem:[#allocation3 + $0x18] sm:$0xf] %v2905
        %v2907 = vadd.bf16 %v2699, %v2700
        %2908 = vmatprep.subr.bf16.mxu0 0
        %2909 = vmatpush1.bf16.msra.mxu0 %v2760
        %2910 = vmatprep.subr.bf16.mxu0 0
        %2911 = vmatpush1.bf16.msra.mxu0 %v2761
        %2912 = vmatprep.subr.bf16.mxu0 0
        %2913 = vmatpush1.bf16.msra.mxu0 %v2762
        %2914 = vmatprep.subr.bf16.mxu0 0
        %2915 = vmatpush1.bf16.msra.mxu0 %v2763
        %2916 = vmatprep.subr.bf16.mxu0 0
        %2917 = vmatpush1.bf16.msra.mxu0 %v2764
        %2918 = vmatprep.subr.bf16.mxu0 0
        %2919 = vmatpush1.bf16.msra.mxu0 %v2765
        %2920 = vmatprep.subr.bf16.mxu0 0
        %2921 = vmatpush1.bf16.msra.mxu0 %v2766
        %2922 = vmatprep.subr.bf16.mxu0 0
        %2923 = vmatpush1.bf16.msra.mxu0 %v2767
        %2924 = vmatprep.subr.bf16.mxu0 0
        %2925 = vmatpush1.bf16.msra.mxu0 0
        %2926 = vmatprep.subr.bf16.mxu0 0
        %2927 = vmatpush1.bf16.msra.mxu0 0
        %2928 = vmatprep.subr.bf16.mxu0 0
        %2929 = vmatpush1.bf16.msra.mxu0 0
        %2930 = vmatprep.subr.bf16.mxu0 0
        %2931 = vmatpush1.bf16.msra.mxu0 0
        %2932 = vmatprep.subr.bf16.mxu0 0
        %2933 = vmatpush1.bf16.msra.mxu0 0
        %2934 = vmatprep.subr.bf16.mxu0 0
        %2935 = vmatpush1.bf16.msra.mxu0 0
        %2936 = vmatprep.subr.bf16.mxu0 0
        %2937 = vmatpush1.bf16.msra.mxu0 0
        %2938 = vmatprep.subr.bf16.mxu0 0
        %2939 = vmatpush1.bf16.msra.mxu0 0
        %2940 = vmatprep.mubr.bf16.mxu0 0
        %2941 = vmatmul.mubr.bf16.gmra.mrb[0].mxu0 %v2907
        %v2942 = vpop.f32.mrb[0].mxu0
        %v2943 = vadd.f32 0.0, %v2942
        %v2944 = vpop.f32.mrb[0].mxu0
        %v2945 = vpop.f32.mrb[0].mxu0
        %v2946 = vpop.f32.mrb[0].mxu0
        %2947 = vdwg.mxu0
        %v2948 = vmul.f32 %v2943, 0.5
        %v2949 = vpack.c.bf16 %v2948, %v2948
        %2950 = vst [vmem:[#allocation3 + $0x20] sm:$0xf] %v2949
        %v2951 = vadd.bf16 %v2701, %v2702
        %2952 = vmatprep.subr.bf16.mxu0 0
        %2953 = vmatpush1.bf16.msra.mxu0 %v2760
        %2954 = vmatprep.subr.bf16.mxu0 0
        %2955 = vmatpush1.bf16.msra.mxu0 %v2761
        %2956 = vmatprep.subr.bf16.mxu0 0
        %2957 = vmatpush1.bf16.msra.mxu0 %v2762
        %2958 = vmatprep.subr.bf16.mxu0 0
        %2959 = vmatpush1.bf16.msra.mxu0 %v2763
        %2960 = vmatprep.subr.bf16.mxu0 0
        %2961 = vmatpush1.bf16.msra.mxu0 %v2764
        %2962 = vmatprep.subr.bf16.mxu0 0
        %2963 = vmatpush1.bf16.msra.mxu0 %v2765
        %2964 = vmatprep.subr.bf16.mxu0 0
        %2965 = vmatpush1.bf16.msra.mxu0 %v2766
        %2966 = vmatprep.subr.bf16.mxu0 0
        %2967 = vmatpush1.bf16.msra.mxu0 %v2767
        %2968 = vmatprep.subr.bf16.mxu0 0
        %2969 = vmatpush1.bf16.msra.mxu0 0
        %2970 = vmatprep.subr.bf16.mxu0 0
        %2971 = vmatpush1.bf16.msra.mxu0 0
        %2972 = vmatprep.subr.bf16.mxu0 0
        %2973 = vmatpush1.bf16.msra.mxu0 0
        %2974 = vmatprep.subr.bf16.mxu0 0
        %2975 = vmatpush1.bf16.msra.mxu0 0
        %2976 = vmatprep.subr.bf16.mxu0 0
        %2977 = vmatpush1.bf16.msra.mxu0 0
        %2978 = vmatprep.subr.bf16.mxu0 0
        %2979 = vmatpush1.bf16.msra.mxu0 0
        %2980 = vmatprep.subr.bf16.mxu0 0
        %2981 = vmatpush1.bf16.msra.mxu0 0
        %2982 = vmatprep.subr.bf16.mxu0 0
        %2983 = vmatpush1.bf16.msra.mxu0 0
        %2984 = vmatprep.mubr.bf16.mxu0 0
        %2985 = vmatmul.mubr.bf16.gmra.mrb[0].mxu0 %v2951
        %v2986 = vpop.f32.mrb[0].mxu0
        %v2987 = vadd.f32 0.0, %v2986
        %v2988 = vpop.f32.mrb[0].mxu0
        %v2989 = vpop.f32.mrb[0].mxu0
        %v2990 = vpop.f32.mrb[0].mxu0
        %2991 = vdwg.mxu0
        %v2992 = vmul.f32 %v2987, 0.5
        %v2993 = vpack.c.bf16 %v2992, %v2992
        %2994 = vst [vmem:[#allocation3 + $0x28] sm:$0xf] %v2993
        %v2995 = vadd.bf16 %v2703, %v2704
        %2996 = vmatprep.subr.bf16.mxu0 0
        %2997 = vmatpush1.bf16.msra.mxu0 %v2760
        %2998 = vmatprep.subr.bf16.mxu0 0
        %2999 = vmatpush1.bf16.msra.mxu0 %v2761
        %3000 = vmatprep.subr.bf16.mxu0 0
        %3001 = vmatpush1.bf16.msra.mxu0 %v2762
        %3002 = vmatprep.subr.bf16.mxu0 0
        %3003 = vmatpush1.bf16.msra.mxu0 %v2763
        %3004 = vmatprep.subr.bf16.mxu0 0
        %3005 = vmatpush1.bf16.msra.mxu0 %v2764
        %3006 = vmatprep.subr.bf16.mxu0 0
        %3007 = vmatpush1.bf16.msra.mxu0 %v2765
        %3008 = vmatprep.subr.bf16.mxu0 0
        %3009 = vmatpush1.bf16.msra.mxu0 %v2766
        %3010 = vmatprep.subr.bf16.mxu0 0
        %3011 = vmatpush1.bf16.msra.mxu0 %v2767
        %3012 = vmatprep.subr.bf16.mxu0 0
        %3013 = vmatpush1.bf16.msra.mxu0 0
        %3014 = vmatprep.subr.bf16.mxu0 0
        %3015 = vmatpush1.bf16.msra.mxu0 0
        %3016 = vmatprep.subr.bf16.mxu0 0
        %3017 = vmatpush1.bf16.msra.mxu0 0
        %3018 = vmatprep.subr.bf16.mxu0 0
        %3019 = vmatpush1.bf16.msra.mxu0 0
        %3020 = vmatprep.subr.bf16.mxu0 0
        %3021 = vmatpush1.bf16.msra.mxu0 0
        %3022 = vmatprep.subr.bf16.mxu0 0
        %3023 = vmatpush1.bf16.msra.mxu0 0
        %3024 = vmatprep.subr.bf16.mxu0 0
        %3025 = vmatpush1.bf16.msra.mxu0 0
        %3026 = vmatprep.subr.bf16.mxu0 0
        %3027 = vmatpush1.bf16.msra.mxu0 0
        %3028 = vmatprep.mubr.bf16.mxu0 0
        %3029 = vmatmul.mubr.bf16.gmra.mrb[0].mxu0 %v2995
        %v3030 = vpop.f32.mrb[0].mxu0
        %v3031 = vadd.f32 0.0, %v3030
        %v3032 = vpop.f32.mrb[0].mxu0
        %v3033 = vpop.f32.mrb[0].mxu0
        %v3034 = vpop.f32.mrb[0].mxu0
        %3035 = vdwg.mxu0
        %v3036 = vmul.f32 %v3031, 0.5
        %v3037 = vpack.c.bf16 %v3036, %v3036
        %3038 = vst [vmem:[#allocation3 + $0x30] sm:$0xf] %v3037
        %v3039 = vadd.bf16 %v2705, %v2706
        %3040 = vmatprep.subr.bf16.mxu0 0
        %3041 = vmatpush1.bf16.msra.mxu0 %v2760
        %3042 = vmatprep.subr.bf16.mxu0 0
        %3043 = vmatpush1.bf16.msra.mxu0 %v2761
        %3044 = vmatprep.subr.bf16.mxu0 0
        %3045 = vmatpush1.bf16.msra.mxu0 %v2762
        %3046 = vmatprep.subr.bf16.mxu0 0
        %3047 = vmatpush1.bf16.msra.mxu0 %v2763
        %3048 = vmatprep.subr.bf16.mxu0 0
        %3049 = vmatpush1.bf16.msra.mxu0 %v2764
        %3050 = vmatprep.subr.bf16.mxu0 0
        %3051 = vmatpush1.bf16.msra.mxu0 %v2765
        %3052 = vmatprep.subr.bf16.mxu0 0
        %3053 = vmatpush1.bf16.msra.mxu0 %v2766
        %3054 = vmatprep.subr.bf16.mxu0 0
        %3055 = vmatpush1.bf16.msra.mxu0 %v2767
        %3056 = vmatprep.subr.bf16.mxu0 0
        %3057 = vmatpush1.bf16.msra.mxu0 0
        %3058 = vmatprep.subr.bf16.mxu0 0
        %3059 = vmatpush1.bf16.msra.mxu0 0
        %3060 = vmatprep.subr.bf16.mxu0 0
        %3061 = vmatpush1.bf16.msra.mxu0 0
        %3062 = vmatprep.subr.bf16.mxu0 0
        %3063 = vmatpush1.bf16.msra.mxu0 0
        %3064 = vmatprep.subr.bf16.mxu0 0
        %3065 = vmatpush1.bf16.msra.mxu0 0
        %3066 = vmatprep.subr.bf16.mxu0 0
        %3067 = vmatpush1.bf16.msra.mxu0 0
        %3068 = vmatprep.subr.bf16.mxu0 0
        %3069 = vmatpush1.bf16.msra.mxu0 0
        %3070 = vmatprep.subr.bf16.mxu0 0
        %3071 = vmatpush1.bf16.msra.mxu0 0
        %3072 = vmatprep.mubr.bf16.mxu0 0
        %3073 = vmatmul.mubr.bf16.gmra.mrb[0].mxu0 %v3039
        %v3074 = vpop.f32.mrb[0].mxu0
        %v3075 = vadd.f32 0.0, %v3074
        %v3076 = vpop.f32.mrb[0].mxu0
        %v3077 = vpop.f32.mrb[0].mxu0
        %v3078 = vpop.f32.mrb[0].mxu0
        %3079 = vdwg.mxu0
        %v3080 = vmul.f32 %v3075, 0.5
        %v3081 = vpack.c.bf16 %v3080, %v3080
        %3082 = vst [vmem:[#allocation3 + $0x38] sm:$0xf] %v3081
        %v3083 = vadd.bf16 %v2707, %v2708
        %3084 = vmatprep.subr.bf16.mxu0 0
        %3085 = vmatpush1.bf16.msra.mxu0 %v2760
        %3086 = vmatprep.subr.bf16.mxu0 0
        %3087 = vmatpush1.bf16.msra.mxu0 %v2761
        %3088 = vmatprep.subr.bf16.mxu0 0
        %3089 = vmatpush1.bf16.msra.mxu0 %v2762
        %3090 = vmatprep.subr.bf16.mxu0 0
        %3091 = vmatpush1.bf16.msra.mxu0 %v2763
        %3092 = vmatprep.subr.bf16.mxu0 0
        %3093 = vmatpush1.bf16.msra.mxu0 %v2764
        %3094 = vmatprep.subr.bf16.mxu0 0
        %3095 = vmatpush1.bf16.msra.mxu0 %v2765
        %3096 = vmatprep.subr.bf16.mxu0 0
        %3097 = vmatpush1.bf16.msra.mxu0 %v2766
        %3098 = vmatprep.subr.bf16.mxu0 0
        %3099 = vmatpush1.bf16.msra.mxu0 %v2767
        %3100 = vmatprep.subr.bf16.mxu0 0
        %3101 = vmatpush1.bf16.msra.mxu0 0
        %3102 = vmatprep.subr.bf16.mxu0 0
        %3103 = vmatpush1.bf16.msra.mxu0 0
        %3104 = vmatprep.subr.bf16.mxu0 0
        %3105 = vmatpush1.bf16.msra.mxu0 0
        %3106 = vmatprep.subr.bf16.mxu0 0
        %3107 = vmatpush1.bf16.msra.mxu0 0
        %3108 = vmatprep.subr.bf16.mxu0 0
        %3109 = vmatpush1.bf16.msra.mxu0 0
        %3110 = vmatprep.subr.bf16.mxu0 0
        %3111 = vmatpush1.bf16.msra.mxu0 0
        %3112 = vmatprep.subr.bf16.mxu0 0
        %3113 = vmatpush1.bf16.msra.mxu0 0
        %3114 = vmatprep.subr.bf16.mxu0 0
        %3115 = vmatpush1.bf16.msra.mxu0 0
        %3116 = vmatprep.mubr.bf16.mxu0 0
        %3117 = vmatmul.mubr.bf16.gmra.mrb[0].mxu0 %v3083
        %v3118 = vpop.f32.mrb[0].mxu0
        %v3119 = vadd.f32 0.0, %v3118
        %v3120 = vpop.f32.mrb[0].mxu0
        %v3121 = vpop.f32.mrb[0].mxu0
        %v3122 = vpop.f32.mrb[0].mxu0
        %3123 = vdwg.mxu0
        %v3124 = vmul.f32 %v3119, 0.5
        %v3125 = vpack.c.bf16 %v3124, %v3124
        %3126 = vst [vmem:[#allocation3 + $0x40] sm:$0xf] %v3125
        %v3127 = vld [vmem:[#allocation3] sm:$0xf]
        %v3128 = vld [vmem:[#allocation3 + $0x8] sm:$0xf]
        %v3129 = vld [vmem:[#allocation3 + $0x10] sm:$0xf]
        %v3130 = vld [vmem:[#allocation3 + $0x18] sm:$0xf]
        %v3131 = vld [vmem:[#allocation3 + $0x20] sm:$0xf]
        %v3132 = vld [vmem:[#allocation3 + $0x28] sm:$0xf]
        %v3133 = vld [vmem:[#allocation3 + $0x30] sm:$0xf]
        %v3134 = vld [vmem:[#allocation3 + $0x38] sm:$0xf]
        %v3135 = vld [vmem:[#allocation3 + $0x40] sm:$0xf]
        %v3136 = vld [vmem:[#allocation3 + $0x48] sm:$0xf]
        %3146 = vrot.lane.b32.xlu0 %v3127, 1
        %v3147 = vpop.permute.xlu0 %3146
        %3148 = vrot.lane.b32.xlu0 %v3128, 1
        %v3149 = vpop.permute.xlu0 %3148
        %3150 = vrot.lane.b32.xlu0 %v3129, 1
        %v3151 = vpop.permute.xlu0 %3150
        %3152 = vrot.lane.b32.xlu0 %v3130, 1
        %v3153 = vpop.permute.xlu0 %3152
        %3154 = vrot.lane.b32.xlu0 %v3131, 1
        %v3155 = vpop.permute.xlu0 %3154
        %3156 = vrot.lane.b32.xlu0 %v3132, 1
        %v3157 = vpop.permute.xlu0 %3156
        %3158 = vrot.lane.b32.xlu0 %v3133, 1
        %v3159 = vpop.permute.xlu0 %3158
        %3160 = vrot.lane.b32.xlu0 %v3134, 1
        %v3161 = vpop.permute.xlu0 %3160
        %3162 = vrot.lane.b32.xlu0 %v3135, 1
        %v3163 = vpop.permute.xlu0 %3162
        %v3164 = vsel %vm665, %v3147, %v3149
        %v3165 = vsel %vm665, %v3149, %v3151
        %v3166 = vsel %vm665, %v3151, %v3153
        %v3167 = vsel %vm665, %v3153, %v3155
        %v3168 = vsel %vm665, %v3155, %v3157
        %v3169 = vsel %vm665, %v3157, %v3159
        %v3170 = vsel %vm665, %v3159, %v3161
        %v3171 = vsel %vm665, %v3161, %v3163
        %3181 = vst.msk [vmem:[#allocation2 + $0x8] sm:$0xf] %vm699, %v3147
        %3182 = vst [vmem:[#allocation2 + $0x10] sm:$0xf] %v3164
        %3183 = vst [vmem:[#allocation2 + $0x18] sm:$0xf] %v3165
        %3184 = vst [vmem:[#allocation2 + $0x20] sm:$0xf] %v3166
        %3185 = vst [vmem:[#allocation2 + $0x28] sm:$0xf] %v3167
        %3186 = vst [vmem:[#allocation2 + $0x30] sm:$0xf] %v3168
        %3187 = vst [vmem:[#allocation2 + $0x38] sm:$0xf] %v3169
        %3188 = vst [vmem:[#allocation2 + $0x40] sm:$0xf] %v3170
        %3189 = vst [vmem:[#allocation2 + $0x48] sm:$0xf] %v3171
        %3190 = vst [vmem:[#allocation2] sm:$0xf] 0
        %3191 = vst.msk [vmem:[#allocation2 + $0x8] sm:$0xf] %vm718, 0
        %v3192 = vrot.slane %v3127, 4
        %v3193 = vrot.slane %v3128, 4
        %v3194 = vrot.slane %v3129, 4
        %v3195 = vrot.slane %v3130, 4
        %v3196 = vrot.slane %v3131, 4
        %v3197 = vrot.slane %v3132, 4
        %v3198 = vrot.slane %v3133, 4
        %v3199 = vrot.slane %v3134, 4
        %v3200 = vrot.slane %v3135, 4
        %3210 = vst [vmem:[#allocation2 + $0x8] sm:$0xf0] %v3192
        %3211 = vst [vmem:[#allocation2 + $0x10] sm:$0xf0] %v3193
        %3212 = vst [vmem:[#allocation2 + $0x18] sm:$0xf0] %v3194
        %3213 = vst [vmem:[#allocation2 + $0x20] sm:$0xf0] %v3195
        %3214 = vst [vmem:[#allocation2 + $0x28] sm:$0xf0] %v3196
        %3215 = vst [vmem:[#allocation2 + $0x30] sm:$0xf0] %v3197
        %3216 = vst [vmem:[#allocation2 + $0x38] sm:$0xf0] %v3198
        %3217 = vst [vmem:[#allocation2 + $0x40] sm:$0xf0] %v3199
        %3218 = vst [vmem:[#allocation2 + $0x48] sm:$0xf0] %v3200
        %3219 = vst [vmem:[#allocation2] sm:$0xf0] 0
        %3221 = vrot.lane.b32.xlu0 %v3127, 127
        %v3222 = vpop.permute.xlu0 %3221
        %3223 = vrot.lane.b32.xlu0 %v3128, 127
        %v3224 = vpop.permute.xlu0 %3223
        %3225 = vrot.lane.b32.xlu0 %v3129, 127
        %v3226 = vpop.permute.xlu0 %3225
        %3227 = vrot.lane.b32.xlu0 %v3130, 127
        %v3228 = vpop.permute.xlu0 %3227
        %3229 = vrot.lane.b32.xlu0 %v3131, 127
        %v3230 = vpop.permute.xlu0 %3229
        %3231 = vrot.lane.b32.xlu0 %v3132, 127
        %v3232 = vpop.permute.xlu0 %3231
        %3233 = vrot.lane.b32.xlu0 %v3133, 127
        %v3234 = vpop.permute.xlu0 %3233
        %3235 = vrot.lane.b32.xlu0 %v3134, 127
        %v3236 = vpop.permute.xlu0 %3235
        %3237 = vrot.lane.b32.xlu0 %v3135, 127
        %v3238 = vpop.permute.xlu0 %3237
        %3239 = vrot.lane.b32.xlu0 %v3136, 127
        %v3240 = vpop.permute.xlu0 %3239
        %v3241 = vsel %vm793, %v3222, %v3224
        %v3242 = vsel %vm793, %v3224, %v3226
        %v3243 = vsel %vm793, %v3226, %v3228
        %v3244 = vsel %vm793, %v3228, %v3230
        %v3245 = vsel %vm793, %v3230, %v3232
        %v3246 = vsel %vm793, %v3232, %v3234
        %v3247 = vsel %vm793, %v3234, %v3236
        %v3248 = vsel %vm793, %v3236, %v3238
        %v3249 = vsel %vm793, %v3238, %v3240
        %3260 = vst.msk [vmem:[#allocation2 + $0x90] sm:$0xf] %vm829, %v3222
        %3261 = vst [vmem:[#allocation2 + $0x98] sm:$0xf] %v3241
        %3262 = vst [vmem:[#allocation2 + $0xa0] sm:$0xf] %v3242
        %3263 = vst [vmem:[#allocation2 + $0xa8] sm:$0xf] %v3243
        %3264 = vst [vmem:[#allocation2 + $0xb0] sm:$0xf] %v3244
        %3265 = vst [vmem:[#allocation2 + $0xb8] sm:$0xf] %v3245
        %3266 = vst [vmem:[#allocation2 + $0xc0] sm:$0xf] %v3246
        %3267 = vst [vmem:[#allocation2 + $0xc8] sm:$0xf] %v3247
        %3268 = vst [vmem:[#allocation2 + $0xd0] sm:$0xf] %v3248
        %3269 = vst [vmem:[#allocation2 + $0xd8] sm:$0xf] %v3249
        %3270 = vst.msk [vmem:[#allocation2 + $0x90] sm:$0xf] %vm848, 0
        %v3271 = vrot.slane %v3136, 4
        %3272 = vrot.lane.b32.xlu0 %v3192, 1
        %v3273 = vpop.permute.xlu0 %3272
        %3274 = vrot.lane.b32.xlu0 %v3193, 1
        %v3275 = vpop.permute.xlu0 %3274
        %3276 = vrot.lane.b32.xlu0 %v3194, 1
        %v3277 = vpop.permute.xlu0 %3276
        %3278 = vrot.lane.b32.xlu0 %v3195, 1
        %v3279 = vpop.permute.xlu0 %3278
        %3280 = vrot.lane.b32.xlu0 %v3196, 1
        %v3281 = vpop.permute.xlu0 %3280
        %3282 = vrot.lane.b32.xlu0 %v3197, 1
        %v3283 = vpop.permute.xlu0 %3282
        %3284 = vrot.lane.b32.xlu0 %v3198, 1
        %v3285 = vpop.permute.xlu0 %3284
        %3286 = vrot.lane.b32.xlu0 %v3199, 1
        %v3287 = vpop.permute.xlu0 %3286
        %3288 = vrot.lane.b32.xlu0 %v3200, 1
        %v3289 = vpop.permute.xlu0 %3288
        %3290 = vrot.lane.b32.xlu0 %v3271, 1
        %v3291 = vpop.permute.xlu0 %3290
        %v3292 = vsel %vm665, %v3273, %v3275
        %v3293 = vsel %vm665, %v3275, %v3277
        %v3294 = vsel %vm665, %v3277, %v3279
        %v3295 = vsel %vm665, %v3279, %v3281
        %v3296 = vsel %vm665, %v3281, %v3283
        %v3297 = vsel %vm665, %v3283, %v3285
        %v3298 = vsel %vm665, %v3285, %v3287
        %v3299 = vsel %vm665, %v3287, %v3289
        %v3300 = vsel %vm665, %v3289, %v3291
        %3311 = vst.msk [vmem:[#allocation2 + $0x90] sm:$0xf0] %vm854, %v3273
        %3312 = vst [vmem:[#allocation2 + $0x98] sm:$0xf0] %v3292
        %3313 = vst [vmem:[#allocation2 + $0xa0] sm:$0xf0] %v3293
        %3314 = vst [vmem:[#allocation2 + $0xa8] sm:$0xf0] %v3294
        %3315 = vst [vmem:[#allocation2 + $0xb0] sm:$0xf0] %v3295
        %3316 = vst [vmem:[#allocation2 + $0xb8] sm:$0xf0] %v3296
        %3317 = vst [vmem:[#allocation2 + $0xc0] sm:$0xf0] %v3297
        %3318 = vst [vmem:[#allocation2 + $0xc8] sm:$0xf0] %v3298
        %3319 = vst [vmem:[#allocation2 + $0xd0] sm:$0xf0] %v3299
        %3320 = vst [vmem:[#allocation2 + $0xd8] sm:$0xf0] %v3300
        %3321 = vst.msk [vmem:[#allocation2 + $0x90] sm:$0xf0] %vm873, 0
        %3322 = vst [vmem:[#allocation2 + $0x120] sm:$0xf] %v3127
        %3323 = vst [vmem:[#allocation2 + $0x128] sm:$0xf] %v3128
        %3324 = vst [vmem:[#allocation2 + $0x130] sm:$0xf] %v3129
        %3325 = vst [vmem:[#allocation2 + $0x138] sm:$0xf] %v3130
        %3326 = vst [vmem:[#allocation2 + $0x140] sm:$0xf] %v3131
        %3327 = vst [vmem:[#allocation2 + $0x148] sm:$0xf] %v3132
        %3328 = vst [vmem:[#allocation2 + $0x150] sm:$0xf] %v3133
        %3329 = vst [vmem:[#allocation2 + $0x158] sm:$0xf] %v3134
        %3330 = vst [vmem:[#allocation2 + $0x160] sm:$0xf] %v3135
        %3331 = vst [vmem:[#allocation2 + $0x168] sm:$0xf] %v3136
        %3332 = vrot.lane.b32.xlu0 %v3192, 127
        %v3333 = vpop.permute.xlu0 %3332
        %3334 = vrot.lane.b32.xlu0 %v3193, 127
        %v3335 = vpop.permute.xlu0 %3334
        %3336 = vrot.lane.b32.xlu0 %v3194, 127
        %v3337 = vpop.permute.xlu0 %3336
        %3338 = vrot.lane.b32.xlu0 %v3195, 127
        %v3339 = vpop.permute.xlu0 %3338
        %3340 = vrot.lane.b32.xlu0 %v3196, 127
        %v3341 = vpop.permute.xlu0 %3340
        %3342 = vrot.lane.b32.xlu0 %v3197, 127
        %v3343 = vpop.permute.xlu0 %3342
        %3344 = vrot.lane.b32.xlu0 %v3198, 127
        %v3345 = vpop.permute.xlu0 %3344
        %3346 = vrot.lane.b32.xlu0 %v3199, 127
        %v3347 = vpop.permute.xlu0 %3346
        %3348 = vrot.lane.b32.xlu0 %v3200, 127
        %v3349 = vpop.permute.xlu0 %3348
        %3350 = vrot.lane.b32.xlu0 %v3271, 127
        %v3351 = vpop.permute.xlu0 %3350
        %v3352 = vsel %vm793, %v3333, %v3335
        %v3353 = vsel %vm793, %v3335, %v3337
        %v3354 = vsel %vm793, %v3337, %v3339
        %v3355 = vsel %vm793, %v3339, %v3341
        %v3356 = vsel %vm793, %v3341, %v3343
        %v3357 = vsel %vm793, %v3343, %v3345
        %v3358 = vsel %vm793, %v3345, %v3347
        %v3359 = vsel %vm793, %v3347, %v3349
        %v3360 = vsel %vm793, %v3349, %v3351
        %3371 = vst [vmem:[#allocation2 + $0x120] sm:$0xf0] %v3352
        %3372 = vst [vmem:[#allocation2 + $0x128] sm:$0xf0] %v3353
        %3373 = vst [vmem:[#allocation2 + $0x130] sm:$0xf0] %v3354
        %3374 = vst [vmem:[#allocation2 + $0x138] sm:$0xf0] %v3355
        %3375 = vst [vmem:[#allocation2 + $0x140] sm:$0xf0] %v3356
        %3376 = vst [vmem:[#allocation2 + $0x148] sm:$0xf0] %v3357
        %3377 = vst [vmem:[#allocation2 + $0x150] sm:$0xf0] %v3358
        %3378 = vst [vmem:[#allocation2 + $0x158] sm:$0xf0] %v3359
        %3379 = vst [vmem:[#allocation2 + $0x160] sm:$0xf0] %v3360
        %3380 = vst.msk [vmem:[#allocation2 + $0x168] sm:$0xf0] %vm912, %v3351
        %3381 = vst.msk [vmem:[#allocation2 + $0x168] sm:$0xf0] %vm914, 0
        %3382 = vrot.lane.b32.xlu0 %v3136, 1
        %v3383 = vpop.permute.xlu0 %3382
        %v3384 = vsel %vm665, %v3163, %v3383
        %3387 = vst [vmem:[#allocation2 + $0x1b0] sm:$0xf] %v3164
        %3388 = vst [vmem:[#allocation2 + $0x1b8] sm:$0xf] %v3165
        %3389 = vst [vmem:[#allocation2 + $0x1c0] sm:$0xf] %v3166
        %3390 = vst [vmem:[#allocation2 + $0x1c8] sm:$0xf] %v3167
        %3391 = vst [vmem:[#allocation2 + $0x1d0] sm:$0xf] %v3168
        %3392 = vst [vmem:[#allocation2 + $0x1d8] sm:$0xf] %v3169
        %3393 = vst [vmem:[#allocation2 + $0x1e0] sm:$0xf] %v3170
        %3394 = vst [vmem:[#allocation2 + $0x1e8] sm:$0xf] %v3171
        %3395 = vst [vmem:[#allocation2 + $0x1f0] sm:$0xf] %v3384
        %3396 = vst.msk [vmem:[#allocation2 + $0x1f8] sm:$0xf] %vm718, %v3383
        %3397 = vst.msk [vmem:[#allocation2 + $0x1f8] sm:$0xf] %vm699, 0
        %3399 = vst [vmem:[#allocation2 + $0x1b0] sm:$0xf0] %v3193
        %3400 = vst [vmem:[#allocation2 + $0x1b8] sm:$0xf0] %v3194
        %3401 = vst [vmem:[#allocation2 + $0x1c0] sm:$0xf0] %v3195
        %3402 = vst [vmem:[#allocation2 + $0x1c8] sm:$0xf0] %v3196
        %3403 = vst [vmem:[#allocation2 + $0x1d0] sm:$0xf0] %v3197
        %3404 = vst [vmem:[#allocation2 + $0x1d8] sm:$0xf0] %v3198
        %3405 = vst [vmem:[#allocation2 + $0x1e0] sm:$0xf0] %v3199
        %3406 = vst [vmem:[#allocation2 + $0x1e8] sm:$0xf0] %v3200
        %3407 = vst [vmem:[#allocation2 + $0x1f0] sm:$0xf0] %v3271
        %3408 = vst [vmem:[#allocation2 + $0x1f8] sm:$0xf0] 0
        %3410 = vst [vmem:[#allocation2 + $0x240] sm:$0xf] %v3242
        %3411 = vst [vmem:[#allocation2 + $0x248] sm:$0xf] %v3243
        %3412 = vst [vmem:[#allocation2 + $0x250] sm:$0xf] %v3244
        %3413 = vst [vmem:[#allocation2 + $0x258] sm:$0xf] %v3245
        %3414 = vst [vmem:[#allocation2 + $0x260] sm:$0xf] %v3246
        %3415 = vst [vmem:[#allocation2 + $0x268] sm:$0xf] %v3247
        %3416 = vst [vmem:[#allocation2 + $0x270] sm:$0xf] %v3248
        %3417 = vst [vmem:[#allocation2 + $0x278] sm:$0xf] %v3249
        %3418 = vst.msk [vmem:[#allocation2 + $0x280] sm:$0xf] %vm848, %v3240
        %3419 = vst.msk [vmem:[#allocation2 + $0x280] sm:$0xf] %vm829, 0
        %3420 = vst [vmem:[#allocation2 + $0x288] sm:$0xf] 0
        %v3421 = vld [vmem:[#allocation9] sm:$0xf]
        %v3422 = vld [vmem:[#allocation9 + $0x4] sm:$0xf]
        %v3423 = vld [vmem:[#allocation2] sm:$0xff]
        %v3424 = vld [vmem:[#allocation2 + $0x8] sm:$0xff]
        %v3425 = vld [vmem:[#allocation2 + $0x10] sm:$0xff]
        %v3426 = vld [vmem:[#allocation2 + $0x18] sm:$0xff]
        %v3427 = vld [vmem:[#allocation2 + $0x20] sm:$0xff]
        %v3428 = vld [vmem:[#allocation2 + $0x28] sm:$0xff]
        %v3429 = vld [vmem:[#allocation2 + $0x30] sm:$0xff]
        %v3430 = vld [vmem:[#allocation2 + $0x38] sm:$0xff]
        %v3431 = vld [vmem:[#allocation2 + $0x40] sm:$0xff]
        %v3432 = vld [vmem:[#allocation2 + $0x48] sm:$0xff]
        %v3433 = vld [vmem:[#allocation2 + $0x90] sm:$0xff]
        %v3434 = vld [vmem:[#allocation2 + $0x98] sm:$0xff]
        %v3435 = vld [vmem:[#allocation2 + $0xa0] sm:$0xff]
        %v3436 = vld [vmem:[#allocation2 + $0xa8] sm:$0xff]
        %v3437 = vld [vmem:[#allocation2 + $0xb0] sm:$0xff]
        %v3438 = vld [vmem:[#allocation2 + $0xb8] sm:$0xff]
        %v3439 = vld [vmem:[#allocation2 + $0xc0] sm:$0xff]
        %v3440 = vld [vmem:[#allocation2 + $0xc8] sm:$0xff]
        %v3441 = vld [vmem:[#allocation2 + $0xd0] sm:$0xff]
        %v3442 = vld [vmem:[#allocation2 + $0xd8] sm:$0xff]
        %v3443 = vld [vmem:[#allocation2 + $0x120] sm:$0xff]
        %v3444 = vld [vmem:[#allocation2 + $0x128] sm:$0xff]
        %v3445 = vld [vmem:[#allocation2 + $0x130] sm:$0xff]
        %v3446 = vld [vmem:[#allocation2 + $0x138] sm:$0xff]
        %v3447 = vld [vmem:[#allocation2 + $0x140] sm:$0xff]
        %v3448 = vld [vmem:[#allocation2 + $0x148] sm:$0xff]
        %v3449 = vld [vmem:[#allocation2 + $0x150] sm:$0xff]
        %v3450 = vld [vmem:[#allocation2 + $0x158] sm:$0xff]
        %v3451 = vld [vmem:[#allocation2 + $0x160] sm:$0xff]
        %v3452 = vld [vmem:[#allocation2 + $0x168] sm:$0xff]
        %v3453 = vld [vmem:[#allocation2 + $0x1b0] sm:$0xff]
        %v3454 = vld [vmem:[#allocation2 + $0x1b8] sm:$0xff]
        %v3455 = vld [vmem:[#allocation2 + $0x1c0] sm:$0xff]
        %v3456 = vld [vmem:[#allocation2 + $0x1c8] sm:$0xff]
        %v3457 = vld [vmem:[#allocation2 + $0x1d0] sm:$0xff]
        %v3458 = vld [vmem:[#allocation2 + $0x1d8] sm:$0xff]
        %v3459 = vld [vmem:[#allocation2 + $0x1e0] sm:$0xff]
        %v3460 = vld [vmem:[#allocation2 + $0x1e8] sm:$0xff]
        %v3461 = vld [vmem:[#allocation2 + $0x1f0] sm:$0xff]
        %v3462 = vld [vmem:[#allocation2 + $0x1f8] sm:$0xff]
        %v3463 = vld [vmem:[#allocation2 + $0x240] sm:$0xf]
        %v3464 = vld [vmem:[#allocation2 + $0x248] sm:$0xf]
        %v3465 = vld [vmem:[#allocation2 + $0x250] sm:$0xf]
        %v3466 = vld [vmem:[#allocation2 + $0x258] sm:$0xf]
        %v3467 = vld [vmem:[#allocation2 + $0x260] sm:$0xf]
        %v3468 = vld [vmem:[#allocation2 + $0x268] sm:$0xf]
        %v3469 = vld [vmem:[#allocation2 + $0x270] sm:$0xf]
        %v3470 = vld [vmem:[#allocation2 + $0x278] sm:$0xf]
        %v3471 = vld [vmem:[#allocation2 + $0x280] sm:$0xf]
        %v3472 = vld [vmem:[#allocation2 + $0x288] sm:$0xf]
        %v3473 = vld [vmem:[%s7] sm:$0xff]
        %v3474 = vld [vmem:[%s7 + $0x8] sm:$0xff]
        %3476 = vset.pattern.permute.xlu0 0
        %3477 = vperm.xlu0 %3476, %v3473
        %v3478 = vpop.permute.xlu0 %3477
        %3481 = vset.pattern.permute.xlu0 0
        %3482 = vperm.xlu0 %3481, %v3474
        %v3483 = vpop.permute.xlu0 %3482
        %v3487 = vunpack.c.l.b16 %v3421
        %v3488 = vunpack.c.l.b16 %v3422
        %v3489 = vpack.c.b16 %v3488, %v3487
        %v3491 = vsel %vm1070, %v3489, 0
        %v3494 = vsel %vm1074, %v3463, 0
        %v3497 = vsel %vm1074, %v3464, 0
        %v3500 = vsel %vm1074, %v3465, 0
        %v3503 = vsel %vm1074, %v3466, 0
        %v3506 = vsel %vm1074, %v3467, 0
        %v3509 = vsel %vm1074, %v3468, 0
        %v3512 = vsel %vm1074, %v3469, 0
        %v3515 = vsel %vm1074, %v3470, 0
        %v3518 = vsel %vm1074, %v3471, 0
        %v3521 = vsel %vm1074, %v3472, 0
        %3523 = vmatprep.subr.bf16.mxu0 %v3424
        %3524 = vmatpush1.bf16.msra.mxu0 %v3423
        %3525 = vmatprep.subr.bf16.mxu0 %v3434
        %3526 = vmatpush1.bf16.msra.mxu0 %v3433
        %3527 = vmatprep.subr.bf16.mxu0 %v3444
        %3528 = vmatpush1.bf16.msra.mxu0 %v3443
        %3529 = vmatprep.subr.bf16.mxu0 %v3454
        %3530 = vmatpush1.bf16.msra.mxu0 %v3453
        %3531 = vmatprep.subr.bf16.mxu0 %v3497
        %3532 = vmatpush1.bf16.msra.mxu0 %v3494
        %3533 = vmatprep.subr.bf16.mxu0 0
        %3534 = vmatpush1.bf16.msra.mxu0 0
        %3535 = vmatprep.subr.bf16.mxu0 0
        %3536 = vmatpush1.bf16.msra.mxu0 0
        %3537 = vmatprep.subr.bf16.mxu0 0
        %3538 = vmatpush1.bf16.msra.mxu0 0
        %3539 = vmatprep.subr.bf16.mxu0 0
        %3540 = vmatpush1.bf16.msra.mxu0 0
        %3541 = vmatprep.subr.bf16.mxu0 0
        %3542 = vmatpush1.bf16.msra.mxu0 0
        %3543 = vmatprep.subr.bf16.mxu0 0
        %3544 = vmatpush1.bf16.msra.mxu0 0
        %3545 = vmatprep.subr.bf16.mxu0 0
        %3546 = vmatpush1.bf16.msra.mxu0 0
        %3547 = vmatprep.subr.bf16.mxu0 0
        %3548 = vmatpush1.bf16.msra.mxu0 0
        %3549 = vmatprep.subr.bf16.mxu0 0
        %3550 = vmatpush1.bf16.msra.mxu0 0
        %3551 = vmatprep.subr.bf16.mxu0 0
        %3552 = vmatpush1.bf16.msra.mxu0 0
        %3553 = vmatprep.subr.bf16.mxu0 0
        %3554 = vmatpush1.bf16.msra.mxu0 0
        %3555 = vmatprep.mubr.bf16.mxu0 0
        %3556 = vmatmul.mubr.bf16.gmra.mrb[0].mxu0 %v3491
        %v3557 = vpop.f32.mrb[0].mxu0
        %v3558 = vadd.f32 %v3478, %v3557
        %v3559 = vpop.f32.mrb[0].mxu0
        %v3560 = vadd.f32 %v3478, %v3559
        %v3561 = vpop.f32.mrb[0].mxu0
        %v3562 = vadd.f32 %v3483, %v3561
        %v3563 = vpop.f32.mrb[0].mxu0
        %v3564 = vadd.f32 %v3483, %v3563
        %3565 = vdwg.mxu0
        %3566 = vmatprep.subr.bf16.mxu0 %v3426
        %3567 = vmatpush1.bf16.msra.mxu0 %v3425
        %3568 = vmatprep.subr.bf16.mxu0 %v3436
        %3569 = vmatpush1.bf16.msra.mxu0 %v3435
        %3570 = vmatprep.subr.bf16.mxu0 %v3446
        %3571 = vmatpush1.bf16.msra.mxu0 %v3445
        %3572 = vmatprep.subr.bf16.mxu0 %v3456
        %3573 = vmatpush1.bf16.msra.mxu0 %v3455
        %3574 = vmatprep.subr.bf16.mxu0 %v3503
        %3575 = vmatpush1.bf16.msra.mxu0 %v3500
        %3576 = vmatprep.subr.bf16.mxu0 0
        %3577 = vmatpush1.bf16.msra.mxu0 0
        %3578 = vmatprep.subr.bf16.mxu0 0
        %3579 = vmatpush1.bf16.msra.mxu0 0
        %3580 = vmatprep.subr.bf16.mxu0 0
        %3581 = vmatpush1.bf16.msra.mxu0 0
        %3582 = vmatprep.subr.bf16.mxu0 0
        %3583 = vmatpush1.bf16.msra.mxu0 0
        %3584 = vmatprep.subr.bf16.mxu0 0
        %3585 = vmatpush1.bf16.msra.mxu0 0
        %3586 = vmatprep.subr.bf16.mxu0 0
        %3587 = vmatpush1.bf16.msra.mxu0 0
        %3588 = vmatprep.subr.bf16.mxu0 0
        %3589 = vmatpush1.bf16.msra.mxu0 0
        %3590 = vmatprep.subr.bf16.mxu0 0
        %3591 = vmatpush1.bf16.msra.mxu0 0
        %3592 = vmatprep.subr.bf16.mxu0 0
        %3593 = vmatpush1.bf16.msra.mxu0 0
        %3594 = vmatprep.subr.bf16.mxu0 0
        %3595 = vmatpush1.bf16.msra.mxu0 0
        %3596 = vmatprep.subr.bf16.mxu0 0
        %3597 = vmatpush1.bf16.msra.mxu0 0
        %3598 = vmatprep.mubr.bf16.mxu0 0
        %3599 = vmatmul.mubr.bf16.gmra.mrb[0].mxu0 %v3491
        %v3600 = vpop.f32.mrb[0].mxu0
        %v3601 = vadd.f32 %v3478, %v3600
        %v3602 = vpop.f32.mrb[0].mxu0
        %v3603 = vadd.f32 %v3478, %v3602
        %v3604 = vpop.f32.mrb[0].mxu0
        %v3605 = vadd.f32 %v3483, %v3604
        %v3606 = vpop.f32.mrb[0].mxu0
        %v3607 = vadd.f32 %v3483, %v3606
        %3608 = vdwg.mxu0
        %3609 = vmatprep.subr.bf16.mxu0 %v3428
        %3610 = vmatpush1.bf16.msra.mxu0 %v3427
        %3611 = vmatprep.subr.bf16.mxu0 %v3438
        %3612 = vmatpush1.bf16.msra.mxu0 %v3437
        %3613 = vmatprep.subr.bf16.mxu0 %v3448
        %3614 = vmatpush1.bf16.msra.mxu0 %v3447
        %3615 = vmatprep.subr.bf16.mxu0 %v3458
        %3616 = vmatpush1.bf16.msra.mxu0 %v3457
        %3617 = vmatprep.subr.bf16.mxu0 %v3509
        %3618 = vmatpush1.bf16.msra.mxu0 %v3506
        %3619 = vmatprep.subr.bf16.mxu0 0
        %3620 = vmatpush1.bf16.msra.mxu0 0
        %3621 = vmatprep.subr.bf16.mxu0 0
        %3622 = vmatpush1.bf16.msra.mxu0 0
        %3623 = vmatprep.subr.bf16.mxu0 0
        %3624 = vmatpush1.bf16.msra.mxu0 0
        %3625 = vmatprep.subr.bf16.mxu0 0
        %3626 = vmatpush1.bf16.msra.mxu0 0
        %3627 = vmatprep.subr.bf16.mxu0 0
        %3628 = vmatpush1.bf16.msra.mxu0 0
        %3629 = vmatprep.subr.bf16.mxu0 0
        %3630 = vmatpush1.bf16.msra.mxu0 0
        %3631 = vmatprep.subr.bf16.mxu0 0
        %3632 = vmatpush1.bf16.msra.mxu0 0
        %3633 = vmatprep.subr.bf16.mxu0 0
        %3634 = vmatpush1.bf16.msra.mxu0 0
        %3635 = vmatprep.subr.bf16.mxu0 0
        %3636 = vmatpush1.bf16.msra.mxu0 0
        %3637 = vmatprep.subr.bf16.mxu0 0
        %3638 = vmatpush1.bf16.msra.mxu0 0
        %3639 = vmatprep.subr.bf16.mxu0 0
        %3640 = vmatpush1.bf16.msra.mxu0 0
        %3641 = vmatprep.mubr.bf16.mxu0 0
        %3642 = vmatmul.mubr.bf16.gmra.mrb[0].mxu0 %v3491
        %v3643 = vpop.f32.mrb[0].mxu0
        %v3644 = vadd.f32 %v3478, %v3643
        %v3645 = vpop.f32.mrb[0].mxu0
        %v3646 = vadd.f32 %v3478, %v3645
        %v3647 = vpop.f32.mrb[0].mxu0
        %v3648 = vadd.f32 %v3483, %v3647
        %v3649 = vpop.f32.mrb[0].mxu0
        %v3650 = vadd.f32 %v3483, %v3649
        %3651 = vdwg.mxu0
        %3652 = vmatprep.subr.bf16.mxu0 %v3430
        %3653 = vmatpush1.bf16.msra.mxu0 %v3429
        %3654 = vmatprep.subr.bf16.mxu0 %v3440
        %3655 = vmatpush1.bf16.msra.mxu0 %v3439
        %3656 = vmatprep.subr.bf16.mxu0 %v3450
        %3657 = vmatpush1.bf16.msra.mxu0 %v3449
        %3658 = vmatprep.subr.bf16.mxu0 %v3460
        %3659 = vmatpush1.bf16.msra.mxu0 %v3459
        %3660 = vmatprep.subr.bf16.mxu0 %v3515
        %3661 = vmatpush1.bf16.msra.mxu0 %v3512
        %3662 = vmatprep.subr.bf16.mxu0 0
        %3663 = vmatpush1.bf16.msra.mxu0 0
        %3664 = vmatprep.subr.bf16.mxu0 0
        %3665 = vmatpush1.bf16.msra.mxu0 0
        %3666 = vmatprep.subr.bf16.mxu0 0
        %3667 = vmatpush1.bf16.msra.mxu0 0
        %3668 = vmatprep.subr.bf16.mxu0 0
        %3669 = vmatpush1.bf16.msra.mxu0 0
        %3670 = vmatprep.subr.bf16.mxu0 0
        %3671 = vmatpush1.bf16.msra.mxu0 0
        %3672 = vmatprep.subr.bf16.mxu0 0
        %3673 = vmatpush1.bf16.msra.mxu0 0
        %3674 = vmatprep.subr.bf16.mxu0 0
        %3675 = vmatpush1.bf16.msra.mxu0 0
        %3676 = vmatprep.subr.bf16.mxu0 0
        %3677 = vmatpush1.bf16.msra.mxu0 0
        %3678 = vmatprep.subr.bf16.mxu0 0
        %3679 = vmatpush1.bf16.msra.mxu0 0
        %3680 = vmatprep.subr.bf16.mxu0 0
        %3681 = vmatpush1.bf16.msra.mxu0 0
        %3682 = vmatprep.subr.bf16.mxu0 0
        %3683 = vmatpush1.bf16.msra.mxu0 0
        %3684 = vmatprep.mubr.bf16.mxu0 0
        %3685 = vmatmul.mubr.bf16.gmra.mrb[0].mxu0 %v3491
        %v3686 = vpop.f32.mrb[0].mxu0
        %v3687 = vadd.f32 %v3478, %v3686
        %v3688 = vpop.f32.mrb[0].mxu0
        %v3689 = vadd.f32 %v3478, %v3688
        %v3690 = vpop.f32.mrb[0].mxu0
        %v3691 = vadd.f32 %v3483, %v3690
        %v3692 = vpop.f32.mrb[0].mxu0
        %v3693 = vadd.f32 %v3483, %v3692
        %3694 = vdwg.mxu0
        %3695 = vmatprep.subr.bf16.mxu0 %v3432
        %3696 = vmatpush1.bf16.msra.mxu0 %v3431
        %3697 = vmatprep.subr.bf16.mxu0 %v3442
        %3698 = vmatpush1.bf16.msra.mxu0 %v3441
        %3699 = vmatprep.subr.bf16.mxu0 %v3452
        %3700 = vmatpush1.bf16.msra.mxu0 %v3451
        %3701 = vmatprep.subr.bf16.mxu0 %v3462
        %3702 = vmatpush1.bf16.msra.mxu0 %v3461
        %3703 = vmatprep.subr.bf16.mxu0 %v3521
        %3704 = vmatpush1.bf16.msra.mxu0 %v3518
        %3705 = vmatprep.subr.bf16.mxu0 0
        %3706 = vmatpush1.bf16.msra.mxu0 0
        %3707 = vmatprep.subr.bf16.mxu0 0
        %3708 = vmatpush1.bf16.msra.mxu0 0
        %3709 = vmatprep.subr.bf16.mxu0 0
        %3710 = vmatpush1.bf16.msra.mxu0 0
        %3711 = vmatprep.subr.bf16.mxu0 0
        %3712 = vmatpush1.bf16.msra.mxu0 0
        %3713 = vmatprep.subr.bf16.mxu0 0
        %3714 = vmatpush1.bf16.msra.mxu0 0
        %3715 = vmatprep.subr.bf16.mxu0 0
        %3716 = vmatpush1.bf16.msra.mxu0 0
        %3717 = vmatprep.subr.bf16.mxu0 0
        %3718 = vmatpush1.bf16.msra.mxu0 0
        %3719 = vmatprep.subr.bf16.mxu0 0
        %3720 = vmatpush1.bf16.msra.mxu0 0
        %3721 = vmatprep.subr.bf16.mxu0 0
        %3722 = vmatpush1.bf16.msra.mxu0 0
        %3723 = vmatprep.subr.bf16.mxu0 0
        %3724 = vmatpush1.bf16.msra.mxu0 0
        %3725 = vmatprep.subr.bf16.mxu0 0
        %3726 = vmatpush1.bf16.msra.mxu0 0
        %3727 = vmatprep.mubr.bf16.mxu0 0
        %3728 = vmatmul.mubr.bf16.gmra.mrb[0].mxu0 %v3491
        %v3729 = vpop.f32.mrb[0].mxu0
        %v3730 = vadd.f32 %v3478, %v3729
        %v3731 = vpop.f32.mrb[0].mxu0
        %v3732 = vadd.f32 %v3478, %v3731
        %v3733 = vpop.f32.mrb[0].mxu0
        %v3734 = vadd.f32 %v3483, %v3733
        %v3735 = vpop.f32.mrb[0].mxu0
        %v3736 = vadd.f32 %v3483, %v3735
        %3737 = vdwg.mxu0
        %v3738 = vmax.f32 %v3558, 0.0
        %v3739 = vmax.f32 %v3560, 0.0
        %v3740 = vmax.f32 %v3601, 0.0
        %v3741 = vmax.f32 %v3603, 0.0
        %v3742 = vmax.f32 %v3644, 0.0
        %v3743 = vmax.f32 %v3646, 0.0
        %v3744 = vmax.f32 %v3687, 0.0
        %v3745 = vmax.f32 %v3689, 0.0
        %v3746 = vmax.f32 %v3730, 0.0
        %v3747 = vmax.f32 %v3732, 0.0
        %v3748 = vmax.f32 %v3562, 0.0
        %v3749 = vmax.f32 %v3564, 0.0
        %v3750 = vmax.f32 %v3605, 0.0
        %v3751 = vmax.f32 %v3607, 0.0
        %v3752 = vmax.f32 %v3648, 0.0
        %v3753 = vmax.f32 %v3650, 0.0
        %v3754 = vmax.f32 %v3691, 0.0
        %v3755 = vmax.f32 %v3693, 0.0
        %v3756 = vmax.f32 %v3734, 0.0
        %v3757 = vmax.f32 %v3736, 0.0
        %v3758 = vld [vmem:[#allocation11] sm:$0xff]
        %v3759 = vld [vmem:[#allocation11 + $0x8] sm:$0x3]
        %v3762 = vlaneseq
        %v3763 = vshrl.u32 %v3762, 7
        %v3764 = vsub.s32 0, %v3763
        %v3765 = vrot.slane %v3758, %v3764
        %v3766 = vlaneseq
        %v3767 = vshrl.u32 %v3766, 7
        %v3768 = vsub.s32 1, %v3767
        %v3769 = vrot.slane %v3758, %v3768
        %v3770 = vlaneseq
        %v3771 = vshrl.u32 %v3770, 7
        %v3772 = vsub.s32 2, %v3771
        %v3773 = vrot.slane %v3758, %v3772
        %v3774 = vlaneseq
        %v3775 = vshrl.u32 %v3774, 7
        %v3776 = vsub.s32 3, %v3775
        %v3777 = vrot.slane %v3758, %v3776
        %v3778 = vlaneseq
        %v3779 = vshrl.u32 %v3778, 7
        %v3780 = vsub.s32 4, %v3779
        %v3781 = vrot.slane %v3758, %v3780
        %v3782 = vlaneseq
        %v3783 = vshrl.u32 %v3782, 7
        %v3784 = vsub.s32 5, %v3783
        %v3785 = vrot.slane %v3758, %v3784
        %v3786 = vlaneseq
        %v3787 = vshrl.u32 %v3786, 7
        %v3788 = vsub.s32 6, %v3787
        %v3789 = vrot.slane %v3758, %v3788
        %v3790 = vlaneseq
        %v3791 = vshrl.u32 %v3790, 7
        %v3792 = vsub.s32 7, %v3791
        %v3793 = vrot.slane %v3758, %v3792
        %v3794 = vlaneseq
        %v3795 = vshrl.u32 %v3794, 7
        %v3796 = vsub.s32 0, %v3795
        %v3797 = vrot.slane %v3759, %v3796
        %v3798 = vlaneseq
        %v3799 = vshrl.u32 %v3798, 7
        %v3800 = vsub.s32 1, %v3799
        %v3801 = vrot.slane %v3759, %v3800
        %v3812 = vmul.f32 %v3738, %v3765
        %v3813 = vmul.f32 %v3739, %v3769
        %v3814 = vmul.f32 %v3740, %v3773
        %v3815 = vmul.f32 %v3741, %v3777
        %v3816 = vmul.f32 %v3742, %v3781
        %v3817 = vmul.f32 %v3743, %v3785
        %v3818 = vmul.f32 %v3744, %v3789
        %v3819 = vmul.f32 %v3745, %v3793
        %v3820 = vmul.f32 %v3746, %v3797
        %v3821 = vmul.f32 %v3747, %v3801
        %v3822 = vmul.f32 %v3748, %v3765
        %v3823 = vmul.f32 %v3749, %v3769
        %v3824 = vmul.f32 %v3750, %v3773
        %v3825 = vmul.f32 %v3751, %v3777
        %v3826 = vmul.f32 %v3752, %v3781
        %v3827 = vmul.f32 %v3753, %v3785
        %v3828 = vmul.f32 %v3754, %v3789
        %v3829 = vmul.f32 %v3755, %v3793
        %v3830 = vmul.f32 %v3756, %v3797
        %v3831 = vmul.f32 %v3757, %v3801
        %v3832 = vpack.c.bf16 %v3822, %v3812
        %v3833 = vpack.c.bf16 %v3823, %v3813
        %v3834 = vpack.c.bf16 %v3824, %v3814
        %v3835 = vpack.c.bf16 %v3825, %v3815
        %v3836 = vpack.c.bf16 %v3826, %v3816
        %v3837 = vpack.c.bf16 %v3827, %v3817
        %v3838 = vpack.c.bf16 %v3828, %v3818
        %v3839 = vpack.c.bf16 %v3829, %v3819
        %v3840 = vpack.c.bf16 %v3830, %v3820
        %v3841 = vpack.c.bf16 %v3831, %v3821
        %3851 = vrot.lane.b32.xlu0 %v3832, 1
        %v3852 = vpop.permute.xlu0 %3851
        %3853 = vrot.lane.b32.xlu0 %v3833, 1
        %v3854 = vpop.permute.xlu0 %3853
        %3855 = vrot.lane.b32.xlu0 %v3834, 1
        %v3856 = vpop.permute.xlu0 %3855
        %3857 = vrot.lane.b32.xlu0 %v3835, 1
        %v3858 = vpop.permute.xlu0 %3857
        %3859 = vrot.lane.b32.xlu0 %v3836, 1
        %v3860 = vpop.permute.xlu0 %3859
        %3861 = vrot.lane.b32.xlu0 %v3837, 1
        %v3862 = vpop.permute.xlu0 %3861
        %3863 = vrot.lane.b32.xlu0 %v3838, 1
        %v3864 = vpop.permute.xlu0 %3863
        %3865 = vrot.lane.b32.xlu0 %v3839, 1
        %v3866 = vpop.permute.xlu0 %3865
        %3867 = vrot.lane.b32.xlu0 %v3840, 1
        %v3868 = vpop.permute.xlu0 %3867
        %v3869 = vsel %vm665, %v3852, %v3854
        %v3870 = vsel %vm665, %v3854, %v3856
        %v3871 = vsel %vm665, %v3856, %v3858
        %v3872 = vsel %vm665, %v3858, %v3860
        %v3873 = vsel %vm665, %v3860, %v3862
        %v3874 = vsel %vm665, %v3862, %v3864
        %v3875 = vsel %vm665, %v3864, %v3866
        %v3876 = vsel %vm665, %v3866, %v3868
        %vm3886 = vcmask 1047560
        %3887 = vst.msk [vmem:[#allocation2 + $0x8] sm:$0xff] %vm3886, %v3852
        %3888 = vst [vmem:[#allocation2 + $0x10] sm:$0xff] %v3869
        %3889 = vst [vmem:[#allocation2 + $0x18] sm:$0xff] %v3870
        %3890 = vst [vmem:[#allocation2 + $0x20] sm:$0xff] %v3871
        %3891 = vst [vmem:[#allocation2 + $0x28] sm:$0xff] %v3872
        %3892 = vst [vmem:[#allocation2 + $0x30] sm:$0xff] %v3873
        %3893 = vst [vmem:[#allocation2 + $0x38] sm:$0xff] %v3874
        %3894 = vst [vmem:[#allocation2 + $0x40] sm:$0xff] %v3875
        %3895 = vst [vmem:[#allocation2 + $0x48] sm:$0xff] %v3876
        %3896 = vst [vmem:[#allocation2] sm:$0xff] 0
        %vm3897 = vcmask 7168
        %3898 = vst.msk [vmem:[#allocation2 + $0x8] sm:$0xff] %vm3897, 0
        %3899 = vst [vmem:[#allocation2 + $0x98] sm:$0xff] %v3832
        %3900 = vst [vmem:[#allocation2 + $0xa0] sm:$0xff] %v3833
        %3901 = vst [vmem:[#allocation2 + $0xa8] sm:$0xff] %v3834
        %3902 = vst [vmem:[#allocation2 + $0xb0] sm:$0xff] %v3835
        %3903 = vst [vmem:[#allocation2 + $0xb8] sm:$0xff] %v3836
        %3904 = vst [vmem:[#allocation2 + $0xc0] sm:$0xff] %v3837
        %3905 = vst [vmem:[#allocation2 + $0xc8] sm:$0xff] %v3838
        %3906 = vst [vmem:[#allocation2 + $0xd0] sm:$0xff] %v3839
        %3907 = vst [vmem:[#allocation2 + $0xd8] sm:$0xff] %v3840
        %3908 = vst [vmem:[#allocation2 + $0x90] sm:$0xff] 0
        %3910 = vrot.lane.b32.xlu0 %v3832, 127
        %v3911 = vpop.permute.xlu0 %3910
        %3912 = vrot.lane.b32.xlu0 %v3833, 127
        %v3913 = vpop.permute.xlu0 %3912
        %3914 = vrot.lane.b32.xlu0 %v3834, 127
        %v3915 = vpop.permute.xlu0 %3914
        %3916 = vrot.lane.b32.xlu0 %v3835, 127
        %v3917 = vpop.permute.xlu0 %3916
        %3918 = vrot.lane.b32.xlu0 %v3836, 127
        %v3919 = vpop.permute.xlu0 %3918
        %3920 = vrot.lane.b32.xlu0 %v3837, 127
        %v3921 = vpop.permute.xlu0 %3920
        %3922 = vrot.lane.b32.xlu0 %v3838, 127
        %v3923 = vpop.permute.xlu0 %3922
        %3924 = vrot.lane.b32.xlu0 %v3839, 127
        %v3925 = vpop.permute.xlu0 %3924
        %3926 = vrot.lane.b32.xlu0 %v3840, 127
        %v3927 = vpop.permute.xlu0 %3926
        %3928 = vrot.lane.b32.xlu0 %v3841, 127
        %v3929 = vpop.permute.xlu0 %3928
        %v3930 = vsel %vm793, %v3911, %v3913
        %v3931 = vsel %vm793, %v3913, %v3915
        %v3932 = vsel %vm793, %v3915, %v3917
        %v3933 = vsel %vm793, %v3917, %v3919
        %v3934 = vsel %vm793, %v3919, %v3921
        %v3935 = vsel %vm793, %v3921, %v3923
        %v3936 = vsel %vm793, %v3923, %v3925
        %v3937 = vsel %vm793, %v3925, %v3927
        %v3938 = vsel %vm793, %v3927, %v3929
        %vm3949 = vcmask 1048568
        %3950 = vst.msk [vmem:[#allocation2 + $0x120] sm:$0xff] %vm3949, %v3911
        %3951 = vst [vmem:[#allocation2 + $0x128] sm:$0xff] %v3930
        %3952 = vst [vmem:[#allocation2 + $0x130] sm:$0xff] %v3931
        %3953 = vst [vmem:[#allocation2 + $0x138] sm:$0xff] %v3932
        %3954 = vst [vmem:[#allocation2 + $0x140] sm:$0xff] %v3933
        %3955 = vst [vmem:[#allocation2 + $0x148] sm:$0xff] %v3934
        %3956 = vst [vmem:[#allocation2 + $0x150] sm:$0xff] %v3935
        %3957 = vst [vmem:[#allocation2 + $0x158] sm:$0xff] %v3936
        %3958 = vst [vmem:[#allocation2 + $0x160] sm:$0xff] %v3937
        %3959 = vst [vmem:[#allocation2 + $0x168] sm:$0xff] %v3938
        %vm3960 = vcmask 1039360
        %3961 = vst.msk [vmem:[#allocation2 + $0x120] sm:$0xff] %vm3960, 0
        %3962 = vrot.lane.b32.xlu0 %v3841, 1
        %v3963 = vpop.permute.xlu0 %3962
        %v3964 = vsel %vm665, %v3868, %v3963
        %3966 = vst.msk [vmem:[#allocation2 + $0x1b0] sm:$0xff] %vm3886, %v3852
        %3967 = vst [vmem:[#allocation2 + $0x1b8] sm:$0xff] %v3869
        %3968 = vst [vmem:[#allocation2 + $0x1c0] sm:$0xff] %v3870
        %3969 = vst [vmem:[#allocation2 + $0x1c8] sm:$0xff] %v3871
        %3970 = vst [vmem:[#allocation2 + $0x1d0] sm:$0xff] %v3872
        %3971 = vst [vmem:[#allocation2 + $0x1d8] sm:$0xff] %v3873
        %3972 = vst [vmem:[#allocation2 + $0x1e0] sm:$0xff] %v3874
        %3973 = vst [vmem:[#allocation2 + $0x1e8] sm:$0xff] %v3875
        %3974 = vst [vmem:[#allocation2 + $0x1f0] sm:$0xff] %v3876
        %3975 = vst [vmem:[#allocation2 + $0x1f8] sm:$0xff] %v3964
        %3976 = vst.msk [vmem:[#allocation2 + $0x1b0] sm:$0xff] %vm3897, 0
        %3977 = vst [vmem:[#allocation2 + $0x240] sm:$0xff] %v3832
        %3978 = vst [vmem:[#allocation2 + $0x248] sm:$0xff] %v3833
        %3979 = vst [vmem:[#allocation2 + $0x250] sm:$0xff] %v3834
        %3980 = vst [vmem:[#allocation2 + $0x258] sm:$0xff] %v3835
        %3981 = vst [vmem:[#allocation2 + $0x260] sm:$0xff] %v3836
        %3982 = vst [vmem:[#allocation2 + $0x268] sm:$0xff] %v3837
        %3983 = vst [vmem:[#allocation2 + $0x270] sm:$0xff] %v3838
        %3984 = vst [vmem:[#allocation2 + $0x278] sm:$0xff] %v3839
        %3985 = vst [vmem:[#allocation2 + $0x280] sm:$0xff] %v3840
        %3986 = vst [vmem:[#allocation2 + $0x288] sm:$0xff] %v3841
        %3988 = vst [vmem:[#allocation2 + $0x2d0] sm:$0xff] %v3930
        %3989 = vst [vmem:[#allocation2 + $0x2d8] sm:$0xff] %v3931
        %3990 = vst [vmem:[#allocation2 + $0x2e0] sm:$0xff] %v3932
        %3991 = vst [vmem:[#allocation2 + $0x2e8] sm:$0xff] %v3933
        %3992 = vst [vmem:[#allocation2 + $0x2f0] sm:$0xff] %v3934
        %3993 = vst [vmem:[#allocation2 + $0x2f8] sm:$0xff] %v3935
        %3994 = vst [vmem:[#allocation2 + $0x300] sm:$0xff] %v3936
        %3995 = vst [vmem:[#allocation2 + $0x308] sm:$0xff] %v3937
        %3996 = vst [vmem:[#allocation2 + $0x310] sm:$0xff] %v3938
        %3997 = vst.msk [vmem:[#allocation2 + $0x318] sm:$0xff] %vm3960, %v3929
        %3998 = vst.msk [vmem:[#allocation2 + $0x318] sm:$0xff] %vm3949, 0
        %4000 = vst [vmem:[#allocation2 + $0x360] sm:$0xff] %v3869
        %4001 = vst [vmem:[#allocation2 + $0x368] sm:$0xff] %v3870
        %4002 = vst [vmem:[#allocation2 + $0x370] sm:$0xff] %v3871
        %4003 = vst [vmem:[#allocation2 + $0x378] sm:$0xff] %v3872
        %4004 = vst [vmem:[#allocation2 + $0x380] sm:$0xff] %v3873
        %4005 = vst [vmem:[#allocation2 + $0x388] sm:$0xff] %v3874
        %4006 = vst [vmem:[#allocation2 + $0x390] sm:$0xff] %v3875
        %4007 = vst [vmem:[#allocation2 + $0x398] sm:$0xff] %v3876
        %4008 = vst [vmem:[#allocation2 + $0x3a0] sm:$0xff] %v3964
        %4009 = vst.msk [vmem:[#allocation2 + $0x3a8] sm:$0xff] %vm3897, %v3963
        %4010 = vst.msk [vmem:[#allocation2 + $0x3a8] sm:$0xff] %vm3886, 0
        %4011 = vst [vmem:[#allocation2 + $0x3f0] sm:$0xff] %v3833
        %4012 = vst [vmem:[#allocation2 + $0x3f8] sm:$0xff] %v3834
        %4013 = vst [vmem:[#allocation2 + $0x400] sm:$0xff] %v3835
        %4014 = vst [vmem:[#allocation2 + $0x408] sm:$0xff] %v3836
        %4015 = vst [vmem:[#allocation2 + $0x410] sm:$0xff] %v3837
        %4016 = vst [vmem:[#allocation2 + $0x418] sm:$0xff] %v3838
        %4017 = vst [vmem:[#allocation2 + $0x420] sm:$0xff] %v3839
        %4018 = vst [vmem:[#allocation2 + $0x428] sm:$0xff] %v3840
        %4019 = vst [vmem:[#allocation2 + $0x430] sm:$0xff] %v3841
        %4020 = vst [vmem:[#allocation2 + $0x438] sm:$0xff] 0
        %4021 = vst [vmem:[#allocation2 + $0x480] sm:$0xff] %v3931
        %4022 = vst [vmem:[#allocation2 + $0x488] sm:$0xff] %v3932
        %4023 = vst [vmem:[#allocation2 + $0x490] sm:$0xff] %v3933
        %4024 = vst [vmem:[#allocation2 + $0x498] sm:$0xff] %v3934
        %4025 = vst [vmem:[#allocation2 + $0x4a0] sm:$0xff] %v3935
        %4026 = vst [vmem:[#allocation2 + $0x4a8] sm:$0xff] %v3936
        %4027 = vst [vmem:[#allocation2 + $0x4b0] sm:$0xff] %v3937
        %4028 = vst [vmem:[#allocation2 + $0x4b8] sm:$0xff] %v3938
        %4029 = vst.msk [vmem:[#allocation2 + $0x4c0] sm:$0xff] %vm3960, %v3929
        %4030 = vst.msk [vmem:[#allocation2 + $0x4c0] sm:$0xff] %vm3949, 0
        %4031 = vst [vmem:[#allocation2 + $0x4c8] sm:$0xff] 0
        %v4032 = vld [vmem:[%s4] sm:$0xff]
        %v4033 = vld [vmem:[%s4 + $0x8] sm:$0xff]
        %v4034 = vld [vmem:[#allocation2] sm:$0xff]
        %v4035 = vld [vmem:[#allocation2 + $0x8] sm:$0xff]
        %v4036 = vld [vmem:[#allocation2 + $0x10] sm:$0xff]
        %v4037 = vld [vmem:[#allocation2 + $0x18] sm:$0xff]
        %v4038 = vld [vmem:[#allocation2 + $0x20] sm:$0xff]
        %v4039 = vld [vmem:[#allocation2 + $0x28] sm:$0xff]
        %v4040 = vld [vmem:[#allocation2 + $0x30] sm:$0xff]
        %v4041 = vld [vmem:[#allocation2 + $0x38] sm:$0xff]
        %v4042 = vld [vmem:[#allocation2 + $0x40] sm:$0xff]
        %v4043 = vld [vmem:[#allocation2 + $0x48] sm:$0xff]
        %v4044 = vld [vmem:[#allocation2 + $0x90] sm:$0xff]
        %v4045 = vld [vmem:[#allocation2 + $0x98] sm:$0xff]
        %v4046 = vld [vmem:[#allocation2 + $0xa0] sm:$0xff]
        %v4047 = vld [vmem:[#allocation2 + $0xa8] sm:$0xff]
        %v4048 = vld [vmem:[#allocation2 + $0xb0] sm:$0xff]
        %v4049 = vld [vmem:[#allocation2 + $0xb8] sm:$0xff]
        %v4050 = vld [vmem:[#allocation2 + $0xc0] sm:$0xff]
        %v4051 = vld [vmem:[#allocation2 + $0xc8] sm:$0xff]
        %v4052 = vld [vmem:[#allocation2 + $0xd0] sm:$0xff]
        %v4053 = vld [vmem:[#allocation2 + $0xd8] sm:$0xff]
        %v4054 = vld [vmem:[#allocation2 + $0x120] sm:$0xff]
        %v4055 = vld [vmem:[#allocation2 + $0x128] sm:$0xff]
        %v4056 = vld [vmem:[#allocation2 + $0x130] sm:$0xff]
        %v4057 = vld [vmem:[#allocation2 + $0x138] sm:$0xff]
        %v4058 = vld [vmem:[#allocation2 + $0x140] sm:$0xff]
        %v4059 = vld [vmem:[#allocation2 + $0x148] sm:$0xff]
        %v4060 = vld [vmem:[#allocation2 + $0x150] sm:$0xff]
        %v4061 = vld [vmem:[#allocation2 + $0x158] sm:$0xff]
        %v4062 = vld [vmem:[#allocation2 + $0x160] sm:$0xff]
        %v4063 = vld [vmem:[#allocation2 + $0x168] sm:$0xff]
        %v4064 = vld [vmem:[#allocation2 + $0x1b0] sm:$0xff]
        %v4065 = vld [vmem:[#allocation2 + $0x1b8] sm:$0xff]
        %v4066 = vld [vmem:[#allocation2 + $0x1c0] sm:$0xff]
        %v4067 = vld [vmem:[#allocation2 + $0x1c8] sm:$0xff]
        %v4068 = vld [vmem:[#allocation2 + $0x1d0] sm:$0xff]
        %v4069 = vld [vmem:[#allocation2 + $0x1d8] sm:$0xff]
        %v4070 = vld [vmem:[#allocation2 + $0x1e0] sm:$0xff]
        %v4071 = vld [vmem:[#allocation2 + $0x1e8] sm:$0xff]
        %v4072 = vld [vmem:[#allocation2 + $0x1f0] sm:$0xff]
        %v4073 = vld [vmem:[#allocation2 + $0x1f8] sm:$0xff]
        %v4074 = vld [vmem:[#allocation2 + $0x240] sm:$0xff]
        %v4075 = vld [vmem:[#allocation2 + $0x248] sm:$0xff]
        %v4076 = vld [vmem:[#allocation2 + $0x250] sm:$0xff]
        %v4077 = vld [vmem:[#allocation2 + $0x258] sm:$0xff]
        %v4078 = vld [vmem:[#allocation2 + $0x260] sm:$0xff]
        %v4079 = vld [vmem:[#allocation2 + $0x268] sm:$0xff]
        %v4080 = vld [vmem:[#allocation2 + $0x270] sm:$0xff]
        %v4081 = vld [vmem:[#allocation2 + $0x278] sm:$0xff]
        %v4082 = vld [vmem:[#allocation2 + $0x280] sm:$0xff]
        %v4083 = vld [vmem:[#allocation2 + $0x288] sm:$0xff]
        %v4084 = vld [vmem:[#allocation2 + $0x2d0] sm:$0xff]
        %v4085 = vld [vmem:[#allocation2 + $0x2d8] sm:$0xff]
        %v4086 = vld [vmem:[#allocation2 + $0x2e0] sm:$0xff]
        %v4087 = vld [vmem:[#allocation2 + $0x2e8] sm:$0xff]
        %v4088 = vld [vmem:[#allocation2 + $0x2f0] sm:$0xff]
        %v4089 = vld [vmem:[#allocation2 + $0x2f8] sm:$0xff]
        %v4090 = vld [vmem:[#allocation2 + $0x300] sm:$0xff]
        %v4091 = vld [vmem:[#allocation2 + $0x308] sm:$0xff]
        %v4092 = vld [vmem:[#allocation2 + $0x310] sm:$0xff]
        %v4093 = vld [vmem:[#allocation2 + $0x318] sm:$0xff]
        %v4094 = vld [vmem:[#allocation2 + $0x360] sm:$0xff]
        %v4095 = vld [vmem:[#allocation2 + $0x368] sm:$0xff]
        %v4096 = vld [vmem:[#allocation2 + $0x370] sm:$0xff]
        %v4097 = vld [vmem:[#allocation2 + $0x378] sm:$0xff]
        %v4098 = vld [vmem:[#allocation2 + $0x380] sm:$0xff]
        %v4099 = vld [vmem:[#allocation2 + $0x388] sm:$0xff]
        %v4100 = vld [vmem:[#allocation2 + $0x390] sm:$0xff]
        %v4101 = vld [vmem:[#allocation2 + $0x398] sm:$0xff]
        %v4102 = vld [vmem:[#allocation2 + $0x3a0] sm:$0xff]
        %v4103 = vld [vmem:[#allocation2 + $0x3a8] sm:$0xff]
        %v4104 = vld [vmem:[#allocation2 + $0x3f0] sm:$0xff]
        %v4105 = vld [vmem:[#allocation2 + $0x3f8] sm:$0xff]
        %v4106 = vld [vmem:[#allocation2 + $0x400] sm:$0xff]
        %v4107 = vld [vmem:[#allocation2 + $0x408] sm:$0xff]
        %v4108 = vld [vmem:[#allocation2 + $0x410] sm:$0xff]
        %v4109 = vld [vmem:[#allocation2 + $0x418] sm:$0xff]
        %v4110 = vld [vmem:[#allocation2 + $0x420] sm:$0xff]
        %v4111 = vld [vmem:[#allocation2 + $0x428] sm:$0xff]
        %v4112 = vld [vmem:[#allocation2 + $0x430] sm:$0xff]
        %v4113 = vld [vmem:[#allocation2 + $0x438] sm:$0xff]
        %v4114 = vld [vmem:[#allocation2 + $0x480] sm:$0xff]
        %v4115 = vld [vmem:[#allocation2 + $0x488] sm:$0xff]
        %v4116 = vld [vmem:[#allocation2 + $0x490] sm:$0xff]
        %v4117 = vld [vmem:[#allocation2 + $0x498] sm:$0xff]
        %v4118 = vld [vmem:[#allocation2 + $0x4a0] sm:$0xff]
        %v4119 = vld [vmem:[#allocation2 + $0x4a8] sm:$0xff]
        %v4120 = vld [vmem:[#allocation2 + $0x4b0] sm:$0xff]
        %v4121 = vld [vmem:[#allocation2 + $0x4b8] sm:$0xff]
        %v4122 = vld [vmem:[#allocation2 + $0x4c0] sm:$0xff]
        %v4123 = vld [vmem:[#allocation2 + $0x4c8] sm:$0xff]
        %v4124 = vld [vmem:[%s8] sm:$0xff]
        %v4125 = vld [vmem:[%s8 + $0x8] sm:$0xff]
        %4127 = vset.pattern.permute.xlu0 0
        %4128 = vperm.xlu0 %4127, %v4124
        %v4129 = vpop.permute.xlu0 %4128
        %4132 = vset.pattern.permute.xlu0 0
        %4133 = vperm.xlu0 %4132, %v4125
        %v4134 = vpop.permute.xlu0 %4133
        %v4138 = vunpack.c.l.b16 %v4032
        %v4139 = vunpack.c.h.b16 %v4032
        %v4140 = vunpack.c.l.b16 %v4033
        %v4141 = vunpack.c.h.b16 %v4033
        %v4142 = vpack.c.b16 %v4140, %v4138
        %v4143 = vpack.c.b16 %v4141, %v4139
        %vm4145 = vcmask 130048
        %v4147 = vsel %vm4145, %v4143, 0
        %4149 = vmatprep.subr.bf16.mxu0 %v4035
        %4150 = vmatpush1.bf16.msra.mxu0 %v4034
        %4151 = vmatprep.subr.bf16.mxu0 %v4045
        %4152 = vmatpush1.bf16.msra.mxu0 %v4044
        %4153 = vmatprep.subr.bf16.mxu0 %v4055
        %4154 = vmatpush1.bf16.msra.mxu0 %v4054
        %4155 = vmatprep.subr.bf16.mxu0 %v4065
        %4156 = vmatpush1.bf16.msra.mxu0 %v4064
        %4157 = vmatprep.subr.bf16.mxu0 %v4075
        %4158 = vmatpush1.bf16.msra.mxu0 %v4074
        %4159 = vmatprep.subr.bf16.mxu0 %v4085
        %4160 = vmatpush1.bf16.msra.mxu0 %v4084
        %4161 = vmatprep.subr.bf16.mxu0 %v4095
        %4162 = vmatpush1.bf16.msra.mxu0 %v4094
        %4163 = vmatprep.subr.bf16.mxu0 %v4105
        %4164 = vmatpush1.bf16.msra.mxu0 %v4104
        %4165 = vmatprep.subr.bf16.mxu0 %v4115
        %4166 = vmatpush1.bf16.msra.mxu0 %v4114
        %4167 = vmatprep.subr.bf16.mxu0 0
        %4168 = vmatpush1.bf16.msra.mxu0 0
        %4169 = vmatprep.subr.bf16.mxu0 0
        %4170 = vmatpush1.bf16.msra.mxu0 0
        %4171 = vmatprep.subr.bf16.mxu0 0
        %4172 = vmatpush1.bf16.msra.mxu0 0
        %4173 = vmatprep.subr.bf16.mxu0 0
        %4174 = vmatpush1.bf16.msra.mxu0 0
        %4175 = vmatprep.subr.bf16.mxu0 0
        %4176 = vmatpush1.bf16.msra.mxu0 0
        %4177 = vmatprep.subr.bf16.mxu0 0
        %4178 = vmatpush1.bf16.msra.mxu0 0
        %4179 = vmatprep.subr.bf16.mxu0 0
        %4180 = vmatpush1.bf16.msra.mxu0 0
        %4181 = vmatprep.mubr.bf16.mxu0 %v4147
        %4182 = vmatmul.mubr.bf16.gmra.mrb[0].mxu0 %v4142
        %v4183 = vpop.f32.mrb[0].mxu0
        %v4184 = vadd.f32 %v4129, %v4183
        %v4185 = vpop.f32.mrb[0].mxu0
        %v4186 = vadd.f32 %v4129, %v4185
        %v4187 = vpop.f32.mrb[0].mxu0
        %v4188 = vadd.f32 %v4134, %v4187
        %v4189 = vpop.f32.mrb[0].mxu0
        %v4190 = vadd.f32 %v4134, %v4189
        %4191 = vdwg.mxu0
        %4192 = vmatprep.subr.bf16.mxu0 %v4037
        %4193 = vmatpush1.bf16.msra.mxu0 %v4036
        %4194 = vmatprep.subr.bf16.mxu0 %v4047
        %4195 = vmatpush1.bf16.msra.mxu0 %v4046
        %4196 = vmatprep.subr.bf16.mxu0 %v4057
        %4197 = vmatpush1.bf16.msra.mxu0 %v4056
        %4198 = vmatprep.subr.bf16.mxu0 %v4067
        %4199 = vmatpush1.bf16.msra.mxu0 %v4066
        %4200 = vmatprep.subr.bf16.mxu0 %v4077
        %4201 = vmatpush1.bf16.msra.mxu0 %v4076
        %4202 = vmatprep.subr.bf16.mxu0 %v4087
        %4203 = vmatpush1.bf16.msra.mxu0 %v4086
        %4204 = vmatprep.subr.bf16.mxu0 %v4097
        %4205 = vmatpush1.bf16.msra.mxu0 %v4096
        %4206 = vmatprep.subr.bf16.mxu0 %v4107
        %4207 = vmatpush1.bf16.msra.mxu0 %v4106
        %4208 = vmatprep.subr.bf16.mxu0 %v4117
        %4209 = vmatpush1.bf16.msra.mxu0 %v4116
        %4210 = vmatprep.subr.bf16.mxu0 0
        %4211 = vmatpush1.bf16.msra.mxu0 0
        %4212 = vmatprep.subr.bf16.mxu0 0
        %4213 = vmatpush1.bf16.msra.mxu0 0
        %4214 = vmatprep.subr.bf16.mxu0 0
        %4215 = vmatpush1.bf16.msra.mxu0 0
        %4216 = vmatprep.subr.bf16.mxu0 0
        %4217 = vmatpush1.bf16.msra.mxu0 0
        %4218 = vmatprep.subr.bf16.mxu0 0
        %4219 = vmatpush1.bf16.msra.mxu0 0
        %4220 = vmatprep.subr.bf16.mxu0 0
        %4221 = vmatpush1.bf16.msra.mxu0 0
        %4222 = vmatprep.subr.bf16.mxu0 0
        %4223 = vmatpush1.bf16.msra.mxu0 0
        %4224 = vmatprep.mubr.bf16.mxu0 %v4147
        %4225 = vmatmul.mubr.bf16.gmra.mrb[0].mxu0 %v4142
        %v4226 = vpop.f32.mrb[0].mxu0
        %v4227 = vadd.f32 %v4129, %v4226
        %v4228 = vpop.f32.mrb[0].mxu0
        %v4229 = vadd.f32 %v4129, %v4228
        %v4230 = vpop.f32.mrb[0].mxu0
        %v4231 = vadd.f32 %v4134, %v4230
        %v4232 = vpop.f32.mrb[0].mxu0
        %v4233 = vadd.f32 %v4134, %v4232
        %4234 = vdwg.mxu0
        %4235 = vmatprep.subr.bf16.mxu0 %v4039
        %4236 = vmatpush1.bf16.msra.mxu0 %v4038
        %4237 = vmatprep.subr.bf16.mxu0 %v4049
        %4238 = vmatpush1.bf16.msra.mxu0 %v4048
        %4239 = vmatprep.subr.bf16.mxu0 %v4059
        %4240 = vmatpush1.bf16.msra.mxu0 %v4058
        %4241 = vmatprep.subr.bf16.mxu0 %v4069
        %4242 = vmatpush1.bf16.msra.mxu0 %v4068
        %4243 = vmatprep.subr.bf16.mxu0 %v4079
        %4244 = vmatpush1.bf16.msra.mxu0 %v4078
        %4245 = vmatprep.subr.bf16.mxu0 %v4089
        %4246 = vmatpush1.bf16.msra.mxu0 %v4088
        %4247 = vmatprep.subr.bf16.mxu0 %v4099
        %4248 = vmatpush1.bf16.msra.mxu0 %v4098
        %4249 = vmatprep.subr.bf16.mxu0 %v4109
        %4250 = vmatpush1.bf16.msra.mxu0 %v4108
        %4251 = vmatprep.subr.bf16.mxu0 %v4119
        %4252 = vmatpush1.bf16.msra.mxu0 %v4118
        %4253 = vmatprep.subr.bf16.mxu0 0
        %4254 = vmatpush1.bf16.msra.mxu0 0
        %4255 = vmatprep.subr.bf16.mxu0 0
        %4256 = vmatpush1.bf16.msra.mxu0 0
        %4257 = vmatprep.subr.bf16.mxu0 0
        %4258 = vmatpush1.bf16.msra.mxu0 0
        %4259 = vmatprep.subr.bf16.mxu0 0
        %4260 = vmatpush1.bf16.msra.mxu0 0
        %4261 = vmatprep.subr.bf16.mxu0 0
        %4262 = vmatpush1.bf16.msra.mxu0 0
        %4263 = vmatprep.subr.bf16.mxu0 0
        %4264 = vmatpush1.bf16.msra.mxu0 0
        %4265 = vmatprep.subr.bf16.mxu0 0
        %4266 = vmatpush1.bf16.msra.mxu0 0
        %4267 = vmatprep.mubr.bf16.mxu0 %v4147
        %4268 = vmatmul.mubr.bf16.gmra.mrb[0].mxu0 %v4142
        %v4269 = vpop.f32.mrb[0].mxu0
        %v4270 = vadd.f32 %v4129, %v4269
        %v4271 = vpop.f32.mrb[0].mxu0
        %v4272 = vadd.f32 %v4129, %v4271
        %v4273 = vpop.f32.mrb[0].mxu0
        %v4274 = vadd.f32 %v4134, %v4273
        %v4275 = vpop.f32.mrb[0].mxu0
        %v4276 = vadd.f32 %v4134, %v4275
        %4277 = vdwg.mxu0
        %4278 = vmatprep.subr.bf16.mxu0 %v4041
        %4279 = vmatpush1.bf16.msra.mxu0 %v4040
        %4280 = vmatprep.subr.bf16.mxu0 %v4051
        %4281 = vmatpush1.bf16.msra.mxu0 %v4050
        %4282 = vmatprep.subr.bf16.mxu0 %v4061
        %4283 = vmatpush1.bf16.msra.mxu0 %v4060
        %4284 = vmatprep.subr.bf16.mxu0 %v4071
        %4285 = vmatpush1.bf16.msra.mxu0 %v4070
        %4286 = vmatprep.subr.bf16.mxu0 %v4081
        %4287 = vmatpush1.bf16.msra.mxu0 %v4080
        %4288 = vmatprep.subr.bf16.mxu0 %v4091
        %4289 = vmatpush1.bf16.msra.mxu0 %v4090
        %4290 = vmatprep.subr.bf16.mxu0 %v4101
        %4291 = vmatpush1.bf16.msra.mxu0 %v4100
        %4292 = vmatprep.subr.bf16.mxu0 %v4111
        %4293 = vmatpush1.bf16.msra.mxu0 %v4110
        %4294 = vmatprep.subr.bf16.mxu0 %v4121
        %4295 = vmatpush1.bf16.msra.mxu0 %v4120
        %4296 = vmatprep.subr.bf16.mxu0 0
        %4297 = vmatpush1.bf16.msra.mxu0 0
        %4298 = vmatprep.subr.bf16.mxu0 0
        %4299 = vmatpush1.bf16.msra.mxu0 0
        %4300 = vmatprep.subr.bf16.mxu0 0
        %4301 = vmatpush1.bf16.msra.mxu0 0
        %4302 = vmatprep.subr.bf16.mxu0 0
        %4303 = vmatpush1.bf16.msra.mxu0 0
        %4304 = vmatprep.subr.bf16.mxu0 0
        %4305 = vmatpush1.bf16.msra.mxu0 0
        %4306 = vmatprep.subr.bf16.mxu0 0
        %4307 = vmatpush1.bf16.msra.mxu0 0
        %4308 = vmatprep.subr.bf16.mxu0 0
        %4309 = vmatpush1.bf16.msra.mxu0 0
        %4310 = vmatprep.mubr.bf16.mxu0 %v4147
        %4311 = vmatmul.mubr.bf16.gmra.mrb[0].mxu0 %v4142
        %v4312 = vpop.f32.mrb[0].mxu0
        %v4313 = vadd.f32 %v4129, %v4312
        %v4314 = vpop.f32.mrb[0].mxu0
        %v4315 = vadd.f32 %v4129, %v4314
        %v4316 = vpop.f32.mrb[0].mxu0
        %v4317 = vadd.f32 %v4134, %v4316
        %v4318 = vpop.f32.mrb[0].mxu0
        %v4319 = vadd.f32 %v4134, %v4318
        %4320 = vdwg.mxu0
        %4321 = vmatprep.subr.bf16.mxu0 %v4043
        %4322 = vmatpush1.bf16.msra.mxu0 %v4042
        %4323 = vmatprep.subr.bf16.mxu0 %v4053
        %4324 = vmatpush1.bf16.msra.mxu0 %v4052
        %4325 = vmatprep.subr.bf16.mxu0 %v4063
        %4326 = vmatpush1.bf16.msra.mxu0 %v4062
        %4327 = vmatprep.subr.bf16.mxu0 %v4073
        %4328 = vmatpush1.bf16.msra.mxu0 %v4072
        %4329 = vmatprep.subr.bf16.mxu0 %v4083
        %4330 = vmatpush1.bf16.msra.mxu0 %v4082
        %4331 = vmatprep.subr.bf16.mxu0 %v4093
        %4332 = vmatpush1.bf16.msra.mxu0 %v4092
        %4333 = vmatprep.subr.bf16.mxu0 %v4103
        %4334 = vmatpush1.bf16.msra.mxu0 %v4102
        %4335 = vmatprep.subr.bf16.mxu0 %v4113
        %4336 = vmatpush1.bf16.msra.mxu0 %v4112
        %4337 = vmatprep.subr.bf16.mxu0 %v4123
        %4338 = vmatpush1.bf16.msra.mxu0 %v4122
        %4339 = vmatprep.subr.bf16.mxu0 0
        %4340 = vmatpush1.bf16.msra.mxu0 0
        %4341 = vmatprep.subr.bf16.mxu0 0
        %4342 = vmatpush1.bf16.msra.mxu0 0
        %4343 = vmatprep.subr.bf16.mxu0 0
        %4344 = vmatpush1.bf16.msra.mxu0 0
        %4345 = vmatprep.subr.bf16.mxu0 0
        %4346 = vmatpush1.bf16.msra.mxu0 0
        %4347 = vmatprep.subr.bf16.mxu0 0
        %4348 = vmatpush1.bf16.msra.mxu0 0
        %4349 = vmatprep.subr.bf16.mxu0 0
        %4350 = vmatpush1.bf16.msra.mxu0 0
        %4351 = vmatprep.subr.bf16.mxu0 0
        %4352 = vmatpush1.bf16.msra.mxu0 0
        %4353 = vmatprep.mubr.bf16.mxu0 %v4147
        %4354 = vmatmul.mubr.bf16.gmra.mrb[0].mxu0 %v4142
        %v4355 = vpop.f32.mrb[0].mxu0
        %v4356 = vadd.f32 %v4129, %v4355
        %v4357 = vpop.f32.mrb[0].mxu0
        %v4358 = vadd.f32 %v4129, %v4357
        %v4359 = vpop.f32.mrb[0].mxu0
        %v4360 = vadd.f32 %v4134, %v4359
        %v4361 = vpop.f32.mrb[0].mxu0
        %v4362 = vadd.f32 %v4134, %v4361
        %4363 = vdwg.mxu0
        %v4364 = vmax.f32 %v4184, 0.0
        %v4365 = vmax.f32 %v4186, 0.0
        %v4366 = vmax.f32 %v4227, 0.0
        %v4367 = vmax.f32 %v4229, 0.0
        %v4368 = vmax.f32 %v4270, 0.0
        %v4369 = vmax.f32 %v4272, 0.0
        %v4370 = vmax.f32 %v4313, 0.0
        %v4371 = vmax.f32 %v4315, 0.0
        %v4372 = vmax.f32 %v4356, 0.0
        %v4373 = vmax.f32 %v4358, 0.0
        %v4374 = vmax.f32 %v4188, 0.0
        %v4375 = vmax.f32 %v4190, 0.0
        %v4376 = vmax.f32 %v4231, 0.0
        %v4377 = vmax.f32 %v4233, 0.0
        %v4378 = vmax.f32 %v4274, 0.0
        %v4379 = vmax.f32 %v4276, 0.0
        %v4380 = vmax.f32 %v4317, 0.0
        %v4381 = vmax.f32 %v4319, 0.0
        %v4382 = vmax.f32 %v4360, 0.0
        %v4383 = vmax.f32 %v4362, 0.0
        %v4384 = vld [vmem:[#allocation11] sm:$0xff]
        %v4385 = vld [vmem:[#allocation11 + $0x8] sm:$0x3]
        %v4388 = vlaneseq
        %v4389 = vshrl.u32 %v4388, 7
        %v4390 = vsub.s32 0, %v4389
        %v4391 = vrot.slane %v4384, %v4390
        %v4392 = vlaneseq
        %v4393 = vshrl.u32 %v4392, 7
        %v4394 = vsub.s32 1, %v4393
        %v4395 = vrot.slane %v4384, %v4394
        %v4396 = vlaneseq
        %v4397 = vshrl.u32 %v4396, 7
        %v4398 = vsub.s32 2, %v4397
        %v4399 = vrot.slane %v4384, %v4398
        %v4400 = vlaneseq
        %v4401 = vshrl.u32 %v4400, 7
        %v4402 = vsub.s32 3, %v4401
        %v4403 = vrot.slane %v4384, %v4402
        %v4404 = vlaneseq
        %v4405 = vshrl.u32 %v4404, 7
        %v4406 = vsub.s32 4, %v4405
        %v4407 = vrot.slane %v4384, %v4406
        %v4408 = vlaneseq
        %v4409 = vshrl.u32 %v4408, 7
        %v4410 = vsub.s32 5, %v4409
        %v4411 = vrot.slane %v4384, %v4410
        %v4412 = vlaneseq
        %v4413 = vshrl.u32 %v4412, 7
        %v4414 = vsub.s32 6, %v4413
        %v4415 = vrot.slane %v4384, %v4414
        %v4416 = vlaneseq
        %v4417 = vshrl.u32 %v4416, 7
        %v4418 = vsub.s32 7, %v4417
        %v4419 = vrot.slane %v4384, %v4418
        %v4420 = vlaneseq
        %v4421 = vshrl.u32 %v4420, 7
        %v4422 = vsub.s32 0, %v4421
        %v4423 = vrot.slane %v4385, %v4422
        %v4424 = vlaneseq
        %v4425 = vshrl.u32 %v4424, 7
        %v4426 = vsub.s32 1, %v4425
        %v4427 = vrot.slane %v4385, %v4426
        %v4438 = vmul.f32 %v4364, %v4391
        %v4439 = vmul.f32 %v4365, %v4395
        %v4440 = vmul.f32 %v4366, %v4399
        %v4441 = vmul.f32 %v4367, %v4403
        %v4442 = vmul.f32 %v4368, %v4407
        %v4443 = vmul.f32 %v4369, %v4411
        %v4444 = vmul.f32 %v4370, %v4415
        %v4445 = vmul.f32 %v4371, %v4419
        %v4446 = vmul.f32 %v4372, %v4423
        %v4447 = vmul.f32 %v4373, %v4427
        %v4448 = vmul.f32 %v4374, %v4391
        %v4449 = vmul.f32 %v4375, %v4395
        %v4450 = vmul.f32 %v4376, %v4399
        %v4451 = vmul.f32 %v4377, %v4403
        %v4452 = vmul.f32 %v4378, %v4407
        %v4453 = vmul.f32 %v4379, %v4411
        %v4454 = vmul.f32 %v4380, %v4415
        %v4455 = vmul.f32 %v4381, %v4419
        %v4456 = vmul.f32 %v4382, %v4423
        %v4457 = vmul.f32 %v4383, %v4427
        %v4458 = vadd.f32 %v4438, %v4439
        %v4459 = vadd.f32 %v4458, %v4440
        %v4460 = vadd.f32 %v4459, %v4441
        %v4461 = vadd.f32 %v4460, %v4442
        %v4462 = vadd.f32 %v4461, %v4443
        %v4463 = vadd.f32 %v4462, %v4444
        %v4464 = vadd.f32 %v4463, %v4445
        %v4465 = vadd.f32 %v4464, %v4446
        %v4466 = vadd.f32 %v4465, %v4447
        %4467 = vadd.xlane.f32.xlu0 %v4466
        %v4468 = vpop.xlane.xlu0 %4467
        %v4469 = vadd.f32 %v4448, %v4449
        %v4470 = vadd.f32 %v4469, %v4450
        %v4471 = vadd.f32 %v4470, %v4451
        %v4472 = vadd.f32 %v4471, %v4452
        %v4473 = vadd.f32 %v4472, %v4453
        %v4474 = vadd.f32 %v4473, %v4454
        %v4475 = vadd.f32 %v4474, %v4455
        %v4476 = vadd.f32 %v4475, %v4456
        %v4477 = vadd.f32 %v4476, %v4457
        %4478 = vadd.xlane.f32.xlu0 %v4477
        %v4479 = vpop.xlane.xlu0 %4478
        %v4480 = vmul.f32 %v4468, 0.015625
        %v4481 = vmul.f32 %v4479, 0.015625
        %4482 = vst.msk [vmem:[%s572] sm:$0xff] %vm3897, %v4480
        %4483 = vst.msk [vmem:[%s572 + $0x8] sm:$0xff] %vm3897, %v4481
        %v4484 = vld [vmem:[%s12] sm:$0xff]
        %v4485 = vld [vmem:[%s12 + $0x8] sm:$0xf]
        %v4486 = vld [vmem:[%s13] sm:$0xff]
        %v4487 = vld [vmem:[%s13 + $0x8] sm:$0xf]
        %v4489 = vsel %vm4145, %v4484, 0
        %v4492 = vsel %vm4145, %v4485, 0
        %4494 = vmatprep.subr.mxu0 0.0
        %4495 = vmatpush1.msra.mxu0 %v4480
        %4496 = vmatprep.subr.mxu0 0.0
        %4497 = vmatpush1.msra.mxu0 %v4481
        %4498 = vmatprep.subr.mxu0 0.0
        %4499 = vmatpush1.msra.mxu0 0.0
        %4500 = vmatprep.subr.mxu0 0.0
        %4501 = vmatpush1.msra.mxu0 0.0
        %4502 = vmatprep.subr.mxu0 0.0
        %4503 = vmatpush1.msra.mxu0 0.0
        %4504 = vmatprep.subr.mxu0 0.0
        %4505 = vmatpush1.msra.mxu0 0.0
        %4506 = vmatprep.subr.mxu0 0.0
        %4507 = vmatpush1.msra.mxu0 0.0
        %4508 = vmatprep.subr.mxu0 0.0
        %4509 = vmatpush1.msra.mxu0 0.0
        %4510 = vmatprep.subr.mxu0 0.0
        %4511 = vmatpush1.msra.mxu0 0.0
        %4512 = vmatprep.subr.mxu0 0.0
        %4513 = vmatpush1.msra.mxu0 0.0
        %4514 = vmatprep.subr.mxu0 0.0
        %4515 = vmatpush1.msra.mxu0 0.0
        %4516 = vmatprep.subr.mxu0 0.0
        %4517 = vmatpush1.msra.mxu0 0.0
        %4518 = vmatprep.subr.mxu0 0.0
        %4519 = vmatpush1.msra.mxu0 0.0
        %4520 = vmatprep.subr.mxu0 0.0
        %4521 = vmatpush1.msra.mxu0 0.0
        %4522 = vmatprep.subr.mxu0 0.0
        %4523 = vmatpush1.msra.mxu0 0.0
        %4524 = vmatprep.subr.mxu0 0.0
        %4525 = vmatpush1.msra.mxu0 0.0
        %4526 = vmatprep.subr.mxu0 0.0
        %4527 = vmatpush1.msra.mxu0 0.0
        %4528 = vmatprep.subr.mxu0 0.0
        %4529 = vmatpush1.msra.mxu0 0.0
        %4530 = vmatprep.subr.mxu0 0.0
        %4531 = vmatpush1.msra.mxu0 0.0
        %4532 = vmatprep.subr.mxu0 0.0
        %4533 = vmatpush1.msra.mxu0 0.0
        %4534 = vmatprep.subr.mxu0 0.0
        %4535 = vmatpush1.msra.mxu0 0.0
        %4536 = vmatprep.subr.mxu0 0.0
        %4537 = vmatpush1.msra.mxu0 0.0
        %4538 = vmatprep.subr.mxu0 0.0
        %4539 = vmatpush1.msra.mxu0 0.0
        %4540 = vmatprep.subr.mxu0 0.0
        %4541 = vmatpush1.msra.mxu0 0.0
        %4542 = vmatprep.subr.mxu0 0.0
        %4543 = vmatpush1.msra.mxu0 0.0
        %4544 = vmatprep.subr.mxu0 0.0
        %4545 = vmatpush1.msra.mxu0 0.0
        %4546 = vmatprep.subr.mxu0 0.0
        %4547 = vmatpush1.msra.mxu0 0.0
        %4548 = vmatprep.subr.mxu0 0.0
        %4549 = vmatpush1.msra.mxu0 0.0
        %4550 = vmatprep.subr.mxu0 0.0
        %4551 = vmatpush1.msra.mxu0 0.0
        %4552 = vmatprep.subr.mxu0 0.0
        %4553 = vmatpush1.msra.mxu0 0.0
        %4554 = vmatprep.subr.mxu0 0.0
        %4555 = vmatpush1.msra.mxu0 0.0
        %4556 = vmatprep.subr.mxu0 0.0
        %4557 = vmatpush1.msra.mxu0 0.0
        %4558 = vmatprep.mubr.f32.mxu0 0.0
        %4559 = vmatmul.mubr.f32.gmra.mrb[0].mxu0 %v4489
        %v4560 = vpop.f32.mrb[0].mxu0
        %v4561 = vadd.f32 %v4486, %v4560
        %v4562 = vpop.f32.mrb[0].mxu0
        %4563 = vmatprep.mubr.f32.mxu0 0.0
        %4564 = vmatmul.mubr.f32.gmra.mrb[0].mxu0 %v4492
        %v4565 = vpop.f32.mrb[0].mxu0
        %v4566 = vadd.f32 %v4487, %v4565
        %v4567 = vpop.f32.mrb[0].mxu0
        %4568 = vdwg.mxu0
        %v4569 = vlaneseq
        %v4570 = vshrl.u32 %v4569, 7
        %v4571 = vadd.s32 %v4570, 8
        %vm4572 = vcmp.lt.s32.totalorder %v4570, 6
        %vm4573 = vcmp.lt.s32.totalorder %v4571, 6
        %v4574 = vmul.f32 %v4561, 1.442695
        %v4575 = vpow.pop %v4574
        %v4576 = vmul.f32 %v4566, 1.442695
        %v4577 = vpow.pop %v4576
        %v4578 = vsel %vm4572, %v4561, %v4575
        %v4579 = vsel %vm4573, %v4566, %v4577
        %4580 = vst.msk [vmem:[%s577] sm:$0xff] %vm3897, %v4578
        %4581 = vst.msk [vmem:[%s577 + $0x8] sm:$0xf] %vm718, %v4579
        %p4582 = scmp.lt.s32.totalorder %s32, 1
        %s4583 = scalar_select %p4582, %s32, 1
        %s4584 = smul.addr %s4583, 2
        %s4585 = smul.addr %s4584, 8
        %s4586 = scalar_lea.vmem %s14, %s4585
        %p4587 = scmp.lt.s32.totalorder %s32, 1
        %s4588 = scalar_select %p4587, %s32, 1
        %s4589 = smul.addr %s4588, 2
        %s4590 = smul.addr %s4589, 8
        %s4591 = scalar_lea.vmem %s15, %s4590
        // Predicated region
        $region97: #{tpu_custom_call.1} parent=75 // pred_check
          %p4592 = pneg %p349
        $region98: #{tpu_custom_call.1} parent=75 // pred_check_branch
          %4594 = sbr.rel (%p4592) target = $region100
        $region99: #{tpu_custom_call.1} parent=75 // pred_region
          _
        $region100: #{tpu_custom_call.1} parent=75 // pred_fallthru
          _
        // Predicated region
        $region101: #{tpu_custom_call.1} parent=75 // pred_check
          %p4595 = pneg %p375
        $region102: #{tpu_custom_call.1} parent=75 // pred_check_branch
          %4597 = sbr.rel (%p4595) target = $region104
        $region103: #{tpu_custom_call.1} parent=75 // pred_region
          _
        $region104: #{tpu_custom_call.1} parent=75 // pred_fallthru
          _
      $region76: #{tpu_custom_call.1} parent=5 // pred_fallthru
        _
      %p4598 = scmp.le.s32.totalorder 2, %s27
      // Predicated region
      $region105: #{tpu_custom_call.1} parent=5 // pred_check
        %p4599 = pneg %p4598
      $region106: #{tpu_custom_call.1} parent=5 // pred_check_branch
        %4601 = sbr.rel (%p4599) target = $region108
      $region107: #{tpu_custom_call.1} parent=5 // pred_region
        %s4602 = ssub.s32 %s27, 2
        // Predicated region
        $region109: #{tpu_custom_call.1} parent=107 // pred_check
          %p4603 = pneg %p355
        $region110: #{tpu_custom_call.1} parent=107 // pred_check_branch
          %4605 = sbr.rel (%p4603) target = $region112
        $region111: #{tpu_custom_call.1} parent=107 // pred_region
          %p4606 = scmp.lt.s32.totalorder %s33, 1
          %s4607 = scalar_select %p4606, %s33, 1
          %s4608 = smul.addr %s4607, 2
          %s4609 = smul.addr %s4608, 8
          %s4610 = scalar_lea.vmem %s14, %s4609
        $region112: #{tpu_custom_call.1} parent=107 // pred_fallthru
          _
        // Predicated region
        $region113: #{tpu_custom_call.1} parent=107 // pred_check
          %p4611 = pneg %p381
        $region114: #{tpu_custom_call.1} parent=107 // pred_check_branch
          %4613 = sbr.rel (%p4611) target = $region116
        $region115: #{tpu_custom_call.1} parent=107 // pred_region
          %p4614 = scmp.lt.s32.totalorder %s33, 1
          %s4615 = scalar_select %p4614, %s33, 1
          %s4616 = smul.addr %s4615, 2
          %s4617 = smul.addr %s4616, 8
          %s4618 = scalar_lea.vmem %s15, %s4617
        $region116: #{tpu_custom_call.1} parent=107 // pred_fallthru
          _
      $region108: #{tpu_custom_call.1} parent=5 // pred_fallthru
        _
    $region6: #{tpu_custom_call.1} parent=1 // loop_footer
      %s31 = sadd.s32 1, %s27
    $region7: #{tpu_custom_call.1} parent=1 // loop_footer_branch
      %26 = sbr.rel target = $region3
    $region8: #{tpu_custom_call.1} parent=1 // loop_exit
      _
    %4619 = vsyncpa [#allocation5], 1
    %s4620 = scalar_lea.sflag [#allocation5], 1
    %4621 = vsyncpa %s4620, 1
    %4622 = vsyncpa [#allocation7], 1
    %4623 = vsyncpa [#allocation10], 1

</llo_original>
